<compile_context>
chip_gen: v5e
topology: v5e:2x2
jax: 0.10.0
libtpu: 0.0.40
codegen_flags: <defaults>
</compile_context>

<pallas_src>
import functools

import jax
import jax.numpy as jnp
from jax import lax
from jax.experimental import pallas as pl
from jax.experimental.pallas import tpu as pltpu


def _round_up(x, m):
    return (x + m - 1) // m * m


def _auto_vmem_limit():
    # v5e/v6e: 128 MiB physical -> ~96 MiB scoped; v7x: 64 MiB -> ~48 MiB.
    try:
        cap = pltpu.get_tpu_info().vmem_capacity_bytes
    except Exception:
        cap = 64 * 1024 * 1024   # assume the smallest (v7x) if the query fails
    return int(min(cap * 3 // 4, 100 * 1024 * 1024))


# ----------------------------------------------------------------------------
# Fused Pallas kernel: one (n, depth-block) step = TD x [conv1 (k0,k1,1) + conv2 (1,1,k2)]
# ----------------------------------------------------------------------------
def _conv2p1d_kernel(x_ref, w1p_ref, w2_ref, b2_ref, o_ref, patch_ref, y1_ref, *,
                     k0, k1, k2, s0, W, HWv, Cin, Cs, TD, compute_dtype):
    """Fused (2+1)D conv for one (n, depth-block) grid step.

    x_ref     : (1, Cin, 1, Dblk, H*W)  depth window of x, spatial flat in lanes
    w1p_ref   : (F, k0*k1*Cs)           conv1 weights, taps folded into K (Cs = pad8(Cin))
    w2_ref    : (k2, F, F)              conv2 weights per W-tap, (f_out, f_in)
    b2_ref    : (F, 1)                  fused bias  b2 + (sum_kw W2[kw]) @ b1   (f32)
    o_ref     : (1, TD, F, HWv)         conv2 output strip per output depth
    patch_ref : (k0*k1*Cs, HWv)         VMEM scratch: conv1 im2col patch (compute dtype)
    y1_ref    : (F, HWv + k2 - 1)       VMEM scratch: conv1 strip + zero right pad
    """
    F = o_ref.shape[2]

    # Padded patch rows (Cs - Cin per tap) and the conv1 strip's right padding
    # feed the MXU, so they must hold deterministic zeros (scratch is reused
    # across grid steps; re-zero every step -- a few vreg stores, negligible).
    patch_ref[...] = jnp.zeros_like(patch_ref)
    if k2 > 1:
        y1_ref[:, pl.ds(HWv, k2 - 1)] = jnp.zeros((F, k2 - 1), y1_ref.dtype)

    w1p = w1p_ref[...]

    def per_depth(t):
        # ---- conv1: assemble the (K, HWv) patch (taps stacked along sublanes,
        # sublane-aligned stores) and issue ONE MXU matmul with K = k0*k1*Cs.
        for i in range(k0):
            for j in range(k1):
                xs = x_ref[0, :, 0, t * s0 + i, pl.ds(j * W, HWv)]      # (Cin, HWv)
                patch_ref[pl.ds((i * k1 + j) * Cs, Cin), :] = xs.astype(compute_dtype)
        y1 = jnp.dot(w1p, patch_ref[...],
                     preferred_element_type=jnp.float32)                # (F, HWv)
        y1_ref[:, pl.ds(0, HWv)] = y1.astype(y1_ref.dtype)

        # ---- conv2: k2 matmuls over lane-shifted *ref* views of the conv1
        # strip (output column r needs y1 columns r..r+k2-1; the right pad is 0).
        acc = jnp.zeros((F, HWv), jnp.float32)
        for kw in range(k2):
            acc = acc + jnp.dot(w2_ref[kw], y1_ref[:, pl.ds(kw, HWv)],
                                preferred_element_type=jnp.float32)
        acc = acc + b2_ref[...]                                         # fused bias (f32)
        o_ref[0, t] = acc.astype(o_ref.dtype)

    if TD <= 16:
        # Short fixed trip count: unroll for LLO scheduler visibility.
        for t in range(TD):
            per_depth(t)
    else:
        pl.loop(0, TD)(per_depth)


# ----------------------------------------------------------------------------
# Conv2Plus1D forward (NCDHW in / NCDHW out, matching the PyTorch module)
# ----------------------------------------------------------------------------
def conv2plus1d(x_ncdhw, w1, b1, w2, b2, *, stride=(1, 1, 1),
                compute_dtype=jnp.bfloat16,
                vmem_limit_bytes=None,
                max_depth_block=None):
    """
    x_ncdhw : (N, Cin, D, H, W) float32
    w1      : (F, Cin, k0, k1, 1), b1: (F,)   -- PyTorch Conv3d OIDHW layout
    w2      : (F, F,   1,  1, k2), b2: (F,)
    returns : (N, F, Do, Ho, Wo) == conv2(conv1(x)), valid padding, with biases.
    """
    s0, s1, s2 = stride
    N, Cin, D, H, W = x_ncdhw.shape
    F = w1.shape[0]
    k0, k1 = w1.shape[2], w1.shape[3]
    k2 = w2.shape[4]

    Do = (D - k0) // s0 + 1
    Ho = (H - k1) // s1 + 1
    Wo = (W - k2) // s2 + 1
    Hv = H - k1 + 1            # conv1 computed at every H position; s1/s2 applied at the end
    HW = H * W
    HWv = Hv * W

    Cs = _round_up(Cin, 8)     # sublane-aligned per-tap stride in the conv1 patch
    Kp = k0 * k1 * Cs

    if vmem_limit_bytes is None:
        vmem_limit_bytes = _auto_vmem_limit()

    # ---- choose TD (output depths per grid step) to fit the VMEM budget
    # (lane/sublane padding included; inputs & outputs double-buffered).
    x_size = jnp.dtype(x_ncdhw.dtype).itemsize
    cdt_size = jnp.dtype(compute_dtype).itemsize

    def step_bytes(td, dblk):
        inp = Cin * _round_up(dblk, 8) * _round_up(HW, 128) * x_size
        outp = td * _round_up(F, 8) * _round_up(HWv, 128) * 4
        scr = (_round_up(Kp, 8) * _round_up(HWv, 128)
               + _round_up(F, 8) * _round_up(HWv + k2 - 1, 128)) * cdt_size
        wgt = (_round_up(F, 8) * _round_up(Kp, 128)
               + k2 * _round_up(F, 8) * _round_up(F, 128)
               + _round_up(F, 8) * 128) * max(cdt_size, 4)
        return 2 * (inp + outp) + scr + 2 * wgt

    budget = int(vmem_limit_bytes * 0.6)
    td_cap = max_depth_block if max_depth_block else Do
    TD = 1
    for cand in range(min(Do, td_cap), 0, -1):
        if Do % cand:
            continue
        dblk = D if cand == Do else (cand - 1) * s0 + k0
        if step_bytes(cand, dblk) <= budget:
            TD = cand
            break
    NB = Do // TD

    # ---- input: native NCDHW memory order, spatial flattened into lanes.
    xr = x_ncdhw.reshape(N, Cin, D, HW)          # free reshape, no relayout pass
    if NB == 1:
        Dblk = D
        xw = xr.reshape(N, Cin, 1, D, HW)
    else:
        # TODO(synk): the NB>1 path materializes overlapping depth windows once
        # in HBM ((k0-s0)/(TD*s0) duplication); an Element-indexed D window
        # would avoid even that.
        Dblk = (TD - 1) * s0 + k0
        starts = jnp.arange(NB, dtype=jnp.int32) * (TD * s0)
        idx = (starts[:, None] + jnp.arange(Dblk, dtype=jnp.int32)[None, :]).reshape(-1)
        xw = jnp.take(xr, idx, axis=2).reshape(N, Cin, NB, Dblk, HW)

    # ---- weights re-laid-out once.
    # conv1 taps folded into the contraction dim (sublane-aligned per-tap rows).
    w1c = jnp.transpose(w1[:, :, :, :, 0], (0, 2, 3, 1)).astype(jnp.float32)   # (F,k0,k1,Cin)
    w1p = jnp.zeros((F, k0, k1, Cs), jnp.float32).at[..., :Cin].set(w1c)
    w1p = w1p.reshape(F, Kp).astype(compute_dtype)
    # conv2 per-tap matrices (f_out, f_in).
    w2m = jnp.transpose(w2[:, :, 0, 0, :], (2, 0, 1)).astype(jnp.float32)      # (k2,F,F)
    # conv1 bias folded into conv2 bias (exact: conv2 is linear).
    b2e = (b2.astype(jnp.float32)
           + jnp.einsum("kof,f->o", w2m, b1.astype(jnp.float32))).reshape(F, 1)
    w2m = w2m.astype(compute_dtype)

    kernel = functools.partial(
        _conv2p1d_kernel, k0=k0, k1=k1, k2=k2, s0=s0, W=W, HWv=HWv,
        Cin=Cin, Cs=Cs, TD=TD, compute_dtype=compute_dtype)

    out = pl.pallas_call(
        kernel,
        out_shape=jax.ShapeDtypeStruct((N, Do, F, HWv), jnp.float32),
        grid=(N, NB),
        in_specs=[
            pl.BlockSpec((1, Cin, 1, Dblk, HW), lambda n, b: (n, 0, b, 0, 0)),
            pl.BlockSpec((F, Kp), lambda n, b: (0, 0)),
            pl.BlockSpec((k2, F, F), lambda n, b: (0, 0, 0)),
            pl.BlockSpec((F, 1), lambda n, b: (0, 0)),
        ],
        out_specs=pl.BlockSpec((1, TD, F, HWv), lambda n, b: (n, b, 0, 0)),
        scratch_shapes=[
            pltpu.VMEM((Kp, HWv), compute_dtype),            # conv1 im2col patch
            pltpu.VMEM((F, HWv + k2 - 1), compute_dtype),    # conv1 strip (+ zero pad)
        ],
        compiler_params=pltpu.CompilerParams(
            dimension_semantics=("parallel", "parallel"),
            vmem_limit_bytes=vmem_limit_bytes),
    )(xw, w1p, w2m, b2e)

    # Select the strided (s1, s2) output positions and return NCDHW.
    y = out.reshape(N, Do, F, Hv, W)
    y = y[:, :, :, :(Ho - 1) * s1 + 1:s1, :(Wo - 1) * s2 + 1:s2]
    return jnp.transpose(y, (0, 2, 1, 3, 4))


# ----------------------------------------------------------------------------
# Pure-JAX reference (lax conv) for verification
# ----------------------------------------------------------------------------
def reference(x, w1, b1, w2, b2, *, stride=(1, 1, 1)):
    dn = ("NCDHW", "OIDHW", "NCDHW")
    y = lax.conv_general_dilated(
        x, w1, window_strides=(stride[0], stride[1], 1), padding="VALID",
        dimension_numbers=dn,
        precision=lax.Precision.HIGHEST) + b1.reshape(1, -1, 1, 1, 1)
    y = lax.conv_general_dilated(
        y, w2, window_strides=(1, 1, stride[2]), padding="VALID",
        dimension_numbers=dn,
        precision=lax.Precision.HIGHEST) + b2.reshape(1, -1, 1, 1, 1)
    return y


if __name__ == "__main__":
    key = jax.random.PRNGKey(0)
    k_x, k_w1, k_b1, k_w2, k_b2 = jax.random.split(key, 5)

    # Small shapes consistent with the module's forward (NCDHW video clip).
    N, Cin, D, H, W = 2, 4, 8, 16, 16
    F = 8
    ks = (3, 3, 3)

    x = jax.random.normal(k_x, (N, Cin, D, H, W), jnp.float32)
    w1 = 0.1 * jax.random.normal(k_w1, (F, Cin, ks[0], ks[1], 1), jnp.float32)
    b1 = 0.1 * jax.random.normal(k_b1, (F,), jnp.float32)
    w2 = 0.1 * jax.random.normal(k_w2, (F, F, 1, 1, ks[2]), jnp.float32)
    b2 = 0.1 * jax.random.normal(k_b2, (F,), jnp.float32)

    # Exact (f32 MXU inputs) path: unit stride (the module default) and a
    # strided config (dense compute + wrapper slice for the strided case).
    for stride in [(1, 1, 1), (2, 2, 2)]:
        run = jax.jit(functools.partial(conv2plus1d, stride=stride,
                                        compute_dtype=jnp.float32))
        out = jax.block_until_ready(run(x, w1, b1, w2, b2))
        ref = reference(x, w1, b1, w2, b2, stride=stride)
        assert out.shape == ref.shape, (stride, out.shape, ref.shape)
        err = float(jnp.max(jnp.abs(out - ref)))
        assert jnp.allclose(out, ref, atol=1e-3, rtol=1e-3), (stride, err)

    # Default bf16-MXU-input path (f32 accumulate).  The conv1 intermediate is
    # intentionally rounded to bf16 before conv2 -> looser tolerance.
    run_bf16 = jax.jit(conv2plus1d)
    out_bf16 = jax.block_until_ready(run_bf16(x, w1, b1, w2, b2))
    ref = reference(x, w1, b1, w2, b2)
    assert out_bf16.shape == ref.shape, (out_bf16.shape, ref.shape)
    assert jnp.allclose(out_bf16, ref, atol=5e-2, rtol=5e-2), float(
        jnp.max(jnp.abs(out_bf16 - ref)))

    print("KERNEL_OK")
</pallas_src>

<mosaic_0001>
module attributes {stable_mosaic.version = 11 : i64} {
  func.func @_conv2p1d_kernel(%arg0: i32, %arg1: i32, %arg2: memref<1x4x1x8x256xf32, #tpu.memory_space<vmem>>, %arg3: memref<8x72xf32, #tpu.memory_space<vmem>>, %arg4: memref<3x8x8xf32, #tpu.memory_space<vmem>>, %arg5: memref<8x1xf32, #tpu.memory_space<vmem>>, %arg6: memref<1x6x8x224xf32, #tpu.memory_space<vmem>>, %arg7: memref<72x224xf32, #tpu.memory_space<vmem>>, %arg8: memref<8x226xf32, #tpu.memory_space<vmem>>) attributes {dimension_semantics = [#tpu.dimension_semantics<parallel>, #tpu.dimension_semantics<parallel>], iteration_bounds = array<i64: 2, 1>, scalar_prefetch = 0 : i64, scratch_operands = 2 : i64, tpu.core_type = #tpu.core_type<tc>, window_params = [{transform_indices = @transform_0, window_bounds = array<i64: 1, 4, 1, 8, 256>}, {pipeline_mode = #tpu.pipeline_mode<synchronous>, transform_indices = @transform_1, window_bounds = array<i64: 8, 72>}, {pipeline_mode = #tpu.pipeline_mode<synchronous>, transform_indices = @transform_2, window_bounds = array<i64: 3, 8, 8>}, {pipeline_mode = #tpu.pipeline_mode<synchronous>, transform_indices = @transform_3, window_bounds = array<i64: 8, 1>}, {transform_indices = @transform_4, window_bounds = array<i64: 1, 6, 8, 224>}]} {
    %cst = arith.constant 0.000000e+00 : f32
    %0 = vector.broadcast %cst : f32 to vector<72x224xf32>
    %c0 = arith.constant 0 : index
    %c0_0 = arith.constant 0 : index
    %1 = vector.load %arg7[%c0, %c0_0] : memref<72x224xf32, #tpu.memory_space<vmem>>, vector<72x224xf32>
    tpu.vector_store %arg7[%c0, %c0_0], %0 {strides = array<i32>} : memref<72x224xf32, #tpu.memory_space<vmem>>, vector<72x224xf32>,
    %cst_1 = arith.constant 0.000000e+00 : f32
    %2 = vector.broadcast %cst_1 : f32 to vector<8x2xf32>
    %c0_2 = arith.constant 0 : index
    %c224 = arith.constant 224 : index
    %3 = vector.load %arg8[%c0_2, %c224] : memref<8x226xf32, #tpu.memory_space<vmem>>, vector<8x2xf32>
    tpu.vector_store %arg8[%c0_2, %c224], %2 {strides = array<i32>} : memref<8x226xf32, #tpu.memory_space<vmem>>, vector<8x2xf32>,
    %c0_3 = arith.constant 0 : index
    %c0_4 = arith.constant 0 : index
    %4 = vector.load %arg3[%c0_3, %c0_4] : memref<8x72xf32, #tpu.memory_space<vmem>>, vector<8x72xf32>
    %c0_5 = arith.constant 0 : index
    %c0_6 = arith.constant 0 : index
    %c0_7 = arith.constant 0 : index
    %c0_8 = arith.constant 0 : index
    %c0_9 = arith.constant 0 : index
    %5 = vector.load %arg2[%c0_5, %c0_6, %c0_7, %c0_8, %c0_9] : memref<1x4x1x8x256xf32, #tpu.memory_space<vmem>>, vector<1x4x1x1x224xf32>
    %6 = vector.shape_cast %5 : vector<1x4x1x1x224xf32> to vector<4x224xf32>
    %c0_10 = arith.constant 0 : index
    %c0_11 = arith.constant 0 : index
    %7 = vector.load %arg7[%c0_10, %c0_11] : memref<72x224xf32, #tpu.memory_space<vmem>>, vector<4x224xf32>
    tpu.vector_store %arg7[%c0_10, %c0_11], %6 {strides = array<i32>} : memref<72x224xf32, #tpu.memory_space<vmem>>, vector<4x224xf32>,
    %c0_12 = arith.constant 0 : index
    %c0_13 = arith.constant 0 : index
    %c0_14 = arith.constant 0 : index
    %c0_15 = arith.constant 0 : index
    %c16 = arith.constant 16 : index
    %8 = vector.load %arg2[%c0_12, %c0_13, %c0_14, %c0_15, %c16] : memref<1x4x1x8x256xf32, #tpu.memory_space<vmem>>, vector<1x4x1x1x224xf32>
    %9 = vector.shape_cast %8 : vector<1x4x1x1x224xf32> to vector<4x224xf32>
    %c8 = arith.constant 8 : index
    %c0_16 = arith.constant 0 : index
    %10 = vector.load %arg7[%c8, %c0_16] : memref<72x224xf32, #tpu.memory_space<vmem>>, vector<4x224xf32>
    tpu.vector_store %arg7[%c8, %c0_16], %9 {strides = array<i32>} : memref<72x224xf32, #tpu.memory_space<vmem>>, vector<4x224xf32>,
    %c0_17 = arith.constant 0 : index
    %c0_18 = arith.constant 0 : index
    %c0_19 = arith.constant 0 : index
    %c0_20 = arith.constant 0 : index
    %c32 = arith.constant 32 : index
    %11 = vector.load %arg2[%c0_17, %c0_18, %c0_19, %c0_20, %c32] : memref<1x4x1x8x256xf32, #tpu.memory_space<vmem>>, vector<1x4x1x1x224xf32>
    %12 = vector.shape_cast %11 : vector<1x4x1x1x224xf32> to vector<4x224xf32>
    %c16_21 = arith.constant 16 : index
    %c0_22 = arith.constant 0 : index
    %13 = vector.load %arg7[%c16_21, %c0_22] : memref<72x224xf32, #tpu.memory_space<vmem>>, vector<4x224xf32>
    tpu.vector_store %arg7[%c16_21, %c0_22], %12 {strides = array<i32>} : memref<72x224xf32, #tpu.memory_space<vmem>>, vector<4x224xf32>,
    %c0_23 = arith.constant 0 : index
    %c0_24 = arith.constant 0 : index
    %c0_25 = arith.constant 0 : index
    %c1 = arith.constant 1 : index
    %c0_26 = arith.constant 0 : index
    %14 = vector.load %arg2[%c0_23, %c0_24, %c0_25, %c1, %c0_26] : memref<1x4x1x8x256xf32, #tpu.memory_space<vmem>>, vector<1x4x1x1x224xf32>
    %15 = vector.shape_cast %14 : vector<1x4x1x1x224xf32> to vector<4x224xf32>
    %c24 = arith.constant 24 : index
    %c0_27 = arith.constant 0 : index
    %16 = vector.load %arg7[%c24, %c0_27] : memref<72x224xf32, #tpu.memory_space<vmem>>, vector<4x224xf32>
    tpu.vector_store %arg7[%c24, %c0_27], %15 {strides = array<i32>} : memref<72x224xf32, #tpu.memory_space<vmem>>, vector<4x224xf32>,
    %c0_28 = arith.constant 0 : index
    %c0_29 = arith.constant 0 : index
    %c0_30 = arith.constant 0 : index
    %c1_31 = arith.constant 1 : index
    %c16_32 = arith.constant 16 : index
    %17 = vector.load %arg2[%c0_28, %c0_29, %c0_30, %c1_31, %c16_32] : memref<1x4x1x8x256xf32, #tpu.memory_space<vmem>>, vector<1x4x1x1x224xf32>
    %18 = vector.shape_cast %17 : vector<1x4x1x1x224xf32> to vector<4x224xf32>
    %c32_33 = arith.constant 32 : index
    %c0_34 = arith.constant 0 : index
    %19 = vector.load %arg7[%c32_33, %c0_34] : memref<72x224xf32, #tpu.memory_space<vmem>>, vector<4x224xf32>
    tpu.vector_store %arg7[%c32_33, %c0_34], %18 {strides = array<i32>} : memref<72x224xf32, #tpu.memory_space<vmem>>, vector<4x224xf32>,
    %c0_35 = arith.constant 0 : index
    %c0_36 = arith.constant 0 : index
    %c0_37 = arith.constant 0 : index
    %c1_38 = arith.constant 1 : index
    %c32_39 = arith.constant 32 : index
    %20 = vector.load %arg2[%c0_35, %c0_36, %c0_37, %c1_38, %c32_39] : memref<1x4x1x8x256xf32, #tpu.memory_space<vmem>>, vector<1x4x1x1x224xf32>
    %21 = vector.shape_cast %20 : vector<1x4x1x1x224xf32> to vector<4x224xf32>
    %c40 = arith.constant 40 : index
    %c0_40 = arith.constant 0 : index
    %22 = vector.load %arg7[%c40, %c0_40] : memref<72x224xf32, #tpu.memory_space<vmem>>, vector<4x224xf32>
    tpu.vector_store %arg7[%c40, %c0_40], %21 {strides = array<i32>} : memref<72x224xf32, #tpu.memory_space<vmem>>, vector<4x224xf32>,
    %c0_41 = arith.constant 0 : index
    %c0_42 = arith.constant 0 : index
    %c0_43 = arith.constant 0 : index
    %c2 = arith.constant 2 : index
    %c0_44 = arith.constant 0 : index
    %23 = vector.load %arg2[%c0_41, %c0_42, %c0_43, %c2, %c0_44] : memref<1x4x1x8x256xf32, #tpu.memory_space<vmem>>, vector<1x4x1x1x224xf32>
    %24 = vector.shape_cast %23 : vector<1x4x1x1x224xf32> to vector<4x224xf32>
    %c48 = arith.constant 48 : index
    %c0_45 = arith.constant 0 : index
    %25 = vector.load %arg7[%c48, %c0_45] : memref<72x224xf32, #tpu.memory_space<vmem>>, vector<4x224xf32>
    tpu.vector_store %arg7[%c48, %c0_45], %24 {strides = array<i32>} : memref<72x224xf32, #tpu.memory_space<vmem>>, vector<4x224xf32>,
    %c0_46 = arith.constant 0 : index
    %c0_47 = arith.constant 0 : index
    %c0_48 = arith.constant 0 : index
    %c2_49 = arith.constant 2 : index
    %c16_50 = arith.constant 16 : index
    %26 = vector.load %arg2[%c0_46, %c0_47, %c0_48, %c2_49, %c16_50] : memref<1x4x1x8x256xf32, #tpu.memory_space<vmem>>, vector<1x4x1x1x224xf32>
    %27 = vector.shape_cast %26 : vector<1x4x1x1x224xf32> to vector<4x224xf32>
    %c56 = arith.constant 56 : index
    %c0_51 = arith.constant 0 : index
    %28 = vector.load %arg7[%c56, %c0_51] : memref<72x224xf32, #tpu.memory_space<vmem>>, vector<4x224xf32>
    tpu.vector_store %arg7[%c56, %c0_51], %27 {strides = array<i32>} : memref<72x224xf32, #tpu.memory_space<vmem>>, vector<4x224xf32>,
    %c0_52 = arith.constant 0 : index
    %c0_53 = arith.constant 0 : index
    %c0_54 = arith.constant 0 : index
    %c2_55 = arith.constant 2 : index
    %c32_56 = arith.constant 32 : index
    %29 = vector.load %arg2[%c0_52, %c0_53, %c0_54, %c2_55, %c32_56] : memref<1x4x1x8x256xf32, #tpu.memory_space<vmem>>, vector<1x4x1x1x224xf32>
    %30 = vector.shape_cast %29 : vector<1x4x1x1x224xf32> to vector<4x224xf32>
    %c64 = arith.constant 64 : index
    %c0_57 = arith.constant 0 : index
    %31 = vector.load %arg7[%c64, %c0_57] : memref<72x224xf32, #tpu.memory_space<vmem>>, vector<4x224xf32>
    tpu.vector_store %arg7[%c64, %c0_57], %30 {strides = array<i32>} : memref<72x224xf32, #tpu.memory_space<vmem>>, vector<4x224xf32>,
    %c0_58 = arith.constant 0 : index
    %c0_59 = arith.constant 0 : index
    %32 = vector.load %arg7[%c0_58, %c0_59] : memref<72x224xf32, #tpu.memory_space<vmem>>, vector<72x224xf32>
    %cst_60 = arith.constant dense<0.000000e+00> : vector<8x224xf32>
    %33 = tpu.matmul %4, %32, %cst_60 {dimension_numbers = #tpu.dot_dimension_numbers<[1], [0], [0], [1], [0, 0, 1, 1], [], []>} : vector<8x72xf32>, vector<72x224xf32>, vector<8x224xf32> -> vector<8x224xf32>
    %c0_61 = arith.constant 0 : index
    %c0_62 = arith.constant 0 : index
    %34 = vector.load %arg8[%c0_61, %c0_62] : memref<8x226xf32, #tpu.memory_space<vmem>>, vector<8x224xf32>
    tpu.vector_store %arg8[%c0_61, %c0_62], %33 {strides = array<i32>} : memref<8x226xf32, #tpu.memory_space<vmem>>, vector<8x224xf32>,
    %cst_63 = arith.constant 0.000000e+00 : f32
    %35 = vector.broadcast %cst_63 : f32 to vector<8x224xf32>
    %c0_64 = arith.constant 0 : index
    %c0_65 = arith.constant 0 : index
    %c0_66 = arith.constant 0 : index
    %36 = vector.load %arg4[%c0_64, %c0_65, %c0_66] : memref<3x8x8xf32, #tpu.memory_space<vmem>>, vector<1x8x8xf32>
    %37 = vector.shape_cast %36 : vector<1x8x8xf32> to vector<8x8xf32>
    %c0_67 = arith.constant 0 : index
    %c0_68 = arith.constant 0 : index
    %38 = vector.load %arg8[%c0_67, %c0_68] : memref<8x226xf32, #tpu.memory_space<vmem>>, vector<8x224xf32>
    %cst_69 = arith.constant dense<0.000000e+00> : vector<8x224xf32>
    %39 = tpu.matmul %37, %38, %cst_69 {dimension_numbers = #tpu.dot_dimension_numbers<[1], [0], [0], [1], [0, 0, 1, 1], [], []>} : vector<8x8xf32>, vector<8x224xf32>, vector<8x224xf32> -> vector<8x224xf32>
    %40 = arith.addf %35, %39 : vector<8x224xf32>
    %c1_70 = arith.constant 1 : index
    %c0_71 = arith.constant 0 : index
    %c0_72 = arith.constant 0 : index
    %41 = vector.load %arg4[%c1_70, %c0_71, %c0_72] : memref<3x8x8xf32, #tpu.memory_space<vmem>>, vector<1x8x8xf32>
    %42 = vector.shape_cast %41 : vector<1x8x8xf32> to vector<8x8xf32>
    %c0_73 = arith.constant 0 : index
    %c1_74 = arith.constant 1 : index
    %43 = vector.load %arg8[%c0_73, %c1_74] : memref<8x226xf32, #tpu.memory_space<vmem>>, vector<8x224xf32>
    %cst_75 = arith.constant dense<0.000000e+00> : vector<8x224xf32>
    %44 = tpu.matmul %42, %43, %cst_75 {dimension_numbers = #tpu.dot_dimension_numbers<[1], [0], [0], [1], [0, 0, 1, 1], [], []>} : vector<8x8xf32>, vector<8x224xf32>, vector<8x224xf32> -> vector<8x224xf32>
    %45 = arith.addf %40, %44 : vector<8x224xf32>
    %c2_76 = arith.constant 2 : index
    %c0_77 = arith.constant 0 : index
    %c0_78 = arith.constant 0 : index
    %46 = vector.load %arg4[%c2_76, %c0_77, %c0_78] : memref<3x8x8xf32, #tpu.memory_space<vmem>>, vector<1x8x8xf32>
    %47 = vector.shape_cast %46 : vector<1x8x8xf32> to vector<8x8xf32>
    %c0_79 = arith.constant 0 : index
    %c2_80 = arith.constant 2 : index
    %48 = vector.load %arg8[%c0_79, %c2_80] : memref<8x226xf32, #tpu.memory_space<vmem>>, vector<8x224xf32>
    %cst_81 = arith.constant dense<0.000000e+00> : vector<8x224xf32>
    %49 = tpu.matmul %47, %48, %cst_81 {dimension_numbers = #tpu.dot_dimension_numbers<[1], [0], [0], [1], [0, 0, 1, 1], [], []>} : vector<8x8xf32>, vector<8x224xf32>, vector<8x224xf32> -> vector<8x224xf32>
    %50 = arith.addf %45, %49 : vector<8x224xf32>
    %c0_82 = arith.constant 0 : index
    %c0_83 = arith.constant 0 : index
    %51 = vector.load %arg5[%c0_82, %c0_83] : memref<8x1xf32, #tpu.memory_space<vmem>>, vector<8x1xf32>
    %52 = vector.broadcast %51 : vector<8x1xf32> to vector<8x224xf32>
    %53 = arith.addf %50, %52 : vector<8x224xf32>
    %c0_84 = arith.constant 0 : index
    %c0_85 = arith.constant 0 : index
    %c0_86 = arith.constant 0 : index
    %c0_87 = arith.constant 0 : index
    %54 = vector.load %arg6[%c0_84, %c0_85, %c0_86, %c0_87] : memref<1x6x8x224xf32, #tpu.memory_space<vmem>>, vector<1x1x8x224xf32>
    %55 = vector.shape_cast %54 : vector<1x1x8x224xf32> to vector<8x224xf32>
    %56 = vector.shape_cast %53 : vector<8x224xf32> to vector<1x1x8x224xf32>
    tpu.vector_store %arg6[%c0_84, %c0_85, %c0_86, %c0_87], %56 {strides = array<i32>} : memref<1x6x8x224xf32, #tpu.memory_space<vmem>>, vector<1x1x8x224xf32>,
    %c0_88 = arith.constant 0 : index
    %c0_89 = arith.constant 0 : index
    %c0_90 = arith.constant 0 : index
    %c1_91 = arith.constant 1 : index
    %c0_92 = arith.constant 0 : index
    %57 = vector.load %arg2[%c0_88, %c0_89, %c0_90, %c1_91, %c0_92] : memref<1x4x1x8x256xf32, #tpu.memory_space<vmem>>, vector<1x4x1x1x224xf32>
    %58 = vector.shape_cast %57 : vector<1x4x1x1x224xf32> to vector<4x224xf32>
    %c0_93 = arith.constant 0 : index
    %c0_94 = arith.constant 0 : index
    %59 = vector.load %arg7[%c0_93, %c0_94] : memref<72x224xf32, #tpu.memory_space<vmem>>, vector<4x224xf32>
    tpu.vector_store %arg7[%c0_93, %c0_94], %58 {strides = array<i32>} : memref<72x224xf32, #tpu.memory_space<vmem>>, vector<4x224xf32>,
    %c0_95 = arith.constant 0 : index
    %c0_96 = arith.constant 0 : index
    %c0_97 = arith.constant 0 : index
    %c1_98 = arith.constant 1 : index
    %c16_99 = arith.constant 16 : index
    %60 = vector.load %arg2[%c0_95, %c0_96, %c0_97, %c1_98, %c16_99] : memref<1x4x1x8x256xf32, #tpu.memory_space<vmem>>, vector<1x4x1x1x224xf32>
    %61 = vector.shape_cast %60 : vector<1x4x1x1x224xf32> to vector<4x224xf32>
    %c8_100 = arith.constant 8 : index
    %c0_101 = arith.constant 0 : index
    %62 = vector.load %arg7[%c8_100, %c0_101] : memref<72x224xf32, #tpu.memory_space<vmem>>, vector<4x224xf32>
    tpu.vector_store %arg7[%c8_100, %c0_101], %61 {strides = array<i32>} : memref<72x224xf32, #tpu.memory_space<vmem>>, vector<4x224xf32>,
    %c0_102 = arith.constant 0 : index
    %c0_103 = arith.constant 0 : index
    %c0_104 = arith.constant 0 : index
    %c1_105 = arith.constant 1 : index
    %c32_106 = arith.constant 32 : index
    %63 = vector.load %arg2[%c0_102, %c0_103, %c0_104, %c1_105, %c32_106] : memref<1x4x1x8x256xf32, #tpu.memory_space<vmem>>, vector<1x4x1x1x224xf32>
    %64 = vector.shape_cast %63 : vector<1x4x1x1x224xf32> to vector<4x224xf32>
    %c16_107 = arith.constant 16 : index
    %c0_108 = arith.constant 0 : index
    %65 = vector.load %arg7[%c16_107, %c0_108] : memref<72x224xf32, #tpu.memory_space<vmem>>, vector<4x224xf32>
    tpu.vector_store %arg7[%c16_107, %c0_108], %64 {strides = array<i32>} : memref<72x224xf32, #tpu.memory_space<vmem>>, vector<4x224xf32>,
    %c0_109 = arith.constant 0 : index
    %c0_110 = arith.constant 0 : index
    %c0_111 = arith.constant 0 : index
    %c2_112 = arith.constant 2 : index
    %c0_113 = arith.constant 0 : index
    %66 = vector.load %arg2[%c0_109, %c0_110, %c0_111, %c2_112, %c0_113] : memref<1x4x1x8x256xf32, #tpu.memory_space<vmem>>, vector<1x4x1x1x224xf32>
    %67 = vector.shape_cast %66 : vector<1x4x1x1x224xf32> to vector<4x224xf32>
    %c24_114 = arith.constant 24 : index
    %c0_115 = arith.constant 0 : index
    %68 = vector.load %arg7[%c24_114, %c0_115] : memref<72x224xf32, #tpu.memory_space<vmem>>, vector<4x224xf32>
    tpu.vector_store %arg7[%c24_114, %c0_115], %67 {strides = array<i32>} : memref<72x224xf32, #tpu.memory_space<vmem>>, vector<4x224xf32>,
    %c0_116 = arith.constant 0 : index
    %c0_117 = arith.constant 0 : index
    %c0_118 = arith.constant 0 : index
    %c2_119 = arith.constant 2 : index
    %c16_120 = arith.constant 16 : index
    %69 = vector.load %arg2[%c0_116, %c0_117, %c0_118, %c2_119, %c16_120] : memref<1x4x1x8x256xf32, #tpu.memory_space<vmem>>, vector<1x4x1x1x224xf32>
    %70 = vector.shape_cast %69 : vector<1x4x1x1x224xf32> to vector<4x224xf32>
    %c32_121 = arith.constant 32 : index
    %c0_122 = arith.constant 0 : index
    %71 = vector.load %arg7[%c32_121, %c0_122] : memref<72x224xf32, #tpu.memory_space<vmem>>, vector<4x224xf32>
    tpu.vector_store %arg7[%c32_121, %c0_122], %70 {strides = array<i32>} : memref<72x224xf32, #tpu.memory_space<vmem>>, vector<4x224xf32>,
    %c0_123 = arith.constant 0 : index
    %c0_124 = arith.constant 0 : index
    %c0_125 = arith.constant 0 : index
    %c2_126 = arith.constant 2 : index
    %c32_127 = arith.constant 32 : index
    %72 = vector.load %arg2[%c0_123, %c0_124, %c0_125, %c2_126, %c32_127] : memref<1x4x1x8x256xf32, #tpu.memory_space<vmem>>, vector<1x4x1x1x224xf32>
    %73 = vector.shape_cast %72 : vector<1x4x1x1x224xf32> to vector<4x224xf32>
    %c40_128 = arith.constant 40 : index
    %c0_129 = arith.constant 0 : index
    %74 = vector.load %arg7[%c40_128, %c0_129] : memref<72x224xf32, #tpu.memory_space<vmem>>, vector<4x224xf32>
    tpu.vector_store %arg7[%c40_128, %c0_129], %73 {strides = array<i32>} : memref<72x224xf32, #tpu.memory_space<vmem>>, vector<4x224xf32>,
    %c0_130 = arith.constant 0 : index
    %c0_131 = arith.constant 0 : index
    %c0_132 = arith.constant 0 : index
    %c3 = arith.constant 3 : index
    %c0_133 = arith.constant 0 : index
    %75 = vector.load %arg2[%c0_130, %c0_131, %c0_132, %c3, %c0_133] : memref<1x4x1x8x256xf32, #tpu.memory_space<vmem>>, vector<1x4x1x1x224xf32>
    %76 = vector.shape_cast %75 : vector<1x4x1x1x224xf32> to vector<4x224xf32>
    %c48_134 = arith.constant 48 : index
    %c0_135 = arith.constant 0 : index
    %77 = vector.load %arg7[%c48_134, %c0_135] : memref<72x224xf32, #tpu.memory_space<vmem>>, vector<4x224xf32>
    tpu.vector_store %arg7[%c48_134, %c0_135], %76 {strides = array<i32>} : memref<72x224xf32, #tpu.memory_space<vmem>>, vector<4x224xf32>,
    %c0_136 = arith.constant 0 : index
    %c0_137 = arith.constant 0 : index
    %c0_138 = arith.constant 0 : index
    %c3_139 = arith.constant 3 : index
    %c16_140 = arith.constant 16 : index
    %78 = vector.load %arg2[%c0_136, %c0_137, %c0_138, %c3_139, %c16_140] : memref<1x4x1x8x256xf32, #tpu.memory_space<vmem>>, vector<1x4x1x1x224xf32>
    %79 = vector.shape_cast %78 : vector<1x4x1x1x224xf32> to vector<4x224xf32>
    %c56_141 = arith.constant 56 : index
    %c0_142 = arith.constant 0 : index
    %80 = vector.load %arg7[%c56_141, %c0_142] : memref<72x224xf32, #tpu.memory_space<vmem>>, vector<4x224xf32>
    tpu.vector_store %arg7[%c56_141, %c0_142], %79 {strides = array<i32>} : memref<72x224xf32, #tpu.memory_space<vmem>>, vector<4x224xf32>,
    %c0_143 = arith.constant 0 : index
    %c0_144 = arith.constant 0 : index
    %c0_145 = arith.constant 0 : index
    %c3_146 = arith.constant 3 : index
    %c32_147 = arith.constant 32 : index
    %81 = vector.load %arg2[%c0_143, %c0_144, %c0_145, %c3_146, %c32_147] : memref<1x4x1x8x256xf32, #tpu.memory_space<vmem>>, vector<1x4x1x1x224xf32>
    %82 = vector.shape_cast %81 : vector<1x4x1x1x224xf32> to vector<4x224xf32>
    %c64_148 = arith.constant 64 : index
    %c0_149 = arith.constant 0 : index
    %83 = vector.load %arg7[%c64_148, %c0_149] : memref<72x224xf32, #tpu.memory_space<vmem>>, vector<4x224xf32>
    tpu.vector_store %arg7[%c64_148, %c0_149], %82 {strides = array<i32>} : memref<72x224xf32, #tpu.memory_space<vmem>>, vector<4x224xf32>,
    %c0_150 = arith.constant 0 : index
    %c0_151 = arith.constant 0 : index
    %84 = vector.load %arg7[%c0_150, %c0_151] : memref<72x224xf32, #tpu.memory_space<vmem>>, vector<72x224xf32>
    %cst_152 = arith.constant dense<0.000000e+00> : vector<8x224xf32>
    %85 = tpu.matmul %4, %84, %cst_152 {dimension_numbers = #tpu.dot_dimension_numbers<[1], [0], [0], [1], [0, 0, 1, 1], [], []>} : vector<8x72xf32>, vector<72x224xf32>, vector<8x224xf32> -> vector<8x224xf32>
    %c0_153 = arith.constant 0 : index
    %c0_154 = arith.constant 0 : index
    %86 = vector.load %arg8[%c0_153, %c0_154] : memref<8x226xf32, #tpu.memory_space<vmem>>, vector<8x224xf32>
    tpu.vector_store %arg8[%c0_153, %c0_154], %85 {strides = array<i32>} : memref<8x226xf32, #tpu.memory_space<vmem>>, vector<8x224xf32>,
    %cst_155 = arith.constant 0.000000e+00 : f32
    %87 = vector.broadcast %cst_155 : f32 to vector<8x224xf32>
    %c0_156 = arith.constant 0 : index
    %c0_157 = arith.constant 0 : index
    %c0_158 = arith.constant 0 : index
    %88 = vector.load %arg4[%c0_156, %c0_157, %c0_158] : memref<3x8x8xf32, #tpu.memory_space<vmem>>, vector<1x8x8xf32>
    %89 = vector.shape_cast %88 : vector<1x8x8xf32> to vector<8x8xf32>
    %c0_159 = arith.constant 0 : index
    %c0_160 = arith.constant 0 : index
    %90 = vector.load %arg8[%c0_159, %c0_160] : memref<8x226xf32, #tpu.memory_space<vmem>>, vector<8x224xf32>
    %cst_161 = arith.constant dense<0.000000e+00> : vector<8x224xf32>
    %91 = tpu.matmul %89, %90, %cst_161 {dimension_numbers = #tpu.dot_dimension_numbers<[1], [0], [0], [1], [0, 0, 1, 1], [], []>} : vector<8x8xf32>, vector<8x224xf32>, vector<8x224xf32> -> vector<8x224xf32>
    %92 = arith.addf %87, %91 : vector<8x224xf32>
    %c1_162 = arith.constant 1 : index
    %c0_163 = arith.constant 0 : index
    %c0_164 = arith.constant 0 : index
    %93 = vector.load %arg4[%c1_162, %c0_163, %c0_164] : memref<3x8x8xf32, #tpu.memory_space<vmem>>, vector<1x8x8xf32>
    %94 = vector.shape_cast %93 : vector<1x8x8xf32> to vector<8x8xf32>
    %c0_165 = arith.constant 0 : index
    %c1_166 = arith.constant 1 : index
    %95 = vector.load %arg8[%c0_165, %c1_166] : memref<8x226xf32, #tpu.memory_space<vmem>>, vector<8x224xf32>
    %cst_167 = arith.constant dense<0.000000e+00> : vector<8x224xf32>
    %96 = tpu.matmul %94, %95, %cst_167 {dimension_numbers = #tpu.dot_dimension_numbers<[1], [0], [0], [1], [0, 0, 1, 1], [], []>} : vector<8x8xf32>, vector<8x224xf32>, vector<8x224xf32> -> vector<8x224xf32>
    %97 = arith.addf %92, %96 : vector<8x224xf32>
    %c2_168 = arith.constant 2 : index
    %c0_169 = arith.constant 0 : index
    %c0_170 = arith.constant 0 : index
    %98 = vector.load %arg4[%c2_168, %c0_169, %c0_170] : memref<3x8x8xf32, #tpu.memory_space<vmem>>, vector<1x8x8xf32>
    %99 = vector.shape_cast %98 : vector<1x8x8xf32> to vector<8x8xf32>
    %c0_171 = arith.constant 0 : index
    %c2_172 = arith.constant 2 : index
    %100 = vector.load %arg8[%c0_171, %c2_172] : memref<8x226xf32, #tpu.memory_space<vmem>>, vector<8x224xf32>
    %cst_173 = arith.constant dense<0.000000e+00> : vector<8x224xf32>
    %101 = tpu.matmul %99, %100, %cst_173 {dimension_numbers = #tpu.dot_dimension_numbers<[1], [0], [0], [1], [0, 0, 1, 1], [], []>} : vector<8x8xf32>, vector<8x224xf32>, vector<8x224xf32> -> vector<8x224xf32>
    %102 = arith.addf %97, %101 : vector<8x224xf32>
    %c0_174 = arith.constant 0 : index
    %c0_175 = arith.constant 0 : index
    %103 = vector.load %arg5[%c0_174, %c0_175] : memref<8x1xf32, #tpu.memory_space<vmem>>, vector<8x1xf32>
    %104 = vector.broadcast %103 : vector<8x1xf32> to vector<8x224xf32>
    %105 = arith.addf %102, %104 : vector<8x224xf32>
    %c0_176 = arith.constant 0 : index
    %c1_177 = arith.constant 1 : index
    %c0_178 = arith.constant 0 : index
    %c0_179 = arith.constant 0 : index
    %106 = vector.load %arg6[%c0_176, %c1_177, %c0_178, %c0_179] : memref<1x6x8x224xf32, #tpu.memory_space<vmem>>, vector<1x1x8x224xf32>
    %107 = vector.shape_cast %106 : vector<1x1x8x224xf32> to vector<8x224xf32>
    %108 = vector.shape_cast %105 : vector<8x224xf32> to vector<1x1x8x224xf32>
    tpu.vector_store %arg6[%c0_176, %c1_177, %c0_178, %c0_179], %108 {strides = array<i32>} : memref<1x6x8x224xf32, #tpu.memory_space<vmem>>, vector<1x1x8x224xf32>,
    %c0_180 = arith.constant 0 : index
    %c0_181 = arith.constant 0 : index
    %c0_182 = arith.constant 0 : index
    %c2_183 = arith.constant 2 : index
    %c0_184 = arith.constant 0 : index
    %109 = vector.load %arg2[%c0_180, %c0_181, %c0_182, %c2_183, %c0_184] : memref<1x4x1x8x256xf32, #tpu.memory_space<vmem>>, vector<1x4x1x1x224xf32>
    %110 = vector.shape_cast %109 : vector<1x4x1x1x224xf32> to vector<4x224xf32>
    %c0_185 = arith.constant 0 : index
    %c0_186 = arith.constant 0 : index
    %111 = vector.load %arg7[%c0_185, %c0_186] : memref<72x224xf32, #tpu.memory_space<vmem>>, vector<4x224xf32>
    tpu.vector_store %arg7[%c0_185, %c0_186], %110 {strides = array<i32>} : memref<72x224xf32, #tpu.memory_space<vmem>>, vector<4x224xf32>,
    %c0_187 = arith.constant 0 : index
    %c0_188 = arith.constant 0 : index
    %c0_189 = arith.constant 0 : index
    %c2_190 = arith.constant 2 : index
    %c16_191 = arith.constant 16 : index
    %112 = vector.load %arg2[%c0_187, %c0_188, %c0_189, %c2_190, %c16_191] : memref<1x4x1x8x256xf32, #tpu.memory_space<vmem>>, vector<1x4x1x1x224xf32>
    %113 = vector.shape_cast %112 : vector<1x4x1x1x224xf32> to vector<4x224xf32>
    %c8_192 = arith.constant 8 : index
    %c0_193 = arith.constant 0 : index
    %114 = vector.load %arg7[%c8_192, %c0_193] : memref<72x224xf32, #tpu.memory_space<vmem>>, vector<4x224xf32>
    tpu.vector_store %arg7[%c8_192, %c0_193], %113 {strides = array<i32>} : memref<72x224xf32, #tpu.memory_space<vmem>>, vector<4x224xf32>,
    %c0_194 = arith.constant 0 : index
    %c0_195 = arith.constant 0 : index
    %c0_196 = arith.constant 0 : index
    %c2_197 = arith.constant 2 : index
    %c32_198 = arith.constant 32 : index
    %115 = vector.load %arg2[%c0_194, %c0_195, %c0_196, %c2_197, %c32_198] : memref<1x4x1x8x256xf32, #tpu.memory_space<vmem>>, vector<1x4x1x1x224xf32>
    %116 = vector.shape_cast %115 : vector<1x4x1x1x224xf32> to vector<4x224xf32>
    %c16_199 = arith.constant 16 : index
    %c0_200 = arith.constant 0 : index
    %117 = vector.load %arg7[%c16_199, %c0_200] : memref<72x224xf32, #tpu.memory_space<vmem>>, vector<4x224xf32>
    tpu.vector_store %arg7[%c16_199, %c0_200], %116 {strides = array<i32>} : memref<72x224xf32, #tpu.memory_space<vmem>>, vector<4x224xf32>,
    %c0_201 = arith.constant 0 : index
    %c0_202 = arith.constant 0 : index
    %c0_203 = arith.constant 0 : index
    %c3_204 = arith.constant 3 : index
    %c0_205 = arith.constant 0 : index
    %118 = vector.load %arg2[%c0_201, %c0_202, %c0_203, %c3_204, %c0_205] : memref<1x4x1x8x256xf32, #tpu.memory_space<vmem>>, vector<1x4x1x1x224xf32>
    %119 = vector.shape_cast %118 : vector<1x4x1x1x224xf32> to vector<4x224xf32>
    %c24_206 = arith.constant 24 : index
    %c0_207 = arith.constant 0 : index
    %120 = vector.load %arg7[%c24_206, %c0_207] : memref<72x224xf32, #tpu.memory_space<vmem>>, vector<4x224xf32>
    tpu.vector_store %arg7[%c24_206, %c0_207], %119 {strides = array<i32>} : memref<72x224xf32, #tpu.memory_space<vmem>>, vector<4x224xf32>,
    %c0_208 = arith.constant 0 : index
    %c0_209 = arith.constant 0 : index
    %c0_210 = arith.constant 0 : index
    %c3_211 = arith.constant 3 : index
    %c16_212 = arith.constant 16 : index
    %121 = vector.load %arg2[%c0_208, %c0_209, %c0_210, %c3_211, %c16_212] : memref<1x4x1x8x256xf32, #tpu.memory_space<vmem>>, vector<1x4x1x1x224xf32>
    %122 = vector.shape_cast %121 : vector<1x4x1x1x224xf32> to vector<4x224xf32>
    %c32_213 = arith.constant 32 : index
    %c0_214 = arith.constant 0 : index
    %123 = vector.load %arg7[%c32_213, %c0_214] : memref<72x224xf32, #tpu.memory_space<vmem>>, vector<4x224xf32>
    tpu.vector_store %arg7[%c32_213, %c0_214], %122 {strides = array<i32>} : memref<72x224xf32, #tpu.memory_space<vmem>>, vector<4x224xf32>,
    %c0_215 = arith.constant 0 : index
    %c0_216 = arith.constant 0 : index
    %c0_217 = arith.constant 0 : index
    %c3_218 = arith.constant 3 : index
    %c32_219 = arith.constant 32 : index
    %124 = vector.load %arg2[%c0_215, %c0_216, %c0_217, %c3_218, %c32_219] : memref<1x4x1x8x256xf32, #tpu.memory_space<vmem>>, vector<1x4x1x1x224xf32>
    %125 = vector.shape_cast %124 : vector<1x4x1x1x224xf32> to vector<4x224xf32>
    %c40_220 = arith.constant 40 : index
    %c0_221 = arith.constant 0 : index
    %126 = vector.load %arg7[%c40_220, %c0_221] : memref<72x224xf32, #tpu.memory_space<vmem>>, vector<4x224xf32>
    tpu.vector_store %arg7[%c40_220, %c0_221], %125 {strides = array<i32>} : memref<72x224xf32, #tpu.memory_space<vmem>>, vector<4x224xf32>,
    %c0_222 = arith.constant 0 : index
    %c0_223 = arith.constant 0 : index
    %c0_224 = arith.constant 0 : index
    %c4 = arith.constant 4 : index
    %c0_225 = arith.constant 0 : index
    %127 = vector.load %arg2[%c0_222, %c0_223, %c0_224, %c4, %c0_225] : memref<1x4x1x8x256xf32, #tpu.memory_space<vmem>>, vector<1x4x1x1x224xf32>
    %128 = vector.shape_cast %127 : vector<1x4x1x1x224xf32> to vector<4x224xf32>
    %c48_226 = arith.constant 48 : index
    %c0_227 = arith.constant 0 : index
    %129 = vector.load %arg7[%c48_226, %c0_227] : memref<72x224xf32, #tpu.memory_space<vmem>>, vector<4x224xf32>
    tpu.vector_store %arg7[%c48_226, %c0_227], %128 {strides = array<i32>} : memref<72x224xf32, #tpu.memory_space<vmem>>, vector<4x224xf32>,
    %c0_228 = arith.constant 0 : index
    %c0_229 = arith.constant 0 : index
    %c0_230 = arith.constant 0 : index
    %c4_231 = arith.constant 4 : index
    %c16_232 = arith.constant 16 : index
    %130 = vector.load %arg2[%c0_228, %c0_229, %c0_230, %c4_231, %c16_232] : memref<1x4x1x8x256xf32, #tpu.memory_space<vmem>>, vector<1x4x1x1x224xf32>
    %131 = vector.shape_cast %130 : vector<1x4x1x1x224xf32> to vector<4x224xf32>
    %c56_233 = arith.constant 56 : index
    %c0_234 = arith.constant 0 : index
    %132 = vector.load %arg7[%c56_233, %c0_234] : memref<72x224xf32, #tpu.memory_space<vmem>>, vector<4x224xf32>
    tpu.vector_store %arg7[%c56_233, %c0_234], %131 {strides = array<i32>} : memref<72x224xf32, #tpu.memory_space<vmem>>, vector<4x224xf32>,
    %c0_235 = arith.constant 0 : index
    %c0_236 = arith.constant 0 : index
    %c0_237 = arith.constant 0 : index
    %c4_238 = arith.constant 4 : index
    %c32_239 = arith.constant 32 : index
    %133 = vector.load %arg2[%c0_235, %c0_236, %c0_237, %c4_238, %c32_239] : memref<1x4x1x8x256xf32, #tpu.memory_space<vmem>>, vector<1x4x1x1x224xf32>
    %134 = vector.shape_cast %133 : vector<1x4x1x1x224xf32> to vector<4x224xf32>
    %c64_240 = arith.constant 64 : index
    %c0_241 = arith.constant 0 : index
    %135 = vector.load %arg7[%c64_240, %c0_241] : memref<72x224xf32, #tpu.memory_space<vmem>>, vector<4x224xf32>
    tpu.vector_store %arg7[%c64_240, %c0_241], %134 {strides = array<i32>} : memref<72x224xf32, #tpu.memory_space<vmem>>, vector<4x224xf32>,
    %c0_242 = arith.constant 0 : index
    %c0_243 = arith.constant 0 : index
    %136 = vector.load %arg7[%c0_242, %c0_243] : memref<72x224xf32, #tpu.memory_space<vmem>>, vector<72x224xf32>
    %cst_244 = arith.constant dense<0.000000e+00> : vector<8x224xf32>
    %137 = tpu.matmul %4, %136, %cst_244 {dimension_numbers = #tpu.dot_dimension_numbers<[1], [0], [0], [1], [0, 0, 1, 1], [], []>} : vector<8x72xf32>, vector<72x224xf32>, vector<8x224xf32> -> vector<8x224xf32>
    %c0_245 = arith.constant 0 : index
    %c0_246 = arith.constant 0 : index
    %138 = vector.load %arg8[%c0_245, %c0_246] : memref<8x226xf32, #tpu.memory_space<vmem>>, vector<8x224xf32>
    tpu.vector_store %arg8[%c0_245, %c0_246], %137 {strides = array<i32>} : memref<8x226xf32, #tpu.memory_space<vmem>>, vector<8x224xf32>,
    %cst_247 = arith.constant 0.000000e+00 : f32
    %139 = vector.broadcast %cst_247 : f32 to vector<8x224xf32>
    %c0_248 = arith.constant 0 : index
    %c0_249 = arith.constant 0 : index
    %c0_250 = arith.constant 0 : index
    %140 = vector.load %arg4[%c0_248, %c0_249, %c0_250] : memref<3x8x8xf32, #tpu.memory_space<vmem>>, vector<1x8x8xf32>
    %141 = vector.shape_cast %140 : vector<1x8x8xf32> to vector<8x8xf32>
    %c0_251 = arith.constant 0 : index
    %c0_252 = arith.constant 0 : index
    %142 = vector.load %arg8[%c0_251, %c0_252] : memref<8x226xf32, #tpu.memory_space<vmem>>, vector<8x224xf32>
    %cst_253 = arith.constant dense<0.000000e+00> : vector<8x224xf32>
    %143 = tpu.matmul %141, %142, %cst_253 {dimension_numbers = #tpu.dot_dimension_numbers<[1], [0], [0], [1], [0, 0, 1, 1], [], []>} : vector<8x8xf32>, vector<8x224xf32>, vector<8x224xf32> -> vector<8x224xf32>
    %144 = arith.addf %139, %143 : vector<8x224xf32>
    %c1_254 = arith.constant 1 : index
    %c0_255 = arith.constant 0 : index
    %c0_256 = arith.constant 0 : index
    %145 = vector.load %arg4[%c1_254, %c0_255, %c0_256] : memref<3x8x8xf32, #tpu.memory_space<vmem>>, vector<1x8x8xf32>
    %146 = vector.shape_cast %145 : vector<1x8x8xf32> to vector<8x8xf32>
    %c0_257 = arith.constant 0 : index
    %c1_258 = arith.constant 1 : index
    %147 = vector.load %arg8[%c0_257, %c1_258] : memref<8x226xf32, #tpu.memory_space<vmem>>, vector<8x224xf32>
    %cst_259 = arith.constant dense<0.000000e+00> : vector<8x224xf32>
    %148 = tpu.matmul %146, %147, %cst_259 {dimension_numbers = #tpu.dot_dimension_numbers<[1], [0], [0], [1], [0, 0, 1, 1], [], []>} : vector<8x8xf32>, vector<8x224xf32>, vector<8x224xf32> -> vector<8x224xf32>
    %149 = arith.addf %144, %148 : vector<8x224xf32>
    %c2_260 = arith.constant 2 : index
    %c0_261 = arith.constant 0 : index
    %c0_262 = arith.constant 0 : index
    %150 = vector.load %arg4[%c2_260, %c0_261, %c0_262] : memref<3x8x8xf32, #tpu.memory_space<vmem>>, vector<1x8x8xf32>
    %151 = vector.shape_cast %150 : vector<1x8x8xf32> to vector<8x8xf32>
    %c0_263 = arith.constant 0 : index
    %c2_264 = arith.constant 2 : index
    %152 = vector.load %arg8[%c0_263, %c2_264] : memref<8x226xf32, #tpu.memory_space<vmem>>, vector<8x224xf32>
    %cst_265 = arith.constant dense<0.000000e+00> : vector<8x224xf32>
    %153 = tpu.matmul %151, %152, %cst_265 {dimension_numbers = #tpu.dot_dimension_numbers<[1], [0], [0], [1], [0, 0, 1, 1], [], []>} : vector<8x8xf32>, vector<8x224xf32>, vector<8x224xf32> -> vector<8x224xf32>
    %154 = arith.addf %149, %153 : vector<8x224xf32>
    %c0_266 = arith.constant 0 : index
    %c0_267 = arith.constant 0 : index
    %155 = vector.load %arg5[%c0_266, %c0_267] : memref<8x1xf32, #tpu.memory_space<vmem>>, vector<8x1xf32>
    %156 = vector.broadcast %155 : vector<8x1xf32> to vector<8x224xf32>
    %157 = arith.addf %154, %156 : vector<8x224xf32>
    %c0_268 = arith.constant 0 : index
    %c2_269 = arith.constant 2 : index
    %c0_270 = arith.constant 0 : index
    %c0_271 = arith.constant 0 : index
    %158 = vector.load %arg6[%c0_268, %c2_269, %c0_270, %c0_271] : memref<1x6x8x224xf32, #tpu.memory_space<vmem>>, vector<1x1x8x224xf32>
    %159 = vector.shape_cast %158 : vector<1x1x8x224xf32> to vector<8x224xf32>
    %160 = vector.shape_cast %157 : vector<8x224xf32> to vector<1x1x8x224xf32>
    tpu.vector_store %arg6[%c0_268, %c2_269, %c0_270, %c0_271], %160 {strides = array<i32>} : memref<1x6x8x224xf32, #tpu.memory_space<vmem>>, vector<1x1x8x224xf32>,
    %c0_272 = arith.constant 0 : index
    %c0_273 = arith.constant 0 : index
    %c0_274 = arith.constant 0 : index
    %c3_275 = arith.constant 3 : index
    %c0_276 = arith.constant 0 : index
    %161 = vector.load %arg2[%c0_272, %c0_273, %c0_274, %c3_275, %c0_276] : memref<1x4x1x8x256xf32, #tpu.memory_space<vmem>>, vector<1x4x1x1x224xf32>
    %162 = vector.shape_cast %161 : vector<1x4x1x1x224xf32> to vector<4x224xf32>
    %c0_277 = arith.constant 0 : index
    %c0_278 = arith.constant 0 : index
    %163 = vector.load %arg7[%c0_277, %c0_278] : memref<72x224xf32, #tpu.memory_space<vmem>>, vector<4x224xf32>
    tpu.vector_store %arg7[%c0_277, %c0_278], %162 {strides = array<i32>} : memref<72x224xf32, #tpu.memory_space<vmem>>, vector<4x224xf32>,
    %c0_279 = arith.constant 0 : index
    %c0_280 = arith.constant 0 : index
    %c0_281 = arith.constant 0 : index
    %c3_282 = arith.constant 3 : index
    %c16_283 = arith.constant 16 : index
    %164 = vector.load %arg2[%c0_279, %c0_280, %c0_281, %c3_282, %c16_283] : memref<1x4x1x8x256xf32, #tpu.memory_space<vmem>>, vector<1x4x1x1x224xf32>
    %165 = vector.shape_cast %164 : vector<1x4x1x1x224xf32> to vector<4x224xf32>
    %c8_284 = arith.constant 8 : index
    %c0_285 = arith.constant 0 : index
    %166 = vector.load %arg7[%c8_284, %c0_285] : memref<72x224xf32, #tpu.memory_space<vmem>>, vector<4x224xf32>
    tpu.vector_store %arg7[%c8_284, %c0_285], %165 {strides = array<i32>} : memref<72x224xf32, #tpu.memory_space<vmem>>, vector<4x224xf32>,
    %c0_286 = arith.constant 0 : index
    %c0_287 = arith.constant 0 : index
    %c0_288 = arith.constant 0 : index
    %c3_289 = arith.constant 3 : index
    %c32_290 = arith.constant 32 : index
    %167 = vector.load %arg2[%c0_286, %c0_287, %c0_288, %c3_289, %c32_290] : memref<1x4x1x8x256xf32, #tpu.memory_space<vmem>>, vector<1x4x1x1x224xf32>
    %168 = vector.shape_cast %167 : vector<1x4x1x1x224xf32> to vector<4x224xf32>
    %c16_291 = arith.constant 16 : index
    %c0_292 = arith.constant 0 : index
    %169 = vector.load %arg7[%c16_291, %c0_292] : memref<72x224xf32, #tpu.memory_space<vmem>>, vector<4x224xf32>
    tpu.vector_store %arg7[%c16_291, %c0_292], %168 {strides = array<i32>} : memref<72x224xf32, #tpu.memory_space<vmem>>, vector<4x224xf32>,
    %c0_293 = arith.constant 0 : index
    %c0_294 = arith.constant 0 : index
    %c0_295 = arith.constant 0 : index
    %c4_296 = arith.constant 4 : index
    %c0_297 = arith.constant 0 : index
    %170 = vector.load %arg2[%c0_293, %c0_294, %c0_295, %c4_296, %c0_297] : memref<1x4x1x8x256xf32, #tpu.memory_space<vmem>>, vector<1x4x1x1x224xf32>
    %171 = vector.shape_cast %170 : vector<1x4x1x1x224xf32> to vector<4x224xf32>
    %c24_298 = arith.constant 24 : index
    %c0_299 = arith.constant 0 : index
    %172 = vector.load %arg7[%c24_298, %c0_299] : memref<72x224xf32, #tpu.memory_space<vmem>>, vector<4x224xf32>
    tpu.vector_store %arg7[%c24_298, %c0_299], %171 {strides = array<i32>} : memref<72x224xf32, #tpu.memory_space<vmem>>, vector<4x224xf32>,
    %c0_300 = arith.constant 0 : index
    %c0_301 = arith.constant 0 : index
    %c0_302 = arith.constant 0 : index
    %c4_303 = arith.constant 4 : index
    %c16_304 = arith.constant 16 : index
    %173 = vector.load %arg2[%c0_300, %c0_301, %c0_302, %c4_303, %c16_304] : memref<1x4x1x8x256xf32, #tpu.memory_space<vmem>>, vector<1x4x1x1x224xf32>
    %174 = vector.shape_cast %173 : vector<1x4x1x1x224xf32> to vector<4x224xf32>
    %c32_305 = arith.constant 32 : index
    %c0_306 = arith.constant 0 : index
    %175 = vector.load %arg7[%c32_305, %c0_306] : memref<72x224xf32, #tpu.memory_space<vmem>>, vector<4x224xf32>
    tpu.vector_store %arg7[%c32_305, %c0_306], %174 {strides = array<i32>} : memref<72x224xf32, #tpu.memory_space<vmem>>, vector<4x224xf32>,
    %c0_307 = arith.constant 0 : index
    %c0_308 = arith.constant 0 : index
    %c0_309 = arith.constant 0 : index
    %c4_310 = arith.constant 4 : index
    %c32_311 = arith.constant 32 : index
    %176 = vector.load %arg2[%c0_307, %c0_308, %c0_309, %c4_310, %c32_311] : memref<1x4x1x8x256xf32, #tpu.memory_space<vmem>>, vector<1x4x1x1x224xf32>
    %177 = vector.shape_cast %176 : vector<1x4x1x1x224xf32> to vector<4x224xf32>
    %c40_312 = arith.constant 40 : index
    %c0_313 = arith.constant 0 : index
    %178 = vector.load %arg7[%c40_312, %c0_313] : memref<72x224xf32, #tpu.memory_space<vmem>>, vector<4x224xf32>
    tpu.vector_store %arg7[%c40_312, %c0_313], %177 {strides = array<i32>} : memref<72x224xf32, #tpu.memory_space<vmem>>, vector<4x224xf32>,
    %c0_314 = arith.constant 0 : index
    %c0_315 = arith.constant 0 : index
    %c0_316 = arith.constant 0 : index
    %c5 = arith.constant 5 : index
    %c0_317 = arith.constant 0 : index
    %179 = vector.load %arg2[%c0_314, %c0_315, %c0_316, %c5, %c0_317] : memref<1x4x1x8x256xf32, #tpu.memory_space<vmem>>, vector<1x4x1x1x224xf32>
    %180 = vector.shape_cast %179 : vector<1x4x1x1x224xf32> to vector<4x224xf32>
    %c48_318 = arith.constant 48 : index
    %c0_319 = arith.constant 0 : index
    %181 = vector.load %arg7[%c48_318, %c0_319] : memref<72x224xf32, #tpu.memory_space<vmem>>, vector<4x224xf32>
    tpu.vector_store %arg7[%c48_318, %c0_319], %180 {strides = array<i32>} : memref<72x224xf32, #tpu.memory_space<vmem>>, vector<4x224xf32>,
    %c0_320 = arith.constant 0 : index
    %c0_321 = arith.constant 0 : index
    %c0_322 = arith.constant 0 : index
    %c5_323 = arith.constant 5 : index
    %c16_324 = arith.constant 16 : index
    %182 = vector.load %arg2[%c0_320, %c0_321, %c0_322, %c5_323, %c16_324] : memref<1x4x1x8x256xf32, #tpu.memory_space<vmem>>, vector<1x4x1x1x224xf32>
    %183 = vector.shape_cast %182 : vector<1x4x1x1x224xf32> to vector<4x224xf32>
    %c56_325 = arith.constant 56 : index
    %c0_326 = arith.constant 0 : index
    %184 = vector.load %arg7[%c56_325, %c0_326] : memref<72x224xf32, #tpu.memory_space<vmem>>, vector<4x224xf32>
    tpu.vector_store %arg7[%c56_325, %c0_326], %183 {strides = array<i32>} : memref<72x224xf32, #tpu.memory_space<vmem>>, vector<4x224xf32>,
    %c0_327 = arith.constant 0 : index
    %c0_328 = arith.constant 0 : index
    %c0_329 = arith.constant 0 : index
    %c5_330 = arith.constant 5 : index
    %c32_331 = arith.constant 32 : index
    %185 = vector.load %arg2[%c0_327, %c0_328, %c0_329, %c5_330, %c32_331] : memref<1x4x1x8x256xf32, #tpu.memory_space<vmem>>, vector<1x4x1x1x224xf32>
    %186 = vector.shape_cast %185 : vector<1x4x1x1x224xf32> to vector<4x224xf32>
    %c64_332 = arith.constant 64 : index
    %c0_333 = arith.constant 0 : index
    %187 = vector.load %arg7[%c64_332, %c0_333] : memref<72x224xf32, #tpu.memory_space<vmem>>, vector<4x224xf32>
    tpu.vector_store %arg7[%c64_332, %c0_333], %186 {strides = array<i32>} : memref<72x224xf32, #tpu.memory_space<vmem>>, vector<4x224xf32>,
    %c0_334 = arith.constant 0 : index
    %c0_335 = arith.constant 0 : index
    %188 = vector.load %arg7[%c0_334, %c0_335] : memref<72x224xf32, #tpu.memory_space<vmem>>, vector<72x224xf32>
    %cst_336 = arith.constant dense<0.000000e+00> : vector<8x224xf32>
    %189 = tpu.matmul %4, %188, %cst_336 {dimension_numbers = #tpu.dot_dimension_numbers<[1], [0], [0], [1], [0, 0, 1, 1], [], []>} : vector<8x72xf32>, vector<72x224xf32>, vector<8x224xf32> -> vector<8x224xf32>
    %c0_337 = arith.constant 0 : index
    %c0_338 = arith.constant 0 : index
    %190 = vector.load %arg8[%c0_337, %c0_338] : memref<8x226xf32, #tpu.memory_space<vmem>>, vector<8x224xf32>
    tpu.vector_store %arg8[%c0_337, %c0_338], %189 {strides = array<i32>} : memref<8x226xf32, #tpu.memory_space<vmem>>, vector<8x224xf32>,
    %cst_339 = arith.constant 0.000000e+00 : f32
    %191 = vector.broadcast %cst_339 : f32 to vector<8x224xf32>
    %c0_340 = arith.constant 0 : index
    %c0_341 = arith.constant 0 : index
    %c0_342 = arith.constant 0 : index
    %192 = vector.load %arg4[%c0_340, %c0_341, %c0_342] : memref<3x8x8xf32, #tpu.memory_space<vmem>>, vector<1x8x8xf32>
    %193 = vector.shape_cast %192 : vector<1x8x8xf32> to vector<8x8xf32>
    %c0_343 = arith.constant 0 : index
    %c0_344 = arith.constant 0 : index
    %194 = vector.load %arg8[%c0_343, %c0_344] : memref<8x226xf32, #tpu.memory_space<vmem>>, vector<8x224xf32>
    %cst_345 = arith.constant dense<0.000000e+00> : vector<8x224xf32>
    %195 = tpu.matmul %193, %194, %cst_345 {dimension_numbers = #tpu.dot_dimension_numbers<[1], [0], [0], [1], [0, 0, 1, 1], [], []>} : vector<8x8xf32>, vector<8x224xf32>, vector<8x224xf32> -> vector<8x224xf32>
    %196 = arith.addf %191, %195 : vector<8x224xf32>
    %c1_346 = arith.constant 1 : index
    %c0_347 = arith.constant 0 : index
    %c0_348 = arith.constant 0 : index
    %197 = vector.load %arg4[%c1_346, %c0_347, %c0_348] : memref<3x8x8xf32, #tpu.memory_space<vmem>>, vector<1x8x8xf32>
    %198 = vector.shape_cast %197 : vector<1x8x8xf32> to vector<8x8xf32>
    %c0_349 = arith.constant 0 : index
    %c1_350 = arith.constant 1 : index
    %199 = vector.load %arg8[%c0_349, %c1_350] : memref<8x226xf32, #tpu.memory_space<vmem>>, vector<8x224xf32>
    %cst_351 = arith.constant dense<0.000000e+00> : vector<8x224xf32>
    %200 = tpu.matmul %198, %199, %cst_351 {dimension_numbers = #tpu.dot_dimension_numbers<[1], [0], [0], [1], [0, 0, 1, 1], [], []>} : vector<8x8xf32>, vector<8x224xf32>, vector<8x224xf32> -> vector<8x224xf32>
    %201 = arith.addf %196, %200 : vector<8x224xf32>
    %c2_352 = arith.constant 2 : index
    %c0_353 = arith.constant 0 : index
    %c0_354 = arith.constant 0 : index
    %202 = vector.load %arg4[%c2_352, %c0_353, %c0_354] : memref<3x8x8xf32, #tpu.memory_space<vmem>>, vector<1x8x8xf32>
    %203 = vector.shape_cast %202 : vector<1x8x8xf32> to vector<8x8xf32>
    %c0_355 = arith.constant 0 : index
    %c2_356 = arith.constant 2 : index
    %204 = vector.load %arg8[%c0_355, %c2_356] : memref<8x226xf32, #tpu.memory_space<vmem>>, vector<8x224xf32>
    %cst_357 = arith.constant dense<0.000000e+00> : vector<8x224xf32>
    %205 = tpu.matmul %203, %204, %cst_357 {dimension_numbers = #tpu.dot_dimension_numbers<[1], [0], [0], [1], [0, 0, 1, 1], [], []>} : vector<8x8xf32>, vector<8x224xf32>, vector<8x224xf32> -> vector<8x224xf32>
    %206 = arith.addf %201, %205 : vector<8x224xf32>
    %c0_358 = arith.constant 0 : index
    %c0_359 = arith.constant 0 : index
    %207 = vector.load %arg5[%c0_358, %c0_359] : memref<8x1xf32, #tpu.memory_space<vmem>>, vector<8x1xf32>
    %208 = vector.broadcast %207 : vector<8x1xf32> to vector<8x224xf32>
    %209 = arith.addf %206, %208 : vector<8x224xf32>
    %c0_360 = arith.constant 0 : index
    %c3_361 = arith.constant 3 : index
    %c0_362 = arith.constant 0 : index
    %c0_363 = arith.constant 0 : index
    %210 = vector.load %arg6[%c0_360, %c3_361, %c0_362, %c0_363] : memref<1x6x8x224xf32, #tpu.memory_space<vmem>>, vector<1x1x8x224xf32>
    %211 = vector.shape_cast %210 : vector<1x1x8x224xf32> to vector<8x224xf32>
    %212 = vector.shape_cast %209 : vector<8x224xf32> to vector<1x1x8x224xf32>
    tpu.vector_store %arg6[%c0_360, %c3_361, %c0_362, %c0_363], %212 {strides = array<i32>} : memref<1x6x8x224xf32, #tpu.memory_space<vmem>>, vector<1x1x8x224xf32>,
    %c0_364 = arith.constant 0 : index
    %c0_365 = arith.constant 0 : index
    %c0_366 = arith.constant 0 : index
    %c4_367 = arith.constant 4 : index
    %c0_368 = arith.constant 0 : index
    %213 = vector.load %arg2[%c0_364, %c0_365, %c0_366, %c4_367, %c0_368] : memref<1x4x1x8x256xf32, #tpu.memory_space<vmem>>, vector<1x4x1x1x224xf32>
    %214 = vector.shape_cast %213 : vector<1x4x1x1x224xf32> to vector<4x224xf32>
    %c0_369 = arith.constant 0 : index
    %c0_370 = arith.constant 0 : index
    %215 = vector.load %arg7[%c0_369, %c0_370] : memref<72x224xf32, #tpu.memory_space<vmem>>, vector<4x224xf32>
    tpu.vector_store %arg7[%c0_369, %c0_370], %214 {strides = array<i32>} : memref<72x224xf32, #tpu.memory_space<vmem>>, vector<4x224xf32>,
    %c0_371 = arith.constant 0 : index
    %c0_372 = arith.constant 0 : index
    %c0_373 = arith.constant 0 : index
    %c4_374 = arith.constant 4 : index
    %c16_375 = arith.constant 16 : index
    %216 = vector.load %arg2[%c0_371, %c0_372, %c0_373, %c4_374, %c16_375] : memref<1x4x1x8x256xf32, #tpu.memory_space<vmem>>, vector<1x4x1x1x224xf32>
    %217 = vector.shape_cast %216 : vector<1x4x1x1x224xf32> to vector<4x224xf32>
    %c8_376 = arith.constant 8 : index
    %c0_377 = arith.constant 0 : index
    %218 = vector.load %arg7[%c8_376, %c0_377] : memref<72x224xf32, #tpu.memory_space<vmem>>, vector<4x224xf32>
    tpu.vector_store %arg7[%c8_376, %c0_377], %217 {strides = array<i32>} : memref<72x224xf32, #tpu.memory_space<vmem>>, vector<4x224xf32>,
    %c0_378 = arith.constant 0 : index
    %c0_379 = arith.constant 0 : index
    %c0_380 = arith.constant 0 : index
    %c4_381 = arith.constant 4 : index
    %c32_382 = arith.constant 32 : index
    %219 = vector.load %arg2[%c0_378, %c0_379, %c0_380, %c4_381, %c32_382] : memref<1x4x1x8x256xf32, #tpu.memory_space<vmem>>, vector<1x4x1x1x224xf32>
    %220 = vector.shape_cast %219 : vector<1x4x1x1x224xf32> to vector<4x224xf32>
    %c16_383 = arith.constant 16 : index
    %c0_384 = arith.constant 0 : index
    %221 = vector.load %arg7[%c16_383, %c0_384] : memref<72x224xf32, #tpu.memory_space<vmem>>, vector<4x224xf32>
    tpu.vector_store %arg7[%c16_383, %c0_384], %220 {strides = array<i32>} : memref<72x224xf32, #tpu.memory_space<vmem>>, vector<4x224xf32>,
    %c0_385 = arith.constant 0 : index
    %c0_386 = arith.constant 0 : index
    %c0_387 = arith.constant 0 : index
    %c5_388 = arith.constant 5 : index
    %c0_389 = arith.constant 0 : index
    %222 = vector.load %arg2[%c0_385, %c0_386, %c0_387, %c5_388, %c0_389] : memref<1x4x1x8x256xf32, #tpu.memory_space<vmem>>, vector<1x4x1x1x224xf32>
    %223 = vector.shape_cast %222 : vector<1x4x1x1x224xf32> to vector<4x224xf32>
    %c24_390 = arith.constant 24 : index
    %c0_391 = arith.constant 0 : index
    %224 = vector.load %arg7[%c24_390, %c0_391] : memref<72x224xf32, #tpu.memory_space<vmem>>, vector<4x224xf32>
    tpu.vector_store %arg7[%c24_390, %c0_391], %223 {strides = array<i32>} : memref<72x224xf32, #tpu.memory_space<vmem>>, vector<4x224xf32>,
    %c0_392 = arith.constant 0 : index
    %c0_393 = arith.constant 0 : index
    %c0_394 = arith.constant 0 : index
    %c5_395 = arith.constant 5 : index
    %c16_396 = arith.constant 16 : index
    %225 = vector.load %arg2[%c0_392, %c0_393, %c0_394, %c5_395, %c16_396] : memref<1x4x1x8x256xf32, #tpu.memory_space<vmem>>, vector<1x4x1x1x224xf32>
    %226 = vector.shape_cast %225 : vector<1x4x1x1x224xf32> to vector<4x224xf32>
    %c32_397 = arith.constant 32 : index
    %c0_398 = arith.constant 0 : index
    %227 = vector.load %arg7[%c32_397, %c0_398] : memref<72x224xf32, #tpu.memory_space<vmem>>, vector<4x224xf32>
    tpu.vector_store %arg7[%c32_397, %c0_398], %226 {strides = array<i32>} : memref<72x224xf32, #tpu.memory_space<vmem>>, vector<4x224xf32>,
    %c0_399 = arith.constant 0 : index
    %c0_400 = arith.constant 0 : index
    %c0_401 = arith.constant 0 : index
    %c5_402 = arith.constant 5 : index
    %c32_403 = arith.constant 32 : index
    %228 = vector.load %arg2[%c0_399, %c0_400, %c0_401, %c5_402, %c32_403] : memref<1x4x1x8x256xf32, #tpu.memory_space<vmem>>, vector<1x4x1x1x224xf32>
    %229 = vector.shape_cast %228 : vector<1x4x1x1x224xf32> to vector<4x224xf32>
    %c40_404 = arith.constant 40 : index
    %c0_405 = arith.constant 0 : index
    %230 = vector.load %arg7[%c40_404, %c0_405] : memref<72x224xf32, #tpu.memory_space<vmem>>, vector<4x224xf32>
    tpu.vector_store %arg7[%c40_404, %c0_405], %229 {strides = array<i32>} : memref<72x224xf32, #tpu.memory_space<vmem>>, vector<4x224xf32>,
    %c0_406 = arith.constant 0 : index
    %c0_407 = arith.constant 0 : index
    %c0_408 = arith.constant 0 : index
    %c6 = arith.constant 6 : index
    %c0_409 = arith.constant 0 : index
    %231 = vector.load %arg2[%c0_406, %c0_407, %c0_408, %c6, %c0_409] : memref<1x4x1x8x256xf32, #tpu.memory_space<vmem>>, vector<1x4x1x1x224xf32>
    %232 = vector.shape_cast %231 : vector<1x4x1x1x224xf32> to vector<4x224xf32>
    %c48_410 = arith.constant 48 : index
    %c0_411 = arith.constant 0 : index
    %233 = vector.load %arg7[%c48_410, %c0_411] : memref<72x224xf32, #tpu.memory_space<vmem>>, vector<4x224xf32>
    tpu.vector_store %arg7[%c48_410, %c0_411], %232 {strides = array<i32>} : memref<72x224xf32, #tpu.memory_space<vmem>>, vector<4x224xf32>,
    %c0_412 = arith.constant 0 : index
    %c0_413 = arith.constant 0 : index
    %c0_414 = arith.constant 0 : index
    %c6_415 = arith.constant 6 : index
    %c16_416 = arith.constant 16 : index
    %234 = vector.load %arg2[%c0_412, %c0_413, %c0_414, %c6_415, %c16_416] : memref<1x4x1x8x256xf32, #tpu.memory_space<vmem>>, vector<1x4x1x1x224xf32>
    %235 = vector.shape_cast %234 : vector<1x4x1x1x224xf32> to vector<4x224xf32>
    %c56_417 = arith.constant 56 : index
    %c0_418 = arith.constant 0 : index
    %236 = vector.load %arg7[%c56_417, %c0_418] : memref<72x224xf32, #tpu.memory_space<vmem>>, vector<4x224xf32>
    tpu.vector_store %arg7[%c56_417, %c0_418], %235 {strides = array<i32>} : memref<72x224xf32, #tpu.memory_space<vmem>>, vector<4x224xf32>,
    %c0_419 = arith.constant 0 : index
    %c0_420 = arith.constant 0 : index
    %c0_421 = arith.constant 0 : index
    %c6_422 = arith.constant 6 : index
    %c32_423 = arith.constant 32 : index
    %237 = vector.load %arg2[%c0_419, %c0_420, %c0_421, %c6_422, %c32_423] : memref<1x4x1x8x256xf32, #tpu.memory_space<vmem>>, vector<1x4x1x1x224xf32>
    %238 = vector.shape_cast %237 : vector<1x4x1x1x224xf32> to vector<4x224xf32>
    %c64_424 = arith.constant 64 : index
    %c0_425 = arith.constant 0 : index
    %239 = vector.load %arg7[%c64_424, %c0_425] : memref<72x224xf32, #tpu.memory_space<vmem>>, vector<4x224xf32>
    tpu.vector_store %arg7[%c64_424, %c0_425], %238 {strides = array<i32>} : memref<72x224xf32, #tpu.memory_space<vmem>>, vector<4x224xf32>,
    %c0_426 = arith.constant 0 : index
    %c0_427 = arith.constant 0 : index
    %240 = vector.load %arg7[%c0_426, %c0_427] : memref<72x224xf32, #tpu.memory_space<vmem>>, vector<72x224xf32>
    %cst_428 = arith.constant dense<0.000000e+00> : vector<8x224xf32>
    %241 = tpu.matmul %4, %240, %cst_428 {dimension_numbers = #tpu.dot_dimension_numbers<[1], [0], [0], [1], [0, 0, 1, 1], [], []>} : vector<8x72xf32>, vector<72x224xf32>, vector<8x224xf32> -> vector<8x224xf32>
    %c0_429 = arith.constant 0 : index
    %c0_430 = arith.constant 0 : index
    %242 = vector.load %arg8[%c0_429, %c0_430] : memref<8x226xf32, #tpu.memory_space<vmem>>, vector<8x224xf32>
    tpu.vector_store %arg8[%c0_429, %c0_430], %241 {strides = array<i32>} : memref<8x226xf32, #tpu.memory_space<vmem>>, vector<8x224xf32>,
    %cst_431 = arith.constant 0.000000e+00 : f32
    %243 = vector.broadcast %cst_431 : f32 to vector<8x224xf32>
    %c0_432 = arith.constant 0 : index
    %c0_433 = arith.constant 0 : index
    %c0_434 = arith.constant 0 : index
    %244 = vector.load %arg4[%c0_432, %c0_433, %c0_434] : memref<3x8x8xf32, #tpu.memory_space<vmem>>, vector<1x8x8xf32>
    %245 = vector.shape_cast %244 : vector<1x8x8xf32> to vector<8x8xf32>
    %c0_435 = arith.constant 0 : index
    %c0_436 = arith.constant 0 : index
    %246 = vector.load %arg8[%c0_435, %c0_436] : memref<8x226xf32, #tpu.memory_space<vmem>>, vector<8x224xf32>
    %cst_437 = arith.constant dense<0.000000e+00> : vector<8x224xf32>
    %247 = tpu.matmul %245, %246, %cst_437 {dimension_numbers = #tpu.dot_dimension_numbers<[1], [0], [0], [1], [0, 0, 1, 1], [], []>} : vector<8x8xf32>, vector<8x224xf32>, vector<8x224xf32> -> vector<8x224xf32>
    %248 = arith.addf %243, %247 : vector<8x224xf32>
    %c1_438 = arith.constant 1 : index
    %c0_439 = arith.constant 0 : index
    %c0_440 = arith.constant 0 : index
    %249 = vector.load %arg4[%c1_438, %c0_439, %c0_440] : memref<3x8x8xf32, #tpu.memory_space<vmem>>, vector<1x8x8xf32>
    %250 = vector.shape_cast %249 : vector<1x8x8xf32> to vector<8x8xf32>
    %c0_441 = arith.constant 0 : index
    %c1_442 = arith.constant 1 : index
    %251 = vector.load %arg8[%c0_441, %c1_442] : memref<8x226xf32, #tpu.memory_space<vmem>>, vector<8x224xf32>
    %cst_443 = arith.constant dense<0.000000e+00> : vector<8x224xf32>
    %252 = tpu.matmul %250, %251, %cst_443 {dimension_numbers = #tpu.dot_dimension_numbers<[1], [0], [0], [1], [0, 0, 1, 1], [], []>} : vector<8x8xf32>, vector<8x224xf32>, vector<8x224xf32> -> vector<8x224xf32>
    %253 = arith.addf %248, %252 : vector<8x224xf32>
    %c2_444 = arith.constant 2 : index
    %c0_445 = arith.constant 0 : index
    %c0_446 = arith.constant 0 : index
    %254 = vector.load %arg4[%c2_444, %c0_445, %c0_446] : memref<3x8x8xf32, #tpu.memory_space<vmem>>, vector<1x8x8xf32>
    %255 = vector.shape_cast %254 : vector<1x8x8xf32> to vector<8x8xf32>
    %c0_447 = arith.constant 0 : index
    %c2_448 = arith.constant 2 : index
    %256 = vector.load %arg8[%c0_447, %c2_448] : memref<8x226xf32, #tpu.memory_space<vmem>>, vector<8x224xf32>
    %cst_449 = arith.constant dense<0.000000e+00> : vector<8x224xf32>
    %257 = tpu.matmul %255, %256, %cst_449 {dimension_numbers = #tpu.dot_dimension_numbers<[1], [0], [0], [1], [0, 0, 1, 1], [], []>} : vector<8x8xf32>, vector<8x224xf32>, vector<8x224xf32> -> vector<8x224xf32>
    %258 = arith.addf %253, %257 : vector<8x224xf32>
    %c0_450 = arith.constant 0 : index
    %c0_451 = arith.constant 0 : index
    %259 = vector.load %arg5[%c0_450, %c0_451] : memref<8x1xf32, #tpu.memory_space<vmem>>, vector<8x1xf32>
    %260 = vector.broadcast %259 : vector<8x1xf32> to vector<8x224xf32>
    %261 = arith.addf %258, %260 : vector<8x224xf32>
    %c0_452 = arith.constant 0 : index
    %c4_453 = arith.constant 4 : index
    %c0_454 = arith.constant 0 : index
    %c0_455 = arith.constant 0 : index
    %262 = vector.load %arg6[%c0_452, %c4_453, %c0_454, %c0_455] : memref<1x6x8x224xf32, #tpu.memory_space<vmem>>, vector<1x1x8x224xf32>
    %263 = vector.shape_cast %262 : vector<1x1x8x224xf32> to vector<8x224xf32>
    %264 = vector.shape_cast %261 : vector<8x224xf32> to vector<1x1x8x224xf32>
    tpu.vector_store %arg6[%c0_452, %c4_453, %c0_454, %c0_455], %264 {strides = array<i32>} : memref<1x6x8x224xf32, #tpu.memory_space<vmem>>, vector<1x1x8x224xf32>,
    %c0_456 = arith.constant 0 : index
    %c0_457 = arith.constant 0 : index
    %c0_458 = arith.constant 0 : index
    %c5_459 = arith.constant 5 : index
    %c0_460 = arith.constant 0 : index
    %265 = vector.load %arg2[%c0_456, %c0_457, %c0_458, %c5_459, %c0_460] : memref<1x4x1x8x256xf32, #tpu.memory_space<vmem>>, vector<1x4x1x1x224xf32>
    %266 = vector.shape_cast %265 : vector<1x4x1x1x224xf32> to vector<4x224xf32>
    %c0_461 = arith.constant 0 : index
    %c0_462 = arith.constant 0 : index
    %267 = vector.load %arg7[%c0_461, %c0_462] : memref<72x224xf32, #tpu.memory_space<vmem>>, vector<4x224xf32>
    tpu.vector_store %arg7[%c0_461, %c0_462], %266 {strides = array<i32>} : memref<72x224xf32, #tpu.memory_space<vmem>>, vector<4x224xf32>,
    %c0_463 = arith.constant 0 : index
    %c0_464 = arith.constant 0 : index
    %c0_465 = arith.constant 0 : index
    %c5_466 = arith.constant 5 : index
    %c16_467 = arith.constant 16 : index
    %268 = vector.load %arg2[%c0_463, %c0_464, %c0_465, %c5_466, %c16_467] : memref<1x4x1x8x256xf32, #tpu.memory_space<vmem>>, vector<1x4x1x1x224xf32>
    %269 = vector.shape_cast %268 : vector<1x4x1x1x224xf32> to vector<4x224xf32>
    %c8_468 = arith.constant 8 : index
    %c0_469 = arith.constant 0 : index
    %270 = vector.load %arg7[%c8_468, %c0_469] : memref<72x224xf32, #tpu.memory_space<vmem>>, vector<4x224xf32>
    tpu.vector_store %arg7[%c8_468, %c0_469], %269 {strides = array<i32>} : memref<72x224xf32, #tpu.memory_space<vmem>>, vector<4x224xf32>,
    %c0_470 = arith.constant 0 : index
    %c0_471 = arith.constant 0 : index
    %c0_472 = arith.constant 0 : index
    %c5_473 = arith.constant 5 : index
    %c32_474 = arith.constant 32 : index
    %271 = vector.load %arg2[%c0_470, %c0_471, %c0_472, %c5_473, %c32_474] : memref<1x4x1x8x256xf32, #tpu.memory_space<vmem>>, vector<1x4x1x1x224xf32>
    %272 = vector.shape_cast %271 : vector<1x4x1x1x224xf32> to vector<4x224xf32>
    %c16_475 = arith.constant 16 : index
    %c0_476 = arith.constant 0 : index
    %273 = vector.load %arg7[%c16_475, %c0_476] : memref<72x224xf32, #tpu.memory_space<vmem>>, vector<4x224xf32>
    tpu.vector_store %arg7[%c16_475, %c0_476], %272 {strides = array<i32>} : memref<72x224xf32, #tpu.memory_space<vmem>>, vector<4x224xf32>,
    %c0_477 = arith.constant 0 : index
    %c0_478 = arith.constant 0 : index
    %c0_479 = arith.constant 0 : index
    %c6_480 = arith.constant 6 : index
    %c0_481 = arith.constant 0 : index
    %274 = vector.load %arg2[%c0_477, %c0_478, %c0_479, %c6_480, %c0_481] : memref<1x4x1x8x256xf32, #tpu.memory_space<vmem>>, vector<1x4x1x1x224xf32>
    %275 = vector.shape_cast %274 : vector<1x4x1x1x224xf32> to vector<4x224xf32>
    %c24_482 = arith.constant 24 : index
    %c0_483 = arith.constant 0 : index
    %276 = vector.load %arg7[%c24_482, %c0_483] : memref<72x224xf32, #tpu.memory_space<vmem>>, vector<4x224xf32>
    tpu.vector_store %arg7[%c24_482, %c0_483], %275 {strides = array<i32>} : memref<72x224xf32, #tpu.memory_space<vmem>>, vector<4x224xf32>,
    %c0_484 = arith.constant 0 : index
    %c0_485 = arith.constant 0 : index
    %c0_486 = arith.constant 0 : index
    %c6_487 = arith.constant 6 : index
    %c16_488 = arith.constant 16 : index
    %277 = vector.load %arg2[%c0_484, %c0_485, %c0_486, %c6_487, %c16_488] : memref<1x4x1x8x256xf32, #tpu.memory_space<vmem>>, vector<1x4x1x1x224xf32>
    %278 = vector.shape_cast %277 : vector<1x4x1x1x224xf32> to vector<4x224xf32>
    %c32_489 = arith.constant 32 : index
    %c0_490 = arith.constant 0 : index
    %279 = vector.load %arg7[%c32_489, %c0_490] : memref<72x224xf32, #tpu.memory_space<vmem>>, vector<4x224xf32>
    tpu.vector_store %arg7[%c32_489, %c0_490], %278 {strides = array<i32>} : memref<72x224xf32, #tpu.memory_space<vmem>>, vector<4x224xf32>,
    %c0_491 = arith.constant 0 : index
    %c0_492 = arith.constant 0 : index
    %c0_493 = arith.constant 0 : index
    %c6_494 = arith.constant 6 : index
    %c32_495 = arith.constant 32 : index
    %280 = vector.load %arg2[%c0_491, %c0_492, %c0_493, %c6_494, %c32_495] : memref<1x4x1x8x256xf32, #tpu.memory_space<vmem>>, vector<1x4x1x1x224xf32>
    %281 = vector.shape_cast %280 : vector<1x4x1x1x224xf32> to vector<4x224xf32>
    %c40_496 = arith.constant 40 : index
    %c0_497 = arith.constant 0 : index
    %282 = vector.load %arg7[%c40_496, %c0_497] : memref<72x224xf32, #tpu.memory_space<vmem>>, vector<4x224xf32>
    tpu.vector_store %arg7[%c40_496, %c0_497], %281 {strides = array<i32>} : memref<72x224xf32, #tpu.memory_space<vmem>>, vector<4x224xf32>,
    %c0_498 = arith.constant 0 : index
    %c0_499 = arith.constant 0 : index
    %c0_500 = arith.constant 0 : index
    %c7 = arith.constant 7 : index
    %c0_501 = arith.constant 0 : index
    %283 = vector.load %arg2[%c0_498, %c0_499, %c0_500, %c7, %c0_501] : memref<1x4x1x8x256xf32, #tpu.memory_space<vmem>>, vector<1x4x1x1x224xf32>
    %284 = vector.shape_cast %283 : vector<1x4x1x1x224xf32> to vector<4x224xf32>
    %c48_502 = arith.constant 48 : index
    %c0_503 = arith.constant 0 : index
    %285 = vector.load %arg7[%c48_502, %c0_503] : memref<72x224xf32, #tpu.memory_space<vmem>>, vector<4x224xf32>
    tpu.vector_store %arg7[%c48_502, %c0_503], %284 {strides = array<i32>} : memref<72x224xf32, #tpu.memory_space<vmem>>, vector<4x224xf32>,
    %c0_504 = arith.constant 0 : index
    %c0_505 = arith.constant 0 : index
    %c0_506 = arith.constant 0 : index
    %c7_507 = arith.constant 7 : index
    %c16_508 = arith.constant 16 : index
    %286 = vector.load %arg2[%c0_504, %c0_505, %c0_506, %c7_507, %c16_508] : memref<1x4x1x8x256xf32, #tpu.memory_space<vmem>>, vector<1x4x1x1x224xf32>
    %287 = vector.shape_cast %286 : vector<1x4x1x1x224xf32> to vector<4x224xf32>
    %c56_509 = arith.constant 56 : index
    %c0_510 = arith.constant 0 : index
    %288 = vector.load %arg7[%c56_509, %c0_510] : memref<72x224xf32, #tpu.memory_space<vmem>>, vector<4x224xf32>
    tpu.vector_store %arg7[%c56_509, %c0_510], %287 {strides = array<i32>} : memref<72x224xf32, #tpu.memory_space<vmem>>, vector<4x224xf32>,
    %c0_511 = arith.constant 0 : index
    %c0_512 = arith.constant 0 : index
    %c0_513 = arith.constant 0 : index
    %c7_514 = arith.constant 7 : index
    %c32_515 = arith.constant 32 : index
    %289 = vector.load %arg2[%c0_511, %c0_512, %c0_513, %c7_514, %c32_515] : memref<1x4x1x8x256xf32, #tpu.memory_space<vmem>>, vector<1x4x1x1x224xf32>
    %290 = vector.shape_cast %289 : vector<1x4x1x1x224xf32> to vector<4x224xf32>
    %c64_516 = arith.constant 64 : index
    %c0_517 = arith.constant 0 : index
    %291 = vector.load %arg7[%c64_516, %c0_517] : memref<72x224xf32, #tpu.memory_space<vmem>>, vector<4x224xf32>
    tpu.vector_store %arg7[%c64_516, %c0_517], %290 {strides = array<i32>} : memref<72x224xf32, #tpu.memory_space<vmem>>, vector<4x224xf32>,
    %c0_518 = arith.constant 0 : index
    %c0_519 = arith.constant 0 : index
    %292 = vector.load %arg7[%c0_518, %c0_519] : memref<72x224xf32, #tpu.memory_space<vmem>>, vector<72x224xf32>
    %cst_520 = arith.constant dense<0.000000e+00> : vector<8x224xf32>
    %293 = tpu.matmul %4, %292, %cst_520 {dimension_numbers = #tpu.dot_dimension_numbers<[1], [0], [0], [1], [0, 0, 1, 1], [], []>} : vector<8x72xf32>, vector<72x224xf32>, vector<8x224xf32> -> vector<8x224xf32>
    %c0_521 = arith.constant 0 : index
    %c0_522 = arith.constant 0 : index
    %294 = vector.load %arg8[%c0_521, %c0_522] : memref<8x226xf32, #tpu.memory_space<vmem>>, vector<8x224xf32>
    tpu.vector_store %arg8[%c0_521, %c0_522], %293 {strides = array<i32>} : memref<8x226xf32, #tpu.memory_space<vmem>>, vector<8x224xf32>,
    %cst_523 = arith.constant 0.000000e+00 : f32
    %295 = vector.broadcast %cst_523 : f32 to vector<8x224xf32>
    %c0_524 = arith.constant 0 : index
    %c0_525 = arith.constant 0 : index
    %c0_526 = arith.constant 0 : index
    %296 = vector.load %arg4[%c0_524, %c0_525, %c0_526] : memref<3x8x8xf32, #tpu.memory_space<vmem>>, vector<1x8x8xf32>
    %297 = vector.shape_cast %296 : vector<1x8x8xf32> to vector<8x8xf32>
    %c0_527 = arith.constant 0 : index
    %c0_528 = arith.constant 0 : index
    %298 = vector.load %arg8[%c0_527, %c0_528] : memref<8x226xf32, #tpu.memory_space<vmem>>, vector<8x224xf32>
    %cst_529 = arith.constant dense<0.000000e+00> : vector<8x224xf32>
    %299 = tpu.matmul %297, %298, %cst_529 {dimension_numbers = #tpu.dot_dimension_numbers<[1], [0], [0], [1], [0, 0, 1, 1], [], []>} : vector<8x8xf32>, vector<8x224xf32>, vector<8x224xf32> -> vector<8x224xf32>
    %300 = arith.addf %295, %299 : vector<8x224xf32>
    %c1_530 = arith.constant 1 : index
    %c0_531 = arith.constant 0 : index
    %c0_532 = arith.constant 0 : index
    %301 = vector.load %arg4[%c1_530, %c0_531, %c0_532] : memref<3x8x8xf32, #tpu.memory_space<vmem>>, vector<1x8x8xf32>
    %302 = vector.shape_cast %301 : vector<1x8x8xf32> to vector<8x8xf32>
    %c0_533 = arith.constant 0 : index
    %c1_534 = arith.constant 1 : index
    %303 = vector.load %arg8[%c0_533, %c1_534] : memref<8x226xf32, #tpu.memory_space<vmem>>, vector<8x224xf32>
    %cst_535 = arith.constant dense<0.000000e+00> : vector<8x224xf32>
    %304 = tpu.matmul %302, %303, %cst_535 {dimension_numbers = #tpu.dot_dimension_numbers<[1], [0], [0], [1], [0, 0, 1, 1], [], []>} : vector<8x8xf32>, vector<8x224xf32>, vector<8x224xf32> -> vector<8x224xf32>
    %305 = arith.addf %300, %304 : vector<8x224xf32>
    %c2_536 = arith.constant 2 : index
    %c0_537 = arith.constant 0 : index
    %c0_538 = arith.constant 0 : index
    %306 = vector.load %arg4[%c2_536, %c0_537, %c0_538] : memref<3x8x8xf32, #tpu.memory_space<vmem>>, vector<1x8x8xf32>
    %307 = vector.shape_cast %306 : vector<1x8x8xf32> to vector<8x8xf32>
    %c0_539 = arith.constant 0 : index
    %c2_540 = arith.constant 2 : index
    %308 = vector.load %arg8[%c0_539, %c2_540] : memref<8x226xf32, #tpu.memory_space<vmem>>, vector<8x224xf32>
    %cst_541 = arith.constant dense<0.000000e+00> : vector<8x224xf32>
    %309 = tpu.matmul %307, %308, %cst_541 {dimension_numbers = #tpu.dot_dimension_numbers<[1], [0], [0], [1], [0, 0, 1, 1], [], []>} : vector<8x8xf32>, vector<8x224xf32>, vector<8x224xf32> -> vector<8x224xf32>
    %310 = arith.addf %305, %309 : vector<8x224xf32>
    %c0_542 = arith.constant 0 : index
    %c0_543 = arith.constant 0 : index
    %311 = vector.load %arg5[%c0_542, %c0_543] : memref<8x1xf32, #tpu.memory_space<vmem>>, vector<8x1xf32>
    %312 = vector.broadcast %311 : vector<8x1xf32> to vector<8x224xf32>
    %313 = arith.addf %310, %312 : vector<8x224xf32>
    %c0_544 = arith.constant 0 : index
    %c5_545 = arith.constant 5 : index
    %c0_546 = arith.constant 0 : index
    %c0_547 = arith.constant 0 : index
    %314 = vector.load %arg6[%c0_544, %c5_545, %c0_546, %c0_547] : memref<1x6x8x224xf32, #tpu.memory_space<vmem>>, vector<1x1x8x224xf32>
    %315 = vector.shape_cast %314 : vector<1x1x8x224xf32> to vector<8x224xf32>
    %316 = vector.shape_cast %313 : vector<8x224xf32> to vector<1x1x8x224xf32>
    tpu.vector_store %arg6[%c0_544, %c5_545, %c0_546, %c0_547], %316 {strides = array<i32>} : memref<1x6x8x224xf32, #tpu.memory_space<vmem>>, vector<1x1x8x224xf32>,
    return
  }
  func.func @transform_0(%arg0: i32, %arg1: i32) -> (i32, i32, i32, i32, i32) {
    %c0_i32 = arith.constant 0 : i32
    %c0_i32_0 = arith.constant 0 : i32
    %c0_i32_1 = arith.constant 0 : i32
    %c0_i32_2 = arith.constant 0 : i32
    return %arg0, %c0_i32, %arg1, %c0_i32_0, %c0_i32_1 : i32, i32, i32, i32, i32
  }
  func.func @transform_1(%arg0: i32, %arg1: i32) -> (i32, i32) {
    %c0_i32 = arith.constant 0 : i32
    %c0_i32_0 = arith.constant 0 : i32
    %c0_i32_1 = arith.constant 0 : i32
    return %c0_i32, %c0_i32_0 : i32, i32
  }
  func.func @transform_2(%arg0: i32, %arg1: i32) -> (i32, i32, i32) {
    %c0_i32 = arith.constant 0 : i32
    %c0_i32_0 = arith.constant 0 : i32
    %c0_i32_1 = arith.constant 0 : i32
    %c0_i32_2 = arith.constant 0 : i32
    return %c0_i32, %c0_i32_0, %c0_i32_1 : i32, i32, i32
  }
  func.func @transform_3(%arg0: i32, %arg1: i32) -> (i32, i32) {
    %c0_i32 = arith.constant 0 : i32
    %c0_i32_0 = arith.constant 0 : i32
    %c0_i32_1 = arith.constant 0 : i32
    return %c0_i32, %c0_i32_0 : i32, i32
  }
  func.func @transform_4(%arg0: i32, %arg1: i32) -> (i32, i32, i32, i32) {
    %c0_i32 = arith.constant 0 : i32
    %c0_i32_0 = arith.constant 0 : i32
    %c0_i32_1 = arith.constant 0 : i32
    return %arg0, %arg1, %c0_i32, %c0_i32_0 : i32, i32, i32, i32
  }
}

</mosaic_0001>

<llo_original>
// kernel: conv2plus1d.1
$region0: #{conv2plus1d.1}
  #allocation0 [shape = 'u32[]', space=smem, size = 0x4, offset = 0x4, fixed_abs, tag = 'smem constant byte address 0x4 - core index']
  #allocation1 [shape = 'u32[72,128]{1,0:T(1,128)}', space=vmem, size = 0x9000, scoped, tag = 'internal scratch']
  #allocation2 [shape = 'f32[72,224]{1,0:T(8,128)}', space=vmem, size = 0x12000, scoped, tag = 'scratch operand']
  #allocation3 [shape = 'f32[8,226]{1,0:T(8,128)}', space=vmem, size = 0x2000, scoped, tag = 'scratch operand']
  %s0 = inlined_call_operand.vmem [shape: f32[2,4,1,8,256], index: 0, kind: input, shape index: {}]
  %s1 = inlined_call_operand.vmem [shape: f32[8,72], index: 1, kind: input, shape index: {}]
  %s2 = inlined_call_operand.vmem [shape: f32[3,8,8], index: 2, kind: input, shape index: {}]
  %s3 = inlined_call_operand.vmem [shape: f32[8,1], index: 3, kind: input, shape index: {}]
  %s4 = inlined_call_operand.vmem [shape: f32[2,6,8,224], index: 4, kind: output, shape index: {}]
  %s5 = sld [smem:[#allocation0]]
  $region49: #{conv2plus1d.1} parent=0
    _
  %s7 = ssub.s32 1, %s5
  %s8 = scalar_select 0, %s7, %s5
  loop: start=0, step=1, limit=4
  $region2: #{conv2plus1d.1} parent=0 // loop_pre_header
    _
  $region3: #{conv2plus1d.1} parent=0 // loop_header
    %s10 = sphi 0, %s14
    %p11 = scmp.ge.s32.totalorder %s10, 4
    %s17 = sphi 0, %s29
    %s18 = sphi 0, %s25
    %s19 = sphi 0, %s17
    %s20 = sphi 0, %s18
    %s21 = sphi 0, %s19
    %s22 = sphi 0, %s20
    %s34 = sphi 0, %s36
    %s37 = sphi 0, %s34
    %s38 = sphi 0, %s37
    %s54 = sphi 0, %s38
    %s58 = sphi 0, %s58
    %s60 = sphi 0, %s58
    %s61 = sphi 0, %s60
    %s75 = sphi 0, %s61
    %s79 = sphi 0, %s79
    %s81 = sphi 0, %s79
    %s82 = sphi 0, %s81
    %s96 = sphi 0, %s82
    %s100 = sphi 0, %s100
    %s102 = sphi 0, %s100
    %s103 = sphi 0, %s102
    %s117 = sphi 0, %s103
    %s125 = sphi 0, %s127
    %s128 = sphi 0, %s125
    %s129 = sphi 0, %s128
    %s145 = sphi 0, %s129
  $region4: #{conv2plus1d.1} parent=0 // loop_header_branch
    %13 = sbr.rel (%p11) target = $region8
  $region5: #{conv2plus1d.1} parent=0 // loop_body
    %s15 = ssub.s32 %s10, 1
    %s16 = ssub.s32 %s10, 2
    %s23 = sadd.s32 1, %s18
    %p24 = scmp.ge.s32.totalorder %s23, 1
    %s25 = scalar_select %p24, 0, %s23
    %s26 = sadd.s32 1, %s17
    %s27 = scalar_select %p24, %s26, %s17
    %p28 = scmp.ge.s32.totalorder %s27, 2
    %s29 = scalar_select %p28, 0, %s27
    %s30 = ssub.s32 %s17, %s29
    %s31 = ssub.s32 %s18, %s25
    %s32 = sor.u32 %s30, %s31
    %p33 = scmp.eq.s32.totalorder %s32, 0
    %s35 = sadd.s32 %s34, 1
    %s36 = scalar_select %p33, %s34, %s35
    %p39 = pneg %p33
    %p40 = scmp.eq.s32.totalorder %s10, 1
    %p41 = por %p39, %p40
    %p42 = scmp.ne.s32.totalorder %s34, %s37
    %p43 = scmp.eq.s32.totalorder %s10, 0
    %p44 = por %p42, %p43
    %p45 = scmp.ne.s32.totalorder %s34, %s37
    %p46 = scmp.eq.s32.totalorder %s15, 1
    %p47 = por %p45, %p46
    %p48 = scmp.ne.s32.totalorder %s37, %s38
    %p49 = scmp.eq.s32.totalorder %s15, 0
    %p50 = por %p48, %p49
    %p51 = scmp.ne.s32.totalorder %s37, %s38
    %p52 = scmp.eq.s32.totalorder %s16, 1
    %p53 = por %p51, %p52
    %p55 = scmp.ne.s32.totalorder %s38, %s54
    %p56 = scmp.eq.s32.totalorder %s16, 0
    %p57 = por %p55, %p56
    %s59 = sadd.s32 %s58, 1
    %p62 = scmp.eq.s32.totalorder %s10, 1
    %p63 = scmp.ne.s32.totalorder %s58, %s60
    %p64 = scmp.eq.s32.totalorder %s10, 0
    %p65 = por %p63, %p64
    %p66 = scmp.ne.s32.totalorder %s58, %s60
    %p67 = scmp.eq.s32.totalorder %s15, 1
    %p68 = por %p66, %p67
    %p69 = scmp.ne.s32.totalorder %s60, %s61
    %p70 = scmp.eq.s32.totalorder %s15, 0
    %p71 = por %p69, %p70
    %p72 = scmp.ne.s32.totalorder %s60, %s61
    %p73 = scmp.eq.s32.totalorder %s16, 1
    %p74 = por %p72, %p73
    %p76 = scmp.ne.s32.totalorder %s61, %s75
    %p77 = scmp.eq.s32.totalorder %s16, 0
    %p78 = por %p76, %p77
    %s80 = sadd.s32 %s79, 1
    %p83 = scmp.eq.s32.totalorder %s10, 1
    %p84 = scmp.ne.s32.totalorder %s79, %s81
    %p85 = scmp.eq.s32.totalorder %s10, 0
    %p86 = por %p84, %p85
    %p87 = scmp.ne.s32.totalorder %s79, %s81
    %p88 = scmp.eq.s32.totalorder %s15, 1
    %p89 = por %p87, %p88
    %p90 = scmp.ne.s32.totalorder %s81, %s82
    %p91 = scmp.eq.s32.totalorder %s15, 0
    %p92 = por %p90, %p91
    %p93 = scmp.ne.s32.totalorder %s81, %s82
    %p94 = scmp.eq.s32.totalorder %s16, 1
    %p95 = por %p93, %p94
    %p97 = scmp.ne.s32.totalorder %s82, %s96
    %p98 = scmp.eq.s32.totalorder %s16, 0
    %p99 = por %p97, %p98
    %s101 = sadd.s32 %s100, 1
    %p104 = scmp.eq.s32.totalorder %s10, 1
    %p105 = scmp.ne.s32.totalorder %s100, %s102
    %p106 = scmp.eq.s32.totalorder %s10, 0
    %p107 = por %p105, %p106
    %p108 = scmp.ne.s32.totalorder %s100, %s102
    %p109 = scmp.eq.s32.totalorder %s15, 1
    %p110 = por %p108, %p109
    %p111 = scmp.ne.s32.totalorder %s102, %s103
    %p112 = scmp.eq.s32.totalorder %s15, 0
    %p113 = por %p111, %p112
    %p114 = scmp.ne.s32.totalorder %s102, %s103
    %p115 = scmp.eq.s32.totalorder %s16, 1
    %p116 = por %p114, %p115
    %p118 = scmp.ne.s32.totalorder %s103, %s117
    %p119 = scmp.eq.s32.totalorder %s16, 0
    %p120 = por %p118, %p119
    %s121 = ssub.s32 %s17, %s29
    %s122 = ssub.s32 %s18, %s25
    %s123 = sor.u32 %s121, %s122
    %p124 = scmp.eq.s32.totalorder %s123, 0
    %s126 = sadd.s32 %s125, 1
    %s127 = scalar_select %p124, %s125, %s126
    %p130 = pneg %p124
    %p131 = scmp.eq.s32.totalorder %s10, 1
    %p132 = por %p130, %p131
    %p133 = scmp.ne.s32.totalorder %s125, %s128
    %p134 = scmp.eq.s32.totalorder %s10, 0
    %p135 = por %p133, %p134
    %p136 = scmp.ne.s32.totalorder %s125, %s128
    %p137 = scmp.eq.s32.totalorder %s15, 1
    %p138 = por %p136, %p137
    %p139 = scmp.ne.s32.totalorder %s128, %s129
    %p140 = scmp.eq.s32.totalorder %s15, 0
    %p141 = por %p139, %p140
    %p142 = scmp.ne.s32.totalorder %s128, %s129
    %p143 = scmp.eq.s32.totalorder %s16, 1
    %p144 = por %p142, %p143
    %p146 = scmp.ne.s32.totalorder %s129, %s145
    %p147 = scmp.eq.s32.totalorder %s16, 0
    %p148 = por %p146, %p147
    %p149 = scmp.le.s32.totalorder 1, %s10
    %p150 = scmp.lt.s32.totalorder %s10, 3
    %p151 = pnand %p149, %p150
    %p152 = pneg %p151
    // Predicated region
    $region9: #{conv2plus1d.1} parent=5 // pred_check
      _
    $region10: #{conv2plus1d.1} parent=5 // pred_check_branch
      %154 = sbr.rel (%p151) target = $region12
    $region11: #{conv2plus1d.1} parent=5 // pred_region
      %s155 = ssub.s32 %s10, 1
      // Predicated region
      $region13: #{conv2plus1d.1} parent=11 // pred_check
        %p156 = pneg %p71
      $region14: #{conv2plus1d.1} parent=11 // pred_check_branch
        %158 = sbr.rel (%p156) target = $region16
      $region15: #{conv2plus1d.1} parent=11 // pred_region
        _
      $region16: #{conv2plus1d.1} parent=11 // pred_fallthru
        _
      // Predicated region
      $region17: #{conv2plus1d.1} parent=11 // pred_check
        %p159 = pneg %p92
      $region18: #{conv2plus1d.1} parent=11 // pred_check_branch
        %161 = sbr.rel (%p159) target = $region20
      $region19: #{conv2plus1d.1} parent=11 // pred_region
        _
      $region20: #{conv2plus1d.1} parent=11 // pred_fallthru
        _
      // Predicated region
      $region21: #{conv2plus1d.1} parent=11 // pred_check
        %p162 = pneg %p113
      $region22: #{conv2plus1d.1} parent=11 // pred_check_branch
        %164 = sbr.rel (%p162) target = $region24
      $region23: #{conv2plus1d.1} parent=11 // pred_region
        _
      $region24: #{conv2plus1d.1} parent=11 // pred_fallthru
        _
    $region12: #{conv2plus1d.1} parent=5 // pred_fallthru
      _
    %p165 = scmp.lt.s32.totalorder %s10, 2
    // Predicated region
    $region25: #{conv2plus1d.1} parent=5 // pred_check
      %p166 = pneg %p165
    $region26: #{conv2plus1d.1} parent=5 // pred_check_branch
      %168 = sbr.rel (%p166) target = $region28
    $region27: #{conv2plus1d.1} parent=5 // pred_region
      // Predicated region
      $region29: #{conv2plus1d.1} parent=27 // pred_check
        %p169 = pneg %p44
      $region30: #{conv2plus1d.1} parent=27 // pred_check_branch
        %171 = sbr.rel (%p169) target = $region32
      $region31: #{conv2plus1d.1} parent=27 // pred_region
        %p172 = scmp.lt.s32.totalorder %s17, 1
        %s173 = scalar_select %p172, %s17, 1
        %p174 = scmp.lt.s32.totalorder %s18, 0
        %s175 = scalar_select %p174, %s18, 0
        %s176 = smul.addr %s175, 2
        %s177 = smul.addr %s173, 8
        %s178 = sadd.s32 %s176, %s177
        %s179 = smul.addr %s178, 8
        %s180 = scalar_lea.vmem %s0, %s179
      $region32: #{conv2plus1d.1} parent=27 // pred_fallthru
        _
    $region28: #{conv2plus1d.1} parent=5 // pred_fallthru
      _
    %p181 = scmp.le.s32.totalorder 1, %s10
    %p182 = scmp.lt.s32.totalorder %s10, 3
    %p183 = pnand %p181, %p182
    %p184 = pneg %p183
    // Predicated region
    $region33: #{conv2plus1d.1} parent=5 // pred_check
      _
    $region34: #{conv2plus1d.1} parent=5 // pred_check_branch
      %186 = sbr.rel (%p183) target = $region36
    $region35: #{conv2plus1d.1} parent=5 // pred_region
      %s187 = ssub.s32 %s10, 1
      %p188 = scmp.lt.s32.totalorder %s19, 1
      %s189 = scalar_select %p188, %s19, 1
      %p190 = scmp.lt.s32.totalorder %s20, 0
      %s191 = scalar_select %p190, %s20, 0
      %s192 = smul.addr %s191, 2
      %s193 = smul.addr %s189, 8
      %s194 = sadd.s32 %s192, %s193
      %s195 = smul.addr %s194, 8
      %s196 = scalar_lea.vmem %s0, %s195
      %p197 = pneg %p50
      %p198 = pneg %p47
      %p199 = pneg %p71
      %p200 = pneg %p68
      %p201 = pneg %p92
      %p202 = pneg %p89
      %p203 = pneg %p113
      %p204 = pneg %p110
      %p205 = pneg %p141
      %p206 = pneg %p138
      %s207 = smul.u32 6, %s20
      %p208 = scmp.lt.s32.totalorder %s19, 1
      %s209 = scalar_select %p208, %s19, 1
      %p210 = scmp.lt.s32.totalorder %s207, 5
      %s211 = scalar_select %p210, %s207, 5
      %s212 = smul.addr %s211, 2
      %s213 = smul.addr %s209, 12
      %s214 = sadd.s32 %s212, %s213
      %s215 = smul.addr %s214, 8
      %s216 = scalar_lea.vmem %s4, %s215
      %p217 = scmp.lt.s32.totalorder %s19, 1
      %s218 = scalar_select %p217, %s19, 1
      %p219 = scmp.lt.s32.totalorder %s20, 0
      %s220 = scalar_select %p219, %s20, 0
      %s221 = smul.addr %s220, 2
      %s222 = smul.addr %s218, 8
      %s223 = sadd.s32 %s221, %s222
      %s224 = smul.addr %s223, 8
      %s225 = scalar_lea.vmem %s0, %s224
      %s226 = smul.u32 6, %s20
      %p227 = scmp.lt.s32.totalorder %s19, 1
      %s228 = scalar_select %p227, %s19, 1
      %p229 = scmp.lt.s32.totalorder %s226, 5
      %s230 = scalar_select %p229, %s226, 5
      %s231 = smul.addr %s230, 2
      %s232 = smul.addr %s228, 12
      %s233 = sadd.s32 %s231, %s232
      %s234 = smul.addr %s233, 8
      %s235 = scalar_lea.vmem %s4, %s234
      %s236 = smul.u32 6, %s20
      %237 = vst [vmem:[#allocation2] sm:$0xff] 0.0
      %vm238 = vcmask 785408
      %239 = vst.msk [vmem:[#allocation2 + $0x8] sm:$0xff] %vm238, 0.0
      %240 = vst [vmem:[#allocation2 + $0x10] sm:$0xff] 0.0
      %241 = vst.msk [vmem:[#allocation2 + $0x18] sm:$0xff] %vm238, 0.0
      %242 = vst [vmem:[#allocation2 + $0x20] sm:$0xff] 0.0
      %243 = vst.msk [vmem:[#allocation2 + $0x28] sm:$0xff] %vm238, 0.0
      %244 = vst [vmem:[#allocation2 + $0x30] sm:$0xff] 0.0
      %245 = vst.msk [vmem:[#allocation2 + $0x38] sm:$0xff] %vm238, 0.0
      %246 = vst [vmem:[#allocation2 + $0x40] sm:$0xff] 0.0
      %247 = vst.msk [vmem:[#allocation2 + $0x48] sm:$0xff] %vm238, 0.0
      %248 = vst [vmem:[#allocation2 + $0x50] sm:$0xff] 0.0
      %249 = vst.msk [vmem:[#allocation2 + $0x58] sm:$0xff] %vm238, 0.0
      %250 = vst [vmem:[#allocation2 + $0x60] sm:$0xff] 0.0
      %251 = vst.msk [vmem:[#allocation2 + $0x68] sm:$0xff] %vm238, 0.0
      %252 = vst [vmem:[#allocation2 + $0x70] sm:$0xff] 0.0
      %253 = vst.msk [vmem:[#allocation2 + $0x78] sm:$0xff] %vm238, 0.0
      %254 = vst [vmem:[#allocation2 + $0x80] sm:$0xff] 0.0
      %255 = vst.msk [vmem:[#allocation2 + $0x88] sm:$0xff] %vm238, 0.0
      %vm256 = vcmask 802560
      %257 = vst.msk [vmem:[#allocation3 + $0x8] sm:$0xff] %vm256, 0.0
      %v258 = vld [vmem:[%s1] sm:$0xff]
      %v259 = vld [vmem:[%s225] ss:$8 sm:$0x3]
      %s260 = scalar_lea.vmem %s225, 16
      %v261 = vld [vmem:[%s260] ss:$8 sm:$0x3]
      %s262 = scalar_lea.vmem %s225, 32
      %v263 = vld [vmem:[%s262] ss:$8 sm:$0x3]
      %s264 = scalar_lea.vmem %s225, 48
      %v265 = vld [vmem:[%s264] ss:$8 sm:$0x3]
      %270 = vst [vmem:[#allocation1] ss:$9 sm:$0xff] %v259
      %s271 = scalar_lea.vmem [#allocation1], 1
      %272 = vst [vmem:[%s271] ss:$9 sm:$0xff] %v261
      %s273 = scalar_lea.vmem [#allocation1], 2
      %274 = vst [vmem:[%s273] ss:$9 sm:$0xff] %v263
      %s275 = scalar_lea.vmem [#allocation1], 3
      %276 = vst [vmem:[%s275] ss:$9 sm:$0xff] %v265
      %v277 = vld [vmem:[#allocation1] sm:$0xff]
      %v278 = vld [vmem:[#allocation1 + $0x9] sm:$0xff]
      %281 = vst [vmem:[#allocation2] sm:$0xf] %v277
      %vm282 = vcmask 781312
      %283 = vst.msk [vmem:[#allocation2 + $0x8] sm:$0xf] %vm282, %v278
      %v284 = vld [vmem:[%s225] ss:$8 sm:$0x3]
      %v285 = vld [vmem:[%s260] ss:$8 sm:$0x3]
      %v286 = vld [vmem:[%s262] ss:$8 sm:$0x3]
      %v287 = vld [vmem:[%s264] ss:$8 sm:$0x3]
      %292 = vst [vmem:[#allocation1] ss:$9 sm:$0xff] %v284
      %s293 = scalar_lea.vmem [#allocation1], 1
      %294 = vst [vmem:[%s293] ss:$9 sm:$0xff] %v285
      %s295 = scalar_lea.vmem [#allocation1], 2
      %296 = vst [vmem:[%s295] ss:$9 sm:$0xff] %v286
      %s297 = scalar_lea.vmem [#allocation1], 3
      %298 = vst [vmem:[%s297] ss:$9 sm:$0xff] %v287
      %v299 = vld [vmem:[#allocation1] sm:$0xff]
      %v300 = vld [vmem:[#allocation1 + $0x9] sm:$0xff]
      %301 = vrot.lane.b32.xlu0 %v299, 112
      %v302 = vpop.permute.xlu0 %301
      %303 = vrot.lane.b32.xlu0 %v300, 112
      %v304 = vpop.permute.xlu0 %303
      %vm305 = vcmask 916480
      %v306 = vsel %vm305, %v302, %v304
      %309 = vst [vmem:[#allocation2 + $0x10] sm:$0xf] %v306
      %310 = vst.msk [vmem:[#allocation2 + $0x18] sm:$0xf] %vm282, %v304
      %v311 = vld [vmem:[%s225] ss:$8 sm:$0x3]
      %v312 = vld [vmem:[%s260] ss:$8 sm:$0x3]
      %v313 = vld [vmem:[%s262] ss:$8 sm:$0x3]
      %v314 = vld [vmem:[%s264] ss:$8 sm:$0x3]
      %319 = vst [vmem:[#allocation1] ss:$9 sm:$0xff] %v311
      %s320 = scalar_lea.vmem [#allocation1], 1
      %321 = vst [vmem:[%s320] ss:$9 sm:$0xff] %v312
      %s322 = scalar_lea.vmem [#allocation1], 2
      %323 = vst [vmem:[%s322] ss:$9 sm:$0xff] %v313
      %s324 = scalar_lea.vmem [#allocation1], 3
      %325 = vst [vmem:[%s324] ss:$9 sm:$0xff] %v314
      %v326 = vld [vmem:[#allocation1] sm:$0xff]
      %v327 = vld [vmem:[#allocation1 + $0x9] sm:$0xff]
      %328 = vrot.lane.b32.xlu0 %v326, 96
      %v329 = vpop.permute.xlu0 %328
      %330 = vrot.lane.b32.xlu0 %v327, 96
      %v331 = vpop.permute.xlu0 %330
      %v332 = vsel %vm238, %v329, %v331
      %335 = vst [vmem:[#allocation2 + $0x20] sm:$0xf] %v332
      %336 = vst.msk [vmem:[#allocation2 + $0x28] sm:$0xf] %vm282, %v331
      %s337 = scalar_lea.vmem %s225, 1
      %v338 = vld [vmem:[%s337] ss:$8 sm:$0x3]
      %s339 = scalar_lea.vmem %s225, 17
      %v340 = vld [vmem:[%s339] ss:$8 sm:$0x3]
      %s341 = scalar_lea.vmem %s225, 33
      %v342 = vld [vmem:[%s341] ss:$8 sm:$0x3]
      %s343 = scalar_lea.vmem %s225, 49
      %v344 = vld [vmem:[%s343] ss:$8 sm:$0x3]
      %349 = vst [vmem:[#allocation1] ss:$9 sm:$0xff] %v338
      %s350 = scalar_lea.vmem [#allocation1], 1
      %351 = vst [vmem:[%s350] ss:$9 sm:$0xff] %v340
      %s352 = scalar_lea.vmem [#allocation1], 2
      %353 = vst [vmem:[%s352] ss:$9 sm:$0xff] %v342
      %s354 = scalar_lea.vmem [#allocation1], 3
      %355 = vst [vmem:[%s354] ss:$9 sm:$0xff] %v344
      %v356 = vld [vmem:[#allocation1] sm:$0xff]
      %v357 = vld [vmem:[#allocation1 + $0x9] sm:$0xff]
      %360 = vst [vmem:[#allocation2 + $0x30] sm:$0xf] %v356
      %361 = vst.msk [vmem:[#allocation2 + $0x38] sm:$0xf] %vm282, %v357
      %v362 = vld [vmem:[%s337] ss:$8 sm:$0x3]
      %v363 = vld [vmem:[%s339] ss:$8 sm:$0x3]
      %v364 = vld [vmem:[%s341] ss:$8 sm:$0x3]
      %v365 = vld [vmem:[%s343] ss:$8 sm:$0x3]
      %370 = vst [vmem:[#allocation1] ss:$9 sm:$0xff] %v362
      %s371 = scalar_lea.vmem [#allocation1], 1
      %372 = vst [vmem:[%s371] ss:$9 sm:$0xff] %v363
      %s373 = scalar_lea.vmem [#allocation1], 2
      %374 = vst [vmem:[%s373] ss:$9 sm:$0xff] %v364
      %s375 = scalar_lea.vmem [#allocation1], 3
      %376 = vst [vmem:[%s375] ss:$9 sm:$0xff] %v365
      %v377 = vld [vmem:[#allocation1] sm:$0xff]
      %v378 = vld [vmem:[#allocation1 + $0x9] sm:$0xff]
      %379 = vrot.lane.b32.xlu0 %v377, 112
      %v380 = vpop.permute.xlu0 %379
      %381 = vrot.lane.b32.xlu0 %v378, 112
      %v382 = vpop.permute.xlu0 %381
      %v383 = vsel %vm305, %v380, %v382
      %386 = vst [vmem:[#allocation2 + $0x40] sm:$0xf] %v383
      %387 = vst.msk [vmem:[#allocation2 + $0x48] sm:$0xf] %vm282, %v382
      %v388 = vld [vmem:[%s337] ss:$8 sm:$0x3]
      %v389 = vld [vmem:[%s339] ss:$8 sm:$0x3]
      %v390 = vld [vmem:[%s341] ss:$8 sm:$0x3]
      %v391 = vld [vmem:[%s343] ss:$8 sm:$0x3]
      %396 = vst [vmem:[#allocation1] ss:$9 sm:$0xff] %v388
      %s397 = scalar_lea.vmem [#allocation1], 1
      %398 = vst [vmem:[%s397] ss:$9 sm:$0xff] %v389
      %s399 = scalar_lea.vmem [#allocation1], 2
      %400 = vst [vmem:[%s399] ss:$9 sm:$0xff] %v390
      %s401 = scalar_lea.vmem [#allocation1], 3
      %402 = vst [vmem:[%s401] ss:$9 sm:$0xff] %v391
      %v403 = vld [vmem:[#allocation1] sm:$0xff]
      %v404 = vld [vmem:[#allocation1 + $0x9] sm:$0xff]
      %405 = vrot.lane.b32.xlu0 %v403, 96
      %v406 = vpop.permute.xlu0 %405
      %407 = vrot.lane.b32.xlu0 %v404, 96
      %v408 = vpop.permute.xlu0 %407
      %v409 = vsel %vm238, %v406, %v408
      %412 = vst [vmem:[#allocation2 + $0x50] sm:$0xf] %v409
      %413 = vst.msk [vmem:[#allocation2 + $0x58] sm:$0xf] %vm282, %v408
      %s414 = scalar_lea.vmem %s225, 2
      %v415 = vld [vmem:[%s414] ss:$8 sm:$0x3]
      %s416 = scalar_lea.vmem %s225, 18
      %v417 = vld [vmem:[%s416] ss:$8 sm:$0x3]
      %s418 = scalar_lea.vmem %s225, 34
      %v419 = vld [vmem:[%s418] ss:$8 sm:$0x3]
      %s420 = scalar_lea.vmem %s225, 50
      %v421 = vld [vmem:[%s420] ss:$8 sm:$0x3]
      %426 = vst [vmem:[#allocation1] ss:$9 sm:$0xff] %v415
      %s427 = scalar_lea.vmem [#allocation1], 1
      %428 = vst [vmem:[%s427] ss:$9 sm:$0xff] %v417
      %s429 = scalar_lea.vmem [#allocation1], 2
      %430 = vst [vmem:[%s429] ss:$9 sm:$0xff] %v419
      %s431 = scalar_lea.vmem [#allocation1], 3
      %432 = vst [vmem:[%s431] ss:$9 sm:$0xff] %v421
      %v433 = vld [vmem:[#allocation1] sm:$0xff]
      %v434 = vld [vmem:[#allocation1 + $0x9] sm:$0xff]
      %437 = vst [vmem:[#allocation2 + $0x60] sm:$0xf] %v433
      %438 = vst.msk [vmem:[#allocation2 + $0x68] sm:$0xf] %vm282, %v434
      %v439 = vld [vmem:[%s414] ss:$8 sm:$0x3]
      %v440 = vld [vmem:[%s416] ss:$8 sm:$0x3]
      %v441 = vld [vmem:[%s418] ss:$8 sm:$0x3]
      %v442 = vld [vmem:[%s420] ss:$8 sm:$0x3]
      %447 = vst [vmem:[#allocation1] ss:$9 sm:$0xff] %v439
      %s448 = scalar_lea.vmem [#allocation1], 1
      %449 = vst [vmem:[%s448] ss:$9 sm:$0xff] %v440
      %s450 = scalar_lea.vmem [#allocation1], 2
      %451 = vst [vmem:[%s450] ss:$9 sm:$0xff] %v441
      %s452 = scalar_lea.vmem [#allocation1], 3
      %453 = vst [vmem:[%s452] ss:$9 sm:$0xff] %v442
      %v454 = vld [vmem:[#allocation1] sm:$0xff]
      %v455 = vld [vmem:[#allocation1 + $0x9] sm:$0xff]
      %456 = vrot.lane.b32.xlu0 %v454, 112
      %v457 = vpop.permute.xlu0 %456
      %458 = vrot.lane.b32.xlu0 %v455, 112
      %v459 = vpop.permute.xlu0 %458
      %v460 = vsel %vm305, %v457, %v459
      %463 = vst [vmem:[#allocation2 + $0x70] sm:$0xf] %v460
      %464 = vst.msk [vmem:[#allocation2 + $0x78] sm:$0xf] %vm282, %v459
      %v465 = vld [vmem:[%s414] ss:$8 sm:$0x3]
      %v466 = vld [vmem:[%s416] ss:$8 sm:$0x3]
      %v467 = vld [vmem:[%s418] ss:$8 sm:$0x3]
      %v468 = vld [vmem:[%s420] ss:$8 sm:$0x3]
      %473 = vst [vmem:[#allocation1] ss:$9 sm:$0xff] %v465
      %s474 = scalar_lea.vmem [#allocation1], 1
      %475 = vst [vmem:[%s474] ss:$9 sm:$0xff] %v466
      %s476 = scalar_lea.vmem [#allocation1], 2
      %477 = vst [vmem:[%s476] ss:$9 sm:$0xff] %v467
      %s478 = scalar_lea.vmem [#allocation1], 3
      %479 = vst [vmem:[%s478] ss:$9 sm:$0xff] %v468
      %v480 = vld [vmem:[#allocation1] sm:$0xff]
      %v481 = vld [vmem:[#allocation1 + $0x9] sm:$0xff]
      %482 = vrot.lane.b32.xlu0 %v480, 96
      %v483 = vpop.permute.xlu0 %482
      %484 = vrot.lane.b32.xlu0 %v481, 96
      %v485 = vpop.permute.xlu0 %484
      %v486 = vsel %vm238, %v483, %v485
      %489 = vst [vmem:[#allocation2 + $0x80] sm:$0xf] %v486
      %490 = vst.msk [vmem:[#allocation2 + $0x88] sm:$0xf] %vm282, %v485
      %v491 = vld [vmem:[#allocation2] sm:$0xff]
      %v492 = vld [vmem:[#allocation2 + $0x8] sm:$0xff]
      %v493 = vld [vmem:[#allocation2 + $0x10] sm:$0xff]
      %v494 = vld [vmem:[#allocation2 + $0x18] sm:$0xff]
      %v495 = vld [vmem:[#allocation2 + $0x20] sm:$0xff]
      %v496 = vld [vmem:[#allocation2 + $0x28] sm:$0xff]
      %v497 = vld [vmem:[#allocation2 + $0x30] sm:$0xff]
      %v498 = vld [vmem:[#allocation2 + $0x38] sm:$0xff]
      %v499 = vld [vmem:[#allocation2 + $0x40] sm:$0xff]
      %v500 = vld [vmem:[#allocation2 + $0x48] sm:$0xff]
      %v501 = vld [vmem:[#allocation2 + $0x50] sm:$0xff]
      %v502 = vld [vmem:[#allocation2 + $0x58] sm:$0xff]
      %v503 = vld [vmem:[#allocation2 + $0x60] sm:$0xff]
      %v504 = vld [vmem:[#allocation2 + $0x68] sm:$0xff]
      %v505 = vld [vmem:[#allocation2 + $0x70] sm:$0xff]
      %v506 = vld [vmem:[#allocation2 + $0x78] sm:$0xff]
      %v507 = vld [vmem:[#allocation2 + $0x80] sm:$0xff]
      %v508 = vld [vmem:[#allocation2 + $0x88] sm:$0xff]
      %vm509 = vcmask 588800
      %v511 = vsel %vm509, %v258, 0
      %513 = vmatpush.msra.mxu0 0.0
      %514 = vmatpush.msra.mxu0 0.0
      %515 = vmatpush.msra.mxu0 0.0
      %516 = vmatpush.msra.mxu0 0.0
      %517 = vmatpush.msra.mxu0 0.0
      %518 = vmatpush.msra.mxu0 0.0
      %519 = vmatpush.msra.mxu0 0.0
      %520 = vmatpush.msra.mxu0 %v507
      %521 = vmatpush.msra.mxu0 %v505
      %522 = vmatpush.msra.mxu0 %v503
      %523 = vmatpush.msra.mxu0 %v501
      %524 = vmatpush.msra.mxu0 %v499
      %525 = vmatpush.msra.mxu0 %v497
      %526 = vmatpush.msra.mxu0 %v495
      %527 = vmatpush.msra.mxu0 %v493
      %528 = vmatpush.msra.mxu0 %v491
      %529 = vmatmul.f32.gmra.mxu0 %v511
      %v530 = vpop.f32.mrf.mxu0
      %v531 = vadd.f32 0.0, %v530
      %532 = vdwg.mxu0
      %533 = vmatpush.msra.mxu0 0.0
      %534 = vmatpush.msra.mxu0 0.0
      %535 = vmatpush.msra.mxu0 0.0
      %536 = vmatpush.msra.mxu0 0.0
      %537 = vmatpush.msra.mxu0 0.0
      %538 = vmatpush.msra.mxu0 0.0
      %539 = vmatpush.msra.mxu0 0.0
      %540 = vmatpush.msra.mxu0 %v508
      %541 = vmatpush.msra.mxu0 %v506
      %542 = vmatpush.msra.mxu0 %v504
      %543 = vmatpush.msra.mxu0 %v502
      %544 = vmatpush.msra.mxu0 %v500
      %545 = vmatpush.msra.mxu0 %v498
      %546 = vmatpush.msra.mxu0 %v496
      %547 = vmatpush.msra.mxu0 %v494
      %548 = vmatpush.msra.mxu0 %v492
      %549 = vmatmul.f32.gmra.mxu0 %v511
      %v550 = vpop.f32.mrf.mxu0
      %v551 = vadd.f32 0.0, %v550
      %552 = vdwg.mxu0
      %553 = vst [vmem:[#allocation3] sm:$0xff] %v531
      %554 = vst.msk [vmem:[#allocation3 + $0x8] sm:$0xff] %vm238, %v551
      %v555 = vld [vmem:[%s2] sm:$0xff]
      %v556 = vld [vmem:[#allocation3] sm:$0xff]
      %v557 = vld [vmem:[#allocation3 + $0x8] sm:$0xff]
      %s558 = scalar_lea.vmem %s2, 8
      %v559 = vld [vmem:[%s558] sm:$0xff]
      %562 = vrot.lane.b32.xlu0 %v556, 127
      %v563 = vpop.permute.xlu0 %562
      %564 = vrot.lane.b32.xlu0 %v557, 127
      %v565 = vpop.permute.xlu0 %564
      %vm566 = vcmask 1039360
      %v567 = vsel %vm566, %v563, %v565
      %vm570 = vcmask 64512
      %v572 = vsel %vm570, %v559, 0
      %574 = vmatpush.msra.mxu0 0.0
      %575 = vmatpush.msra.mxu0 0.0
      %576 = vmatpush.msra.mxu0 0.0
      %577 = vmatpush.msra.mxu0 0.0
      %578 = vmatpush.msra.mxu0 0.0
      %579 = vmatpush.msra.mxu0 0.0
      %580 = vmatpush.msra.mxu0 0.0
      %581 = vmatpush.msra.mxu0 0.0
      %582 = vmatpush.msra.mxu0 0.0
      %583 = vmatpush.msra.mxu0 0.0
      %584 = vmatpush.msra.mxu0 0.0
      %585 = vmatpush.msra.mxu0 0.0
      %586 = vmatpush.msra.mxu0 0.0
      %587 = vmatpush.msra.mxu0 0.0
      %588 = vmatpush.msra.mxu0 0.0
      %589 = vmatpush.msra.mxu0 %v567
      %590 = vmatmul.f32.gmra.mxu0 %v572
      %v591 = vpop.f32.mrf.mxu0
      %v592 = vadd.f32 0.0, %v591
      %593 = vdwg.mxu0
      %594 = vmatpush.msra.mxu0 0.0
      %595 = vmatpush.msra.mxu0 0.0
      %596 = vmatpush.msra.mxu0 0.0
      %597 = vmatpush.msra.mxu0 0.0
      %598 = vmatpush.msra.mxu0 0.0
      %599 = vmatpush.msra.mxu0 0.0
      %600 = vmatpush.msra.mxu0 0.0
      %601 = vmatpush.msra.mxu0 0.0
      %602 = vmatpush.msra.mxu0 0.0
      %603 = vmatpush.msra.mxu0 0.0
      %604 = vmatpush.msra.mxu0 0.0
      %605 = vmatpush.msra.mxu0 0.0
      %606 = vmatpush.msra.mxu0 0.0
      %607 = vmatpush.msra.mxu0 0.0
      %608 = vmatpush.msra.mxu0 0.0
      %609 = vmatpush.msra.mxu0 %v565
      %610 = vmatmul.f32.gmra.mxu0 %v572
      %v611 = vpop.f32.mrf.mxu0
      %v612 = vadd.f32 0.0, %v611
      %613 = vdwg.mxu0
      %v615 = vsel %vm570, %v555, 0
      %617 = vmatpush.msra.mxu0 0.0
      %618 = vmatpush.msra.mxu0 0.0
      %619 = vmatpush.msra.mxu0 0.0
      %620 = vmatpush.msra.mxu0 0.0
      %621 = vmatpush.msra.mxu0 0.0
      %622 = vmatpush.msra.mxu0 0.0
      %623 = vmatpush.msra.mxu0 0.0
      %624 = vmatpush.msra.mxu0 0.0
      %625 = vmatpush.msra.mxu0 0.0
      %626 = vmatpush.msra.mxu0 0.0
      %627 = vmatpush.msra.mxu0 0.0
      %628 = vmatpush.msra.mxu0 0.0
      %629 = vmatpush.msra.mxu0 0.0
      %630 = vmatpush.msra.mxu0 0.0
      %631 = vmatpush.msra.mxu0 0.0
      %632 = vmatpush.msra.mxu0 %v556
      %633 = vmatmul.f32.gmra.mxu0 %v615
      %v634 = vpop.f32.mrf.mxu0
      %v635 = vadd.f32 %v592, %v634
      %636 = vdwg.mxu0
      %637 = vmatpush.msra.mxu0 0.0
      %638 = vmatpush.msra.mxu0 0.0
      %639 = vmatpush.msra.mxu0 0.0
      %640 = vmatpush.msra.mxu0 0.0
      %641 = vmatpush.msra.mxu0 0.0
      %642 = vmatpush.msra.mxu0 0.0
      %643 = vmatpush.msra.mxu0 0.0
      %644 = vmatpush.msra.mxu0 0.0
      %645 = vmatpush.msra.mxu0 0.0
      %646 = vmatpush.msra.mxu0 0.0
      %647 = vmatpush.msra.mxu0 0.0
      %648 = vmatpush.msra.mxu0 0.0
      %649 = vmatpush.msra.mxu0 0.0
      %650 = vmatpush.msra.mxu0 0.0
      %651 = vmatpush.msra.mxu0 0.0
      %652 = vmatpush.msra.mxu0 %v557
      %653 = vmatmul.f32.gmra.mxu0 %v615
      %v654 = vpop.f32.mrf.mxu0
      %v655 = vadd.f32 %v612, %v654
      %656 = vdwg.mxu0
      %s657 = scalar_lea.vmem %s2, 16
      %v658 = vld [vmem:[%s657] sm:$0xff]
      %659 = vrot.lane.b32.xlu0 %v556, 126
      %v660 = vpop.permute.xlu0 %659
      %661 = vrot.lane.b32.xlu0 %v557, 126
      %v662 = vpop.permute.xlu0 %661
      %vm663 = vcmask 1031168
      %v664 = vsel %vm663, %v660, %v662
      %v668 = vsel %vm570, %v658, 0
      %670 = vmatpush.msra.mxu0 0.0
      %671 = vmatpush.msra.mxu0 0.0
      %672 = vmatpush.msra.mxu0 0.0
      %673 = vmatpush.msra.mxu0 0.0
      %674 = vmatpush.msra.mxu0 0.0
      %675 = vmatpush.msra.mxu0 0.0
      %676 = vmatpush.msra.mxu0 0.0
      %677 = vmatpush.msra.mxu0 0.0
      %678 = vmatpush.msra.mxu0 0.0
      %679 = vmatpush.msra.mxu0 0.0
      %680 = vmatpush.msra.mxu0 0.0
      %681 = vmatpush.msra.mxu0 0.0
      %682 = vmatpush.msra.mxu0 0.0
      %683 = vmatpush.msra.mxu0 0.0
      %684 = vmatpush.msra.mxu0 0.0
      %685 = vmatpush.msra.mxu0 %v664
      %686 = vmatmul.f32.gmra.mxu0 %v668
      %v687 = vpop.f32.mrf.mxu0
      %v688 = vadd.f32 0.0, %v687
      %689 = vdwg.mxu0
      %690 = vmatpush.msra.mxu0 0.0
      %691 = vmatpush.msra.mxu0 0.0
      %692 = vmatpush.msra.mxu0 0.0
      %693 = vmatpush.msra.mxu0 0.0
      %694 = vmatpush.msra.mxu0 0.0
      %695 = vmatpush.msra.mxu0 0.0
      %696 = vmatpush.msra.mxu0 0.0
      %697 = vmatpush.msra.mxu0 0.0
      %698 = vmatpush.msra.mxu0 0.0
      %699 = vmatpush.msra.mxu0 0.0
      %700 = vmatpush.msra.mxu0 0.0
      %701 = vmatpush.msra.mxu0 0.0
      %702 = vmatpush.msra.mxu0 0.0
      %703 = vmatpush.msra.mxu0 0.0
      %704 = vmatpush.msra.mxu0 0.0
      %705 = vmatpush.msra.mxu0 %v662
      %706 = vmatmul.f32.gmra.mxu0 %v668
      %v707 = vpop.f32.mrf.mxu0
      %v708 = vadd.f32 0.0, %v707
      %709 = vdwg.mxu0
      %v710 = vadd.f32 %v635, %v688
      %v711 = vadd.f32 %v655, %v708
      %v712 = vld [vmem:[%s3] sm:$0xff]
      %714 = vset.pattern.permute.xlu0 0
      %715 = vperm.xlu0 %714, %v712
      %v716 = vpop.permute.xlu0 %715
      %v718 = vadd.f32 %v710, %v716
      %v719 = vadd.f32 %v711, %v716
      %720 = vst [vmem:[%s235] sm:$0xff] %v718
      %721 = vst.msk [vmem:[%s235 + $0x8] sm:$0xff] %vm238, %v719
      %v722 = vld [vmem:[%s337] ss:$8 sm:$0x3]
      %v723 = vld [vmem:[%s339] ss:$8 sm:$0x3]
      %v724 = vld [vmem:[%s341] ss:$8 sm:$0x3]
      %v725 = vld [vmem:[%s343] ss:$8 sm:$0x3]
      %730 = vst [vmem:[#allocation1] ss:$9 sm:$0xff] %v722
      %s731 = scalar_lea.vmem [#allocation1], 1
      %732 = vst [vmem:[%s731] ss:$9 sm:$0xff] %v723
      %s733 = scalar_lea.vmem [#allocation1], 2
      %734 = vst [vmem:[%s733] ss:$9 sm:$0xff] %v724
      %s735 = scalar_lea.vmem [#allocation1], 3
      %736 = vst [vmem:[%s735] ss:$9 sm:$0xff] %v725
      %v737 = vld [vmem:[#allocation1] sm:$0xff]
      %v738 = vld [vmem:[#allocation1 + $0x9] sm:$0xff]
      %741 = vst [vmem:[#allocation2] sm:$0xf] %v737
      %742 = vst.msk [vmem:[#allocation2 + $0x8] sm:$0xf] %vm282, %v738
      %v743 = vld [vmem:[%s337] ss:$8 sm:$0x3]
      %v744 = vld [vmem:[%s339] ss:$8 sm:$0x3]
      %v745 = vld [vmem:[%s341] ss:$8 sm:$0x3]
      %v746 = vld [vmem:[%s343] ss:$8 sm:$0x3]
      %751 = vst [vmem:[#allocation1] ss:$9 sm:$0xff] %v743
      %s752 = scalar_lea.vmem [#allocation1], 1
      %753 = vst [vmem:[%s752] ss:$9 sm:$0xff] %v744
      %s754 = scalar_lea.vmem [#allocation1], 2
      %755 = vst [vmem:[%s754] ss:$9 sm:$0xff] %v745
      %s756 = scalar_lea.vmem [#allocation1], 3
      %757 = vst [vmem:[%s756] ss:$9 sm:$0xff] %v746
      %v758 = vld [vmem:[#allocation1] sm:$0xff]
      %v759 = vld [vmem:[#allocation1 + $0x9] sm:$0xff]
      %760 = vrot.lane.b32.xlu0 %v758, 112
      %v761 = vpop.permute.xlu0 %760
      %762 = vrot.lane.b32.xlu0 %v759, 112
      %v763 = vpop.permute.xlu0 %762
      %v764 = vsel %vm305, %v761, %v763
      %767 = vst [vmem:[#allocation2 + $0x10] sm:$0xf] %v764
      %768 = vst.msk [vmem:[#allocation2 + $0x18] sm:$0xf] %vm282, %v763
      %v769 = vld [vmem:[%s337] ss:$8 sm:$0x3]
      %v770 = vld [vmem:[%s339] ss:$8 sm:$0x3]
      %v771 = vld [vmem:[%s341] ss:$8 sm:$0x3]
      %v772 = vld [vmem:[%s343] ss:$8 sm:$0x3]
      %777 = vst [vmem:[#allocation1] ss:$9 sm:$0xff] %v769
      %s778 = scalar_lea.vmem [#allocation1], 1
      %779 = vst [vmem:[%s778] ss:$9 sm:$0xff] %v770
      %s780 = scalar_lea.vmem [#allocation1], 2
      %781 = vst [vmem:[%s780] ss:$9 sm:$0xff] %v771
      %s782 = scalar_lea.vmem [#allocation1], 3
      %783 = vst [vmem:[%s782] ss:$9 sm:$0xff] %v772
      %v784 = vld [vmem:[#allocation1] sm:$0xff]
      %v785 = vld [vmem:[#allocation1 + $0x9] sm:$0xff]
      %786 = vrot.lane.b32.xlu0 %v784, 96
      %v787 = vpop.permute.xlu0 %786
      %788 = vrot.lane.b32.xlu0 %v785, 96
      %v789 = vpop.permute.xlu0 %788
      %v790 = vsel %vm238, %v787, %v789
      %793 = vst [vmem:[#allocation2 + $0x20] sm:$0xf] %v790
      %794 = vst.msk [vmem:[#allocation2 + $0x28] sm:$0xf] %vm282, %v789
      %v795 = vld [vmem:[%s414] ss:$8 sm:$0x3]
      %v796 = vld [vmem:[%s416] ss:$8 sm:$0x3]
      %v797 = vld [vmem:[%s418] ss:$8 sm:$0x3]
      %v798 = vld [vmem:[%s420] ss:$8 sm:$0x3]
      %803 = vst [vmem:[#allocation1] ss:$9 sm:$0xff] %v795
      %s804 = scalar_lea.vmem [#allocation1], 1
      %805 = vst [vmem:[%s804] ss:$9 sm:$0xff] %v796
      %s806 = scalar_lea.vmem [#allocation1], 2
      %807 = vst [vmem:[%s806] ss:$9 sm:$0xff] %v797
      %s808 = scalar_lea.vmem [#allocation1], 3
      %809 = vst [vmem:[%s808] ss:$9 sm:$0xff] %v798
      %v810 = vld [vmem:[#allocation1] sm:$0xff]
      %v811 = vld [vmem:[#allocation1 + $0x9] sm:$0xff]
      %814 = vst [vmem:[#allocation2 + $0x30] sm:$0xf] %v810
      %815 = vst.msk [vmem:[#allocation2 + $0x38] sm:$0xf] %vm282, %v811
      %v816 = vld [vmem:[%s414] ss:$8 sm:$0x3]
      %v817 = vld [vmem:[%s416] ss:$8 sm:$0x3]
      %v818 = vld [vmem:[%s418] ss:$8 sm:$0x3]
      %v819 = vld [vmem:[%s420] ss:$8 sm:$0x3]
      %824 = vst [vmem:[#allocation1] ss:$9 sm:$0xff] %v816
      %s825 = scalar_lea.vmem [#allocation1], 1
      %826 = vst [vmem:[%s825] ss:$9 sm:$0xff] %v817
      %s827 = scalar_lea.vmem [#allocation1], 2
      %828 = vst [vmem:[%s827] ss:$9 sm:$0xff] %v818
      %s829 = scalar_lea.vmem [#allocation1], 3
      %830 = vst [vmem:[%s829] ss:$9 sm:$0xff] %v819
      %v831 = vld [vmem:[#allocation1] sm:$0xff]
      %v832 = vld [vmem:[#allocation1 + $0x9] sm:$0xff]
      %833 = vrot.lane.b32.xlu0 %v831, 112
      %v834 = vpop.permute.xlu0 %833
      %835 = vrot.lane.b32.xlu0 %v832, 112
      %v836 = vpop.permute.xlu0 %835
      %v837 = vsel %vm305, %v834, %v836
      %840 = vst [vmem:[#allocation2 + $0x40] sm:$0xf] %v837
      %841 = vst.msk [vmem:[#allocation2 + $0x48] sm:$0xf] %vm282, %v836
      %v842 = vld [vmem:[%s414] ss:$8 sm:$0x3]
      %v843 = vld [vmem:[%s416] ss:$8 sm:$0x3]
      %v844 = vld [vmem:[%s418] ss:$8 sm:$0x3]
      %v845 = vld [vmem:[%s420] ss:$8 sm:$0x3]
      %850 = vst [vmem:[#allocation1] ss:$9 sm:$0xff] %v842
      %s851 = scalar_lea.vmem [#allocation1], 1
      %852 = vst [vmem:[%s851] ss:$9 sm:$0xff] %v843
      %s853 = scalar_lea.vmem [#allocation1], 2
      %854 = vst [vmem:[%s853] ss:$9 sm:$0xff] %v844
      %s855 = scalar_lea.vmem [#allocation1], 3
      %856 = vst [vmem:[%s855] ss:$9 sm:$0xff] %v845
      %v857 = vld [vmem:[#allocation1] sm:$0xff]
      %v858 = vld [vmem:[#allocation1 + $0x9] sm:$0xff]
      %859 = vrot.lane.b32.xlu0 %v857, 96
      %v860 = vpop.permute.xlu0 %859
      %861 = vrot.lane.b32.xlu0 %v858, 96
      %v862 = vpop.permute.xlu0 %861
      %v863 = vsel %vm238, %v860, %v862
      %866 = vst [vmem:[#allocation2 + $0x50] sm:$0xf] %v863
      %867 = vst.msk [vmem:[#allocation2 + $0x58] sm:$0xf] %vm282, %v862
      %s868 = scalar_lea.vmem %s225, 3
      %v869 = vld [vmem:[%s868] ss:$8 sm:$0x3]
      %s870 = scalar_lea.vmem %s225, 19
      %v871 = vld [vmem:[%s870] ss:$8 sm:$0x3]
      %s872 = scalar_lea.vmem %s225, 35
      %v873 = vld [vmem:[%s872] ss:$8 sm:$0x3]
      %s874 = scalar_lea.vmem %s225, 51
      %v875 = vld [vmem:[%s874] ss:$8 sm:$0x3]
      %880 = vst [vmem:[#allocation1] ss:$9 sm:$0xff] %v869
      %s881 = scalar_lea.vmem [#allocation1], 1
      %882 = vst [vmem:[%s881] ss:$9 sm:$0xff] %v871
      %s883 = scalar_lea.vmem [#allocation1], 2
      %884 = vst [vmem:[%s883] ss:$9 sm:$0xff] %v873
      %s885 = scalar_lea.vmem [#allocation1], 3
      %886 = vst [vmem:[%s885] ss:$9 sm:$0xff] %v875
      %v887 = vld [vmem:[#allocation1] sm:$0xff]
      %v888 = vld [vmem:[#allocation1 + $0x9] sm:$0xff]
      %891 = vst [vmem:[#allocation2 + $0x60] sm:$0xf] %v887
      %892 = vst.msk [vmem:[#allocation2 + $0x68] sm:$0xf] %vm282, %v888
      %v893 = vld [vmem:[%s868] ss:$8 sm:$0x3]
      %v894 = vld [vmem:[%s870] ss:$8 sm:$0x3]
      %v895 = vld [vmem:[%s872] ss:$8 sm:$0x3]
      %v896 = vld [vmem:[%s874] ss:$8 sm:$0x3]
      %901 = vst [vmem:[#allocation1] ss:$9 sm:$0xff] %v893
      %s902 = scalar_lea.vmem [#allocation1], 1
      %903 = vst [vmem:[%s902] ss:$9 sm:$0xff] %v894
      %s904 = scalar_lea.vmem [#allocation1], 2
      %905 = vst [vmem:[%s904] ss:$9 sm:$0xff] %v895
      %s906 = scalar_lea.vmem [#allocation1], 3
      %907 = vst [vmem:[%s906] ss:$9 sm:$0xff] %v896
      %v908 = vld [vmem:[#allocation1] sm:$0xff]
      %v909 = vld [vmem:[#allocation1 + $0x9] sm:$0xff]
      %910 = vrot.lane.b32.xlu0 %v908, 112
      %v911 = vpop.permute.xlu0 %910
      %912 = vrot.lane.b32.xlu0 %v909, 112
      %v913 = vpop.permute.xlu0 %912
      %v914 = vsel %vm305, %v911, %v913
      %917 = vst [vmem:[#allocation2 + $0x70] sm:$0xf] %v914
      %918 = vst.msk [vmem:[#allocation2 + $0x78] sm:$0xf] %vm282, %v913
      %v919 = vld [vmem:[%s868] ss:$8 sm:$0x3]
      %v920 = vld [vmem:[%s870] ss:$8 sm:$0x3]
      %v921 = vld [vmem:[%s872] ss:$8 sm:$0x3]
      %v922 = vld [vmem:[%s874] ss:$8 sm:$0x3]
      %927 = vst [vmem:[#allocation1] ss:$9 sm:$0xff] %v919
      %s928 = scalar_lea.vmem [#allocation1], 1
      %929 = vst [vmem:[%s928] ss:$9 sm:$0xff] %v920
      %s930 = scalar_lea.vmem [#allocation1], 2
      %931 = vst [vmem:[%s930] ss:$9 sm:$0xff] %v921
      %s932 = scalar_lea.vmem [#allocation1], 3
      %933 = vst [vmem:[%s932] ss:$9 sm:$0xff] %v922
      %v934 = vld [vmem:[#allocation1] sm:$0xff]
      %v935 = vld [vmem:[#allocation1 + $0x9] sm:$0xff]
      %936 = vrot.lane.b32.xlu0 %v934, 96
      %v937 = vpop.permute.xlu0 %936
      %938 = vrot.lane.b32.xlu0 %v935, 96
      %v939 = vpop.permute.xlu0 %938
      %v940 = vsel %vm238, %v937, %v939
      %943 = vst [vmem:[#allocation2 + $0x80] sm:$0xf] %v940
      %944 = vst.msk [vmem:[#allocation2 + $0x88] sm:$0xf] %vm282, %v939
      %v945 = vld [vmem:[#allocation2] sm:$0xff]
      %v946 = vld [vmem:[#allocation2 + $0x8] sm:$0xff]
      %v947 = vld [vmem:[#allocation2 + $0x10] sm:$0xff]
      %v948 = vld [vmem:[#allocation2 + $0x18] sm:$0xff]
      %v949 = vld [vmem:[#allocation2 + $0x20] sm:$0xff]
      %v950 = vld [vmem:[#allocation2 + $0x28] sm:$0xff]
      %v951 = vld [vmem:[#allocation2 + $0x30] sm:$0xff]
      %v952 = vld [vmem:[#allocation2 + $0x38] sm:$0xff]
      %v953 = vld [vmem:[#allocation2 + $0x40] sm:$0xff]
      %v954 = vld [vmem:[#allocation2 + $0x48] sm:$0xff]
      %v955 = vld [vmem:[#allocation2 + $0x50] sm:$0xff]
      %v956 = vld [vmem:[#allocation2 + $0x58] sm:$0xff]
      %v957 = vld [vmem:[#allocation2 + $0x60] sm:$0xff]
      %v958 = vld [vmem:[#allocation2 + $0x68] sm:$0xff]
      %v959 = vld [vmem:[#allocation2 + $0x70] sm:$0xff]
      %v960 = vld [vmem:[#allocation2 + $0x78] sm:$0xff]
      %v961 = vld [vmem:[#allocation2 + $0x80] sm:$0xff]
      %v962 = vld [vmem:[#allocation2 + $0x88] sm:$0xff]
      %963 = vmatpush.msra.mxu0 0.0
      %964 = vmatpush.msra.mxu0 0.0
      %965 = vmatpush.msra.mxu0 0.0
      %966 = vmatpush.msra.mxu0 0.0
      %967 = vmatpush.msra.mxu0 0.0
      %968 = vmatpush.msra.mxu0 0.0
      %969 = vmatpush.msra.mxu0 0.0
      %970 = vmatpush.msra.mxu0 %v961
      %971 = vmatpush.msra.mxu0 %v959
      %972 = vmatpush.msra.mxu0 %v957
      %973 = vmatpush.msra.mxu0 %v955
      %974 = vmatpush.msra.mxu0 %v953
      %975 = vmatpush.msra.mxu0 %v951
      %976 = vmatpush.msra.mxu0 %v949
      %977 = vmatpush.msra.mxu0 %v947
      %978 = vmatpush.msra.mxu0 %v945
      %979 = vmatmul.f32.gmra.mxu0 %v511
      %v980 = vpop.f32.mrf.mxu0
      %v981 = vadd.f32 0.0, %v980
      %982 = vdwg.mxu0
      %983 = vmatpush.msra.mxu0 0.0
      %984 = vmatpush.msra.mxu0 0.0
      %985 = vmatpush.msra.mxu0 0.0
      %986 = vmatpush.msra.mxu0 0.0
      %987 = vmatpush.msra.mxu0 0.0
      %988 = vmatpush.msra.mxu0 0.0
      %989 = vmatpush.msra.mxu0 0.0
      %990 = vmatpush.msra.mxu0 %v962
      %991 = vmatpush.msra.mxu0 %v960
      %992 = vmatpush.msra.mxu0 %v958
      %993 = vmatpush.msra.mxu0 %v956
      %994 = vmatpush.msra.mxu0 %v954
      %995 = vmatpush.msra.mxu0 %v952
      %996 = vmatpush.msra.mxu0 %v950
      %997 = vmatpush.msra.mxu0 %v948
      %998 = vmatpush.msra.mxu0 %v946
      %999 = vmatmul.f32.gmra.mxu0 %v511
      %v1000 = vpop.f32.mrf.mxu0
      %v1001 = vadd.f32 0.0, %v1000
      %1002 = vdwg.mxu0
      %1003 = vst [vmem:[#allocation3] sm:$0xff] %v981
      %1004 = vst.msk [vmem:[#allocation3 + $0x8] sm:$0xff] %vm238, %v1001
      %v1005 = vld [vmem:[%s2] sm:$0xff]
      %v1006 = vld [vmem:[#allocation3] sm:$0xff]
      %v1007 = vld [vmem:[#allocation3 + $0x8] sm:$0xff]
      %v1008 = vld [vmem:[%s558] sm:$0xff]
      %1011 = vrot.lane.b32.xlu0 %v1006, 127
      %v1012 = vpop.permute.xlu0 %1011
      %1013 = vrot.lane.b32.xlu0 %v1007, 127
      %v1014 = vpop.permute.xlu0 %1013
      %v1015 = vsel %vm566, %v1012, %v1014
      %v1019 = vsel %vm570, %v1008, 0
      %1021 = vmatpush.msra.mxu0 0.0
      %1022 = vmatpush.msra.mxu0 0.0
      %1023 = vmatpush.msra.mxu0 0.0
      %1024 = vmatpush.msra.mxu0 0.0
      %1025 = vmatpush.msra.mxu0 0.0
      %1026 = vmatpush.msra.mxu0 0.0
      %1027 = vmatpush.msra.mxu0 0.0
      %1028 = vmatpush.msra.mxu0 0.0
      %1029 = vmatpush.msra.mxu0 0.0
      %1030 = vmatpush.msra.mxu0 0.0
      %1031 = vmatpush.msra.mxu0 0.0
      %1032 = vmatpush.msra.mxu0 0.0
      %1033 = vmatpush.msra.mxu0 0.0
      %1034 = vmatpush.msra.mxu0 0.0
      %1035 = vmatpush.msra.mxu0 0.0
      %1036 = vmatpush.msra.mxu0 %v1015
      %1037 = vmatmul.f32.gmra.mxu0 %v1019
      %v1038 = vpop.f32.mrf.mxu0
      %v1039 = vadd.f32 0.0, %v1038
      %1040 = vdwg.mxu0
      %1041 = vmatpush.msra.mxu0 0.0
      %1042 = vmatpush.msra.mxu0 0.0
      %1043 = vmatpush.msra.mxu0 0.0
      %1044 = vmatpush.msra.mxu0 0.0
      %1045 = vmatpush.msra.mxu0 0.0
      %1046 = vmatpush.msra.mxu0 0.0
      %1047 = vmatpush.msra.mxu0 0.0
      %1048 = vmatpush.msra.mxu0 0.0
      %1049 = vmatpush.msra.mxu0 0.0
      %1050 = vmatpush.msra.mxu0 0.0
      %1051 = vmatpush.msra.mxu0 0.0
      %1052 = vmatpush.msra.mxu0 0.0
      %1053 = vmatpush.msra.mxu0 0.0
      %1054 = vmatpush.msra.mxu0 0.0
      %1055 = vmatpush.msra.mxu0 0.0
      %1056 = vmatpush.msra.mxu0 %v1014
      %1057 = vmatmul.f32.gmra.mxu0 %v1019
      %v1058 = vpop.f32.mrf.mxu0
      %v1059 = vadd.f32 0.0, %v1058
      %1060 = vdwg.mxu0
      %v1062 = vsel %vm570, %v1005, 0
      %1064 = vmatpush.msra.mxu0 0.0
      %1065 = vmatpush.msra.mxu0 0.0
      %1066 = vmatpush.msra.mxu0 0.0
      %1067 = vmatpush.msra.mxu0 0.0
      %1068 = vmatpush.msra.mxu0 0.0
      %1069 = vmatpush.msra.mxu0 0.0
      %1070 = vmatpush.msra.mxu0 0.0
      %1071 = vmatpush.msra.mxu0 0.0
      %1072 = vmatpush.msra.mxu0 0.0
      %1073 = vmatpush.msra.mxu0 0.0
      %1074 = vmatpush.msra.mxu0 0.0
      %1075 = vmatpush.msra.mxu0 0.0
      %1076 = vmatpush.msra.mxu0 0.0
      %1077 = vmatpush.msra.mxu0 0.0
      %1078 = vmatpush.msra.mxu0 0.0
      %1079 = vmatpush.msra.mxu0 %v1006
      %1080 = vmatmul.f32.gmra.mxu0 %v1062
      %v1081 = vpop.f32.mrf.mxu0
      %v1082 = vadd.f32 %v1039, %v1081
      %1083 = vdwg.mxu0
      %1084 = vmatpush.msra.mxu0 0.0
      %1085 = vmatpush.msra.mxu0 0.0
      %1086 = vmatpush.msra.mxu0 0.0
      %1087 = vmatpush.msra.mxu0 0.0
      %1088 = vmatpush.msra.mxu0 0.0
      %1089 = vmatpush.msra.mxu0 0.0
      %1090 = vmatpush.msra.mxu0 0.0
      %1091 = vmatpush.msra.mxu0 0.0
      %1092 = vmatpush.msra.mxu0 0.0
      %1093 = vmatpush.msra.mxu0 0.0
      %1094 = vmatpush.msra.mxu0 0.0
      %1095 = vmatpush.msra.mxu0 0.0
      %1096 = vmatpush.msra.mxu0 0.0
      %1097 = vmatpush.msra.mxu0 0.0
      %1098 = vmatpush.msra.mxu0 0.0
      %1099 = vmatpush.msra.mxu0 %v1007
      %1100 = vmatmul.f32.gmra.mxu0 %v1062
      %v1101 = vpop.f32.mrf.mxu0
      %v1102 = vadd.f32 %v1059, %v1101
      %1103 = vdwg.mxu0
      %v1104 = vld [vmem:[%s657] sm:$0xff]
      %1105 = vrot.lane.b32.xlu0 %v1006, 126
      %v1106 = vpop.permute.xlu0 %1105
      %1107 = vrot.lane.b32.xlu0 %v1007, 126
      %v1108 = vpop.permute.xlu0 %1107
      %v1109 = vsel %vm663, %v1106, %v1108
      %v1113 = vsel %vm570, %v1104, 0
      %1115 = vmatpush.msra.mxu0 0.0
      %1116 = vmatpush.msra.mxu0 0.0
      %1117 = vmatpush.msra.mxu0 0.0
      %1118 = vmatpush.msra.mxu0 0.0
      %1119 = vmatpush.msra.mxu0 0.0
      %1120 = vmatpush.msra.mxu0 0.0
      %1121 = vmatpush.msra.mxu0 0.0
      %1122 = vmatpush.msra.mxu0 0.0
      %1123 = vmatpush.msra.mxu0 0.0
      %1124 = vmatpush.msra.mxu0 0.0
      %1125 = vmatpush.msra.mxu0 0.0
      %1126 = vmatpush.msra.mxu0 0.0
      %1127 = vmatpush.msra.mxu0 0.0
      %1128 = vmatpush.msra.mxu0 0.0
      %1129 = vmatpush.msra.mxu0 0.0
      %1130 = vmatpush.msra.mxu0 %v1109
      %1131 = vmatmul.f32.gmra.mxu0 %v1113
      %v1132 = vpop.f32.mrf.mxu0
      %v1133 = vadd.f32 0.0, %v1132
      %1134 = vdwg.mxu0
      %1135 = vmatpush.msra.mxu0 0.0
      %1136 = vmatpush.msra.mxu0 0.0
      %1137 = vmatpush.msra.mxu0 0.0
      %1138 = vmatpush.msra.mxu0 0.0
      %1139 = vmatpush.msra.mxu0 0.0
      %1140 = vmatpush.msra.mxu0 0.0
      %1141 = vmatpush.msra.mxu0 0.0
      %1142 = vmatpush.msra.mxu0 0.0
      %1143 = vmatpush.msra.mxu0 0.0
      %1144 = vmatpush.msra.mxu0 0.0
      %1145 = vmatpush.msra.mxu0 0.0
      %1146 = vmatpush.msra.mxu0 0.0
      %1147 = vmatpush.msra.mxu0 0.0
      %1148 = vmatpush.msra.mxu0 0.0
      %1149 = vmatpush.msra.mxu0 0.0
      %1150 = vmatpush.msra.mxu0 %v1108
      %1151 = vmatmul.f32.gmra.mxu0 %v1113
      %v1152 = vpop.f32.mrf.mxu0
      %v1153 = vadd.f32 0.0, %v1152
      %1154 = vdwg.mxu0
      %v1155 = vadd.f32 %v1082, %v1133
      %v1156 = vadd.f32 %v1102, %v1153
      %v1157 = vld [vmem:[%s3] sm:$0xff]
      %1159 = vset.pattern.permute.xlu0 0
      %1160 = vperm.xlu0 %1159, %v1157
      %v1161 = vpop.permute.xlu0 %1160
      %v1163 = vadd.f32 %v1155, %v1161
      %v1164 = vadd.f32 %v1156, %v1161
      %s1165 = scalar_lea.vmem %s235, 16
      %1166 = vst [vmem:[%s1165] sm:$0xff] %v1163
      %1167 = vst.msk [vmem:[%s1165 + $0x8] sm:$0xff] %vm238, %v1164
      %v1168 = vld [vmem:[%s414] ss:$8 sm:$0x3]
      %v1169 = vld [vmem:[%s416] ss:$8 sm:$0x3]
      %v1170 = vld [vmem:[%s418] ss:$8 sm:$0x3]
      %v1171 = vld [vmem:[%s420] ss:$8 sm:$0x3]
      %1176 = vst [vmem:[#allocation1] ss:$9 sm:$0xff] %v1168
      %s1177 = scalar_lea.vmem [#allocation1], 1
      %1178 = vst [vmem:[%s1177] ss:$9 sm:$0xff] %v1169
      %s1179 = scalar_lea.vmem [#allocation1], 2
      %1180 = vst [vmem:[%s1179] ss:$9 sm:$0xff] %v1170
      %s1181 = scalar_lea.vmem [#allocation1], 3
      %1182 = vst [vmem:[%s1181] ss:$9 sm:$0xff] %v1171
      %v1183 = vld [vmem:[#allocation1] sm:$0xff]
      %v1184 = vld [vmem:[#allocation1 + $0x9] sm:$0xff]
      %1187 = vst [vmem:[#allocation2] sm:$0xf] %v1183
      %1188 = vst.msk [vmem:[#allocation2 + $0x8] sm:$0xf] %vm282, %v1184
      %v1189 = vld [vmem:[%s414] ss:$8 sm:$0x3]
      %v1190 = vld [vmem:[%s416] ss:$8 sm:$0x3]
      %v1191 = vld [vmem:[%s418] ss:$8 sm:$0x3]
      %v1192 = vld [vmem:[%s420] ss:$8 sm:$0x3]
      %1197 = vst [vmem:[#allocation1] ss:$9 sm:$0xff] %v1189
      %s1198 = scalar_lea.vmem [#allocation1], 1
      %1199 = vst [vmem:[%s1198] ss:$9 sm:$0xff] %v1190
      %s1200 = scalar_lea.vmem [#allocation1], 2
      %1201 = vst [vmem:[%s1200] ss:$9 sm:$0xff] %v1191
      %s1202 = scalar_lea.vmem [#allocation1], 3
      %1203 = vst [vmem:[%s1202] ss:$9 sm:$0xff] %v1192
      %v1204 = vld [vmem:[#allocation1] sm:$0xff]
      %v1205 = vld [vmem:[#allocation1 + $0x9] sm:$0xff]
      %1206 = vrot.lane.b32.xlu0 %v1204, 112
      %v1207 = vpop.permute.xlu0 %1206
      %1208 = vrot.lane.b32.xlu0 %v1205, 112
      %v1209 = vpop.permute.xlu0 %1208
      %v1210 = vsel %vm305, %v1207, %v1209
      %1213 = vst [vmem:[#allocation2 + $0x10] sm:$0xf] %v1210
      %1214 = vst.msk [vmem:[#allocation2 + $0x18] sm:$0xf] %vm282, %v1209
      %v1215 = vld [vmem:[%s414] ss:$8 sm:$0x3]
      %v1216 = vld [vmem:[%s416] ss:$8 sm:$0x3]
      %v1217 = vld [vmem:[%s418] ss:$8 sm:$0x3]
      %v1218 = vld [vmem:[%s420] ss:$8 sm:$0x3]
      %1223 = vst [vmem:[#allocation1] ss:$9 sm:$0xff] %v1215
      %s1224 = scalar_lea.vmem [#allocation1], 1
      %1225 = vst [vmem:[%s1224] ss:$9 sm:$0xff] %v1216
      %s1226 = scalar_lea.vmem [#allocation1], 2
      %1227 = vst [vmem:[%s1226] ss:$9 sm:$0xff] %v1217
      %s1228 = scalar_lea.vmem [#allocation1], 3
      %1229 = vst [vmem:[%s1228] ss:$9 sm:$0xff] %v1218
      %v1230 = vld [vmem:[#allocation1] sm:$0xff]
      %v1231 = vld [vmem:[#allocation1 + $0x9] sm:$0xff]
      %1232 = vrot.lane.b32.xlu0 %v1230, 96
      %v1233 = vpop.permute.xlu0 %1232
      %1234 = vrot.lane.b32.xlu0 %v1231, 96
      %v1235 = vpop.permute.xlu0 %1234
      %v1236 = vsel %vm238, %v1233, %v1235
      %1239 = vst [vmem:[#allocation2 + $0x20] sm:$0xf] %v1236
      %1240 = vst.msk [vmem:[#allocation2 + $0x28] sm:$0xf] %vm282, %v1235
      %v1241 = vld [vmem:[%s868] ss:$8 sm:$0x3]
      %v1242 = vld [vmem:[%s870] ss:$8 sm:$0x3]
      %v1243 = vld [vmem:[%s872] ss:$8 sm:$0x3]
      %v1244 = vld [vmem:[%s874] ss:$8 sm:$0x3]
      %1249 = vst [vmem:[#allocation1] ss:$9 sm:$0xff] %v1241
      %s1250 = scalar_lea.vmem [#allocation1], 1
      %1251 = vst [vmem:[%s1250] ss:$9 sm:$0xff] %v1242
      %s1252 = scalar_lea.vmem [#allocation1], 2
      %1253 = vst [vmem:[%s1252] ss:$9 sm:$0xff] %v1243
      %s1254 = scalar_lea.vmem [#allocation1], 3
      %1255 = vst [vmem:[%s1254] ss:$9 sm:$0xff] %v1244
      %v1256 = vld [vmem:[#allocation1] sm:$0xff]
      %v1257 = vld [vmem:[#allocation1 + $0x9] sm:$0xff]
      %1260 = vst [vmem:[#allocation2 + $0x30] sm:$0xf] %v1256
      %1261 = vst.msk [vmem:[#allocation2 + $0x38] sm:$0xf] %vm282, %v1257
      %v1262 = vld [vmem:[%s868] ss:$8 sm:$0x3]
      %v1263 = vld [vmem:[%s870] ss:$8 sm:$0x3]
      %v1264 = vld [vmem:[%s872] ss:$8 sm:$0x3]
      %v1265 = vld [vmem:[%s874] ss:$8 sm:$0x3]
      %1270 = vst [vmem:[#allocation1] ss:$9 sm:$0xff] %v1262
      %s1271 = scalar_lea.vmem [#allocation1], 1
      %1272 = vst [vmem:[%s1271] ss:$9 sm:$0xff] %v1263
      %s1273 = scalar_lea.vmem [#allocation1], 2
      %1274 = vst [vmem:[%s1273] ss:$9 sm:$0xff] %v1264
      %s1275 = scalar_lea.vmem [#allocation1], 3
      %1276 = vst [vmem:[%s1275] ss:$9 sm:$0xff] %v1265
      %v1277 = vld [vmem:[#allocation1] sm:$0xff]
      %v1278 = vld [vmem:[#allocation1 + $0x9] sm:$0xff]
      %1279 = vrot.lane.b32.xlu0 %v1277, 112
      %v1280 = vpop.permute.xlu0 %1279
      %1281 = vrot.lane.b32.xlu0 %v1278, 112
      %v1282 = vpop.permute.xlu0 %1281
      %v1283 = vsel %vm305, %v1280, %v1282
      %1286 = vst [vmem:[#allocation2 + $0x40] sm:$0xf] %v1283
      %1287 = vst.msk [vmem:[#allocation2 + $0x48] sm:$0xf] %vm282, %v1282
      %v1288 = vld [vmem:[%s868] ss:$8 sm:$0x3]
      %v1289 = vld [vmem:[%s870] ss:$8 sm:$0x3]
      %v1290 = vld [vmem:[%s872] ss:$8 sm:$0x3]
      %v1291 = vld [vmem:[%s874] ss:$8 sm:$0x3]
      %1296 = vst [vmem:[#allocation1] ss:$9 sm:$0xff] %v1288
      %s1297 = scalar_lea.vmem [#allocation1], 1
      %1298 = vst [vmem:[%s1297] ss:$9 sm:$0xff] %v1289
      %s1299 = scalar_lea.vmem [#allocation1], 2
      %1300 = vst [vmem:[%s1299] ss:$9 sm:$0xff] %v1290
      %s1301 = scalar_lea.vmem [#allocation1], 3
      %1302 = vst [vmem:[%s1301] ss:$9 sm:$0xff] %v1291
      %v1303 = vld [vmem:[#allocation1] sm:$0xff]
      %v1304 = vld [vmem:[#allocation1 + $0x9] sm:$0xff]
      %1305 = vrot.lane.b32.xlu0 %v1303, 96
      %v1306 = vpop.permute.xlu0 %1305
      %1307 = vrot.lane.b32.xlu0 %v1304, 96
      %v1308 = vpop.permute.xlu0 %1307
      %v1309 = vsel %vm238, %v1306, %v1308
      %1312 = vst [vmem:[#allocation2 + $0x50] sm:$0xf] %v1309
      %1313 = vst.msk [vmem:[#allocation2 + $0x58] sm:$0xf] %vm282, %v1308
      %s1314 = scalar_lea.vmem %s225, 4
      %v1315 = vld [vmem:[%s1314] ss:$8 sm:$0x3]
      %s1316 = scalar_lea.vmem %s225, 20
      %v1317 = vld [vmem:[%s1316] ss:$8 sm:$0x3]
      %s1318 = scalar_lea.vmem %s225, 36
      %v1319 = vld [vmem:[%s1318] ss:$8 sm:$0x3]
      %s1320 = scalar_lea.vmem %s225, 52
      %v1321 = vld [vmem:[%s1320] ss:$8 sm:$0x3]
      %1326 = vst [vmem:[#allocation1] ss:$9 sm:$0xff] %v1315
      %s1327 = scalar_lea.vmem [#allocation1], 1
      %1328 = vst [vmem:[%s1327] ss:$9 sm:$0xff] %v1317
      %s1329 = scalar_lea.vmem [#allocation1], 2
      %1330 = vst [vmem:[%s1329] ss:$9 sm:$0xff] %v1319
      %s1331 = scalar_lea.vmem [#allocation1], 3
      %1332 = vst [vmem:[%s1331] ss:$9 sm:$0xff] %v1321
      %v1333 = vld [vmem:[#allocation1] sm:$0xff]
      %v1334 = vld [vmem:[#allocation1 + $0x9] sm:$0xff]
      %1337 = vst [vmem:[#allocation2 + $0x60] sm:$0xf] %v1333
      %1338 = vst.msk [vmem:[#allocation2 + $0x68] sm:$0xf] %vm282, %v1334
      %v1339 = vld [vmem:[%s1314] ss:$8 sm:$0x3]
      %v1340 = vld [vmem:[%s1316] ss:$8 sm:$0x3]
      %v1341 = vld [vmem:[%s1318] ss:$8 sm:$0x3]
      %v1342 = vld [vmem:[%s1320] ss:$8 sm:$0x3]
      %1347 = vst [vmem:[#allocation1] ss:$9 sm:$0xff] %v1339
      %s1348 = scalar_lea.vmem [#allocation1], 1
      %1349 = vst [vmem:[%s1348] ss:$9 sm:$0xff] %v1340
      %s1350 = scalar_lea.vmem [#allocation1], 2
      %1351 = vst [vmem:[%s1350] ss:$9 sm:$0xff] %v1341
      %s1352 = scalar_lea.vmem [#allocation1], 3
      %1353 = vst [vmem:[%s1352] ss:$9 sm:$0xff] %v1342
      %v1354 = vld [vmem:[#allocation1] sm:$0xff]
      %v1355 = vld [vmem:[#allocation1 + $0x9] sm:$0xff]
      %1356 = vrot.lane.b32.xlu0 %v1354, 112
      %v1357 = vpop.permute.xlu0 %1356
      %1358 = vrot.lane.b32.xlu0 %v1355, 112
      %v1359 = vpop.permute.xlu0 %1358
      %v1360 = vsel %vm305, %v1357, %v1359
      %1363 = vst [vmem:[#allocation2 + $0x70] sm:$0xf] %v1360
      %1364 = vst.msk [vmem:[#allocation2 + $0x78] sm:$0xf] %vm282, %v1359
      %v1365 = vld [vmem:[%s1314] ss:$8 sm:$0x3]
      %v1366 = vld [vmem:[%s1316] ss:$8 sm:$0x3]
      %v1367 = vld [vmem:[%s1318] ss:$8 sm:$0x3]
      %v1368 = vld [vmem:[%s1320] ss:$8 sm:$0x3]
      %1373 = vst [vmem:[#allocation1] ss:$9 sm:$0xff] %v1365
      %s1374 = scalar_lea.vmem [#allocation1], 1
      %1375 = vst [vmem:[%s1374] ss:$9 sm:$0xff] %v1366
      %s1376 = scalar_lea.vmem [#allocation1], 2
      %1377 = vst [vmem:[%s1376] ss:$9 sm:$0xff] %v1367
      %s1378 = scalar_lea.vmem [#allocation1], 3
      %1379 = vst [vmem:[%s1378] ss:$9 sm:$0xff] %v1368
      %v1380 = vld [vmem:[#allocation1] sm:$0xff]
      %v1381 = vld [vmem:[#allocation1 + $0x9] sm:$0xff]
      %1382 = vrot.lane.b32.xlu0 %v1380, 96
      %v1383 = vpop.permute.xlu0 %1382
      %1384 = vrot.lane.b32.xlu0 %v1381, 96
      %v1385 = vpop.permute.xlu0 %1384
      %v1386 = vsel %vm238, %v1383, %v1385
      %1389 = vst [vmem:[#allocation2 + $0x80] sm:$0xf] %v1386
      %1390 = vst.msk [vmem:[#allocation2 + $0x88] sm:$0xf] %vm282, %v1385
      %v1391 = vld [vmem:[#allocation2] sm:$0xff]
      %v1392 = vld [vmem:[#allocation2 + $0x8] sm:$0xff]
      %v1393 = vld [vmem:[#allocation2 + $0x10] sm:$0xff]
      %v1394 = vld [vmem:[#allocation2 + $0x18] sm:$0xff]
      %v1395 = vld [vmem:[#allocation2 + $0x20] sm:$0xff]
      %v1396 = vld [vmem:[#allocation2 + $0x28] sm:$0xff]
      %v1397 = vld [vmem:[#allocation2 + $0x30] sm:$0xff]
      %v1398 = vld [vmem:[#allocation2 + $0x38] sm:$0xff]
      %v1399 = vld [vmem:[#allocation2 + $0x40] sm:$0xff]
      %v1400 = vld [vmem:[#allocation2 + $0x48] sm:$0xff]
      %v1401 = vld [vmem:[#allocation2 + $0x50] sm:$0xff]
      %v1402 = vld [vmem:[#allocation2 + $0x58] sm:$0xff]
      %v1403 = vld [vmem:[#allocation2 + $0x60] sm:$0xff]
      %v1404 = vld [vmem:[#allocation2 + $0x68] sm:$0xff]
      %v1405 = vld [vmem:[#allocation2 + $0x70] sm:$0xff]
      %v1406 = vld [vmem:[#allocation2 + $0x78] sm:$0xff]
      %v1407 = vld [vmem:[#allocation2 + $0x80] sm:$0xff]
      %v1408 = vld [vmem:[#allocation2 + $0x88] sm:$0xff]
      %1409 = vmatpush.msra.mxu0 0.0
      %1410 = vmatpush.msra.mxu0 0.0
      %1411 = vmatpush.msra.mxu0 0.0
      %1412 = vmatpush.msra.mxu0 0.0
      %1413 = vmatpush.msra.mxu0 0.0
      %1414 = vmatpush.msra.mxu0 0.0
      %1415 = vmatpush.msra.mxu0 0.0
      %1416 = vmatpush.msra.mxu0 %v1407
      %1417 = vmatpush.msra.mxu0 %v1405
      %1418 = vmatpush.msra.mxu0 %v1403
      %1419 = vmatpush.msra.mxu0 %v1401
      %1420 = vmatpush.msra.mxu0 %v1399
      %1421 = vmatpush.msra.mxu0 %v1397
      %1422 = vmatpush.msra.mxu0 %v1395
      %1423 = vmatpush.msra.mxu0 %v1393
      %1424 = vmatpush.msra.mxu0 %v1391
      %1425 = vmatmul.f32.gmra.mxu0 %v511
      %v1426 = vpop.f32.mrf.mxu0
      %v1427 = vadd.f32 0.0, %v1426
      %1428 = vdwg.mxu0
      %1429 = vmatpush.msra.mxu0 0.0
      %1430 = vmatpush.msra.mxu0 0.0
      %1431 = vmatpush.msra.mxu0 0.0
      %1432 = vmatpush.msra.mxu0 0.0
      %1433 = vmatpush.msra.mxu0 0.0
      %1434 = vmatpush.msra.mxu0 0.0
      %1435 = vmatpush.msra.mxu0 0.0
      %1436 = vmatpush.msra.mxu0 %v1408
      %1437 = vmatpush.msra.mxu0 %v1406
      %1438 = vmatpush.msra.mxu0 %v1404
      %1439 = vmatpush.msra.mxu0 %v1402
      %1440 = vmatpush.msra.mxu0 %v1400
      %1441 = vmatpush.msra.mxu0 %v1398
      %1442 = vmatpush.msra.mxu0 %v1396
      %1443 = vmatpush.msra.mxu0 %v1394
      %1444 = vmatpush.msra.mxu0 %v1392
      %1445 = vmatmul.f32.gmra.mxu0 %v511
      %v1446 = vpop.f32.mrf.mxu0
      %v1447 = vadd.f32 0.0, %v1446
      %1448 = vdwg.mxu0
      %1449 = vst [vmem:[#allocation3] sm:$0xff] %v1427
      %1450 = vst.msk [vmem:[#allocation3 + $0x8] sm:$0xff] %vm238, %v1447
      %v1451 = vld [vmem:[%s2] sm:$0xff]
      %v1452 = vld [vmem:[#allocation3] sm:$0xff]
      %v1453 = vld [vmem:[#allocation3 + $0x8] sm:$0xff]
      %v1454 = vld [vmem:[%s558] sm:$0xff]
      %1457 = vrot.lane.b32.xlu0 %v1452, 127
      %v1458 = vpop.permute.xlu0 %1457
      %1459 = vrot.lane.b32.xlu0 %v1453, 127
      %v1460 = vpop.permute.xlu0 %1459
      %v1461 = vsel %vm566, %v1458, %v1460
      %v1465 = vsel %vm570, %v1454, 0
      %1467 = vmatpush.msra.mxu0 0.0
      %1468 = vmatpush.msra.mxu0 0.0
      %1469 = vmatpush.msra.mxu0 0.0
      %1470 = vmatpush.msra.mxu0 0.0
      %1471 = vmatpush.msra.mxu0 0.0
      %1472 = vmatpush.msra.mxu0 0.0
      %1473 = vmatpush.msra.mxu0 0.0
      %1474 = vmatpush.msra.mxu0 0.0
      %1475 = vmatpush.msra.mxu0 0.0
      %1476 = vmatpush.msra.mxu0 0.0
      %1477 = vmatpush.msra.mxu0 0.0
      %1478 = vmatpush.msra.mxu0 0.0
      %1479 = vmatpush.msra.mxu0 0.0
      %1480 = vmatpush.msra.mxu0 0.0
      %1481 = vmatpush.msra.mxu0 0.0
      %1482 = vmatpush.msra.mxu0 %v1461
      %1483 = vmatmul.f32.gmra.mxu0 %v1465
      %v1484 = vpop.f32.mrf.mxu0
      %v1485 = vadd.f32 0.0, %v1484
      %1486 = vdwg.mxu0
      %1487 = vmatpush.msra.mxu0 0.0
      %1488 = vmatpush.msra.mxu0 0.0
      %1489 = vmatpush.msra.mxu0 0.0
      %1490 = vmatpush.msra.mxu0 0.0
      %1491 = vmatpush.msra.mxu0 0.0
      %1492 = vmatpush.msra.mxu0 0.0
      %1493 = vmatpush.msra.mxu0 0.0
      %1494 = vmatpush.msra.mxu0 0.0
      %1495 = vmatpush.msra.mxu0 0.0
      %1496 = vmatpush.msra.mxu0 0.0
      %1497 = vmatpush.msra.mxu0 0.0
      %1498 = vmatpush.msra.mxu0 0.0
      %1499 = vmatpush.msra.mxu0 0.0
      %1500 = vmatpush.msra.mxu0 0.0
      %1501 = vmatpush.msra.mxu0 0.0
      %1502 = vmatpush.msra.mxu0 %v1460
      %1503 = vmatmul.f32.gmra.mxu0 %v1465
      %v1504 = vpop.f32.mrf.mxu0
      %v1505 = vadd.f32 0.0, %v1504
      %1506 = vdwg.mxu0
      %v1508 = vsel %vm570, %v1451, 0
      %1510 = vmatpush.msra.mxu0 0.0
      %1511 = vmatpush.msra.mxu0 0.0
      %1512 = vmatpush.msra.mxu0 0.0
      %1513 = vmatpush.msra.mxu0 0.0
      %1514 = vmatpush.msra.mxu0 0.0
      %1515 = vmatpush.msra.mxu0 0.0
      %1516 = vmatpush.msra.mxu0 0.0
      %1517 = vmatpush.msra.mxu0 0.0
      %1518 = vmatpush.msra.mxu0 0.0
      %1519 = vmatpush.msra.mxu0 0.0
      %1520 = vmatpush.msra.mxu0 0.0
      %1521 = vmatpush.msra.mxu0 0.0
      %1522 = vmatpush.msra.mxu0 0.0
      %1523 = vmatpush.msra.mxu0 0.0
      %1524 = vmatpush.msra.mxu0 0.0
      %1525 = vmatpush.msra.mxu0 %v1452
      %1526 = vmatmul.f32.gmra.mxu0 %v1508
      %v1527 = vpop.f32.mrf.mxu0
      %v1528 = vadd.f32 %v1485, %v1527
      %1529 = vdwg.mxu0
      %1530 = vmatpush.msra.mxu0 0.0
      %1531 = vmatpush.msra.mxu0 0.0
      %1532 = vmatpush.msra.mxu0 0.0
      %1533 = vmatpush.msra.mxu0 0.0
      %1534 = vmatpush.msra.mxu0 0.0
      %1535 = vmatpush.msra.mxu0 0.0
      %1536 = vmatpush.msra.mxu0 0.0
      %1537 = vmatpush.msra.mxu0 0.0
      %1538 = vmatpush.msra.mxu0 0.0
      %1539 = vmatpush.msra.mxu0 0.0
      %1540 = vmatpush.msra.mxu0 0.0
      %1541 = vmatpush.msra.mxu0 0.0
      %1542 = vmatpush.msra.mxu0 0.0
      %1543 = vmatpush.msra.mxu0 0.0
      %1544 = vmatpush.msra.mxu0 0.0
      %1545 = vmatpush.msra.mxu0 %v1453
      %1546 = vmatmul.f32.gmra.mxu0 %v1508
      %v1547 = vpop.f32.mrf.mxu0
      %v1548 = vadd.f32 %v1505, %v1547
      %1549 = vdwg.mxu0
      %v1550 = vld [vmem:[%s657] sm:$0xff]
      %1551 = vrot.lane.b32.xlu0 %v1452, 126
      %v1552 = vpop.permute.xlu0 %1551
      %1553 = vrot.lane.b32.xlu0 %v1453, 126
      %v1554 = vpop.permute.xlu0 %1553
      %v1555 = vsel %vm663, %v1552, %v1554
      %v1559 = vsel %vm570, %v1550, 0
      %1561 = vmatpush.msra.mxu0 0.0
      %1562 = vmatpush.msra.mxu0 0.0
      %1563 = vmatpush.msra.mxu0 0.0
      %1564 = vmatpush.msra.mxu0 0.0
      %1565 = vmatpush.msra.mxu0 0.0
      %1566 = vmatpush.msra.mxu0 0.0
      %1567 = vmatpush.msra.mxu0 0.0
      %1568 = vmatpush.msra.mxu0 0.0
      %1569 = vmatpush.msra.mxu0 0.0
      %1570 = vmatpush.msra.mxu0 0.0
      %1571 = vmatpush.msra.mxu0 0.0
      %1572 = vmatpush.msra.mxu0 0.0
      %1573 = vmatpush.msra.mxu0 0.0
      %1574 = vmatpush.msra.mxu0 0.0
      %1575 = vmatpush.msra.mxu0 0.0
      %1576 = vmatpush.msra.mxu0 %v1555
      %1577 = vmatmul.f32.gmra.mxu0 %v1559
      %v1578 = vpop.f32.mrf.mxu0
      %v1579 = vadd.f32 0.0, %v1578
      %1580 = vdwg.mxu0
      %1581 = vmatpush.msra.mxu0 0.0
      %1582 = vmatpush.msra.mxu0 0.0
      %1583 = vmatpush.msra.mxu0 0.0
      %1584 = vmatpush.msra.mxu0 0.0
      %1585 = vmatpush.msra.mxu0 0.0
      %1586 = vmatpush.msra.mxu0 0.0
      %1587 = vmatpush.msra.mxu0 0.0
      %1588 = vmatpush.msra.mxu0 0.0
      %1589 = vmatpush.msra.mxu0 0.0
      %1590 = vmatpush.msra.mxu0 0.0
      %1591 = vmatpush.msra.mxu0 0.0
      %1592 = vmatpush.msra.mxu0 0.0
      %1593 = vmatpush.msra.mxu0 0.0
      %1594 = vmatpush.msra.mxu0 0.0
      %1595 = vmatpush.msra.mxu0 0.0
      %1596 = vmatpush.msra.mxu0 %v1554
      %1597 = vmatmul.f32.gmra.mxu0 %v1559
      %v1598 = vpop.f32.mrf.mxu0
      %v1599 = vadd.f32 0.0, %v1598
      %1600 = vdwg.mxu0
      %v1601 = vadd.f32 %v1528, %v1579
      %v1602 = vadd.f32 %v1548, %v1599
      %v1603 = vld [vmem:[%s3] sm:$0xff]
      %1605 = vset.pattern.permute.xlu0 0
      %1606 = vperm.xlu0 %1605, %v1603
      %v1607 = vpop.permute.xlu0 %1606
      %v1609 = vadd.f32 %v1601, %v1607
      %v1610 = vadd.f32 %v1602, %v1607
      %s1611 = scalar_lea.vmem %s235, 32
      %1612 = vst [vmem:[%s1611] sm:$0xff] %v1609
      %1613 = vst.msk [vmem:[%s1611 + $0x8] sm:$0xff] %vm238, %v1610
      %v1614 = vld [vmem:[%s868] ss:$8 sm:$0x3]
      %v1615 = vld [vmem:[%s870] ss:$8 sm:$0x3]
      %v1616 = vld [vmem:[%s872] ss:$8 sm:$0x3]
      %v1617 = vld [vmem:[%s874] ss:$8 sm:$0x3]
      %1622 = vst [vmem:[#allocation1] ss:$9 sm:$0xff] %v1614
      %s1623 = scalar_lea.vmem [#allocation1], 1
      %1624 = vst [vmem:[%s1623] ss:$9 sm:$0xff] %v1615
      %s1625 = scalar_lea.vmem [#allocation1], 2
      %1626 = vst [vmem:[%s1625] ss:$9 sm:$0xff] %v1616
      %s1627 = scalar_lea.vmem [#allocation1], 3
      %1628 = vst [vmem:[%s1627] ss:$9 sm:$0xff] %v1617
      %v1629 = vld [vmem:[#allocation1] sm:$0xff]
      %v1630 = vld [vmem:[#allocation1 + $0x9] sm:$0xff]
      %1633 = vst [vmem:[#allocation2] sm:$0xf] %v1629
      %1634 = vst.msk [vmem:[#allocation2 + $0x8] sm:$0xf] %vm282, %v1630
      %v1635 = vld [vmem:[%s868] ss:$8 sm:$0x3]
      %v1636 = vld [vmem:[%s870] ss:$8 sm:$0x3]
      %v1637 = vld [vmem:[%s872] ss:$8 sm:$0x3]
      %v1638 = vld [vmem:[%s874] ss:$8 sm:$0x3]
      %1643 = vst [vmem:[#allocation1] ss:$9 sm:$0xff] %v1635
      %s1644 = scalar_lea.vmem [#allocation1], 1
      %1645 = vst [vmem:[%s1644] ss:$9 sm:$0xff] %v1636
      %s1646 = scalar_lea.vmem [#allocation1], 2
      %1647 = vst [vmem:[%s1646] ss:$9 sm:$0xff] %v1637
      %s1648 = scalar_lea.vmem [#allocation1], 3
      %1649 = vst [vmem:[%s1648] ss:$9 sm:$0xff] %v1638
      %v1650 = vld [vmem:[#allocation1] sm:$0xff]
      %v1651 = vld [vmem:[#allocation1 + $0x9] sm:$0xff]
      %1652 = vrot.lane.b32.xlu0 %v1650, 112
      %v1653 = vpop.permute.xlu0 %1652
      %1654 = vrot.lane.b32.xlu0 %v1651, 112
      %v1655 = vpop.permute.xlu0 %1654
      %v1656 = vsel %vm305, %v1653, %v1655
      %1659 = vst [vmem:[#allocation2 + $0x10] sm:$0xf] %v1656
      %1660 = vst.msk [vmem:[#allocation2 + $0x18] sm:$0xf] %vm282, %v1655
      %v1661 = vld [vmem:[%s868] ss:$8 sm:$0x3]
      %v1662 = vld [vmem:[%s870] ss:$8 sm:$0x3]
      %v1663 = vld [vmem:[%s872] ss:$8 sm:$0x3]
      %v1664 = vld [vmem:[%s874] ss:$8 sm:$0x3]
      %1669 = vst [vmem:[#allocation1] ss:$9 sm:$0xff] %v1661
      %s1670 = scalar_lea.vmem [#allocation1], 1
      %1671 = vst [vmem:[%s1670] ss:$9 sm:$0xff] %v1662
      %s1672 = scalar_lea.vmem [#allocation1], 2
      %1673 = vst [vmem:[%s1672] ss:$9 sm:$0xff] %v1663
      %s1674 = scalar_lea.vmem [#allocation1], 3
      %1675 = vst [vmem:[%s1674] ss:$9 sm:$0xff] %v1664
      %v1676 = vld [vmem:[#allocation1] sm:$0xff]
      %v1677 = vld [vmem:[#allocation1 + $0x9] sm:$0xff]
      %1678 = vrot.lane.b32.xlu0 %v1676, 96
      %v1679 = vpop.permute.xlu0 %1678
      %1680 = vrot.lane.b32.xlu0 %v1677, 96
      %v1681 = vpop.permute.xlu0 %1680
      %v1682 = vsel %vm238, %v1679, %v1681
      %1685 = vst [vmem:[#allocation2 + $0x20] sm:$0xf] %v1682
      %1686 = vst.msk [vmem:[#allocation2 + $0x28] sm:$0xf] %vm282, %v1681
      %v1687 = vld [vmem:[%s1314] ss:$8 sm:$0x3]
      %v1688 = vld [vmem:[%s1316] ss:$8 sm:$0x3]
      %v1689 = vld [vmem:[%s1318] ss:$8 sm:$0x3]
      %v1690 = vld [vmem:[%s1320] ss:$8 sm:$0x3]
      %1695 = vst [vmem:[#allocation1] ss:$9 sm:$0xff] %v1687
      %s1696 = scalar_lea.vmem [#allocation1], 1
      %1697 = vst [vmem:[%s1696] ss:$9 sm:$0xff] %v1688
      %s1698 = scalar_lea.vmem [#allocation1], 2
      %1699 = vst [vmem:[%s1698] ss:$9 sm:$0xff] %v1689
      %s1700 = scalar_lea.vmem [#allocation1], 3
      %1701 = vst [vmem:[%s1700] ss:$9 sm:$0xff] %v1690
      %v1702 = vld [vmem:[#allocation1] sm:$0xff]
      %v1703 = vld [vmem:[#allocation1 + $0x9] sm:$0xff]
      %1706 = vst [vmem:[#allocation2 + $0x30] sm:$0xf] %v1702
      %1707 = vst.msk [vmem:[#allocation2 + $0x38] sm:$0xf] %vm282, %v1703
      %v1708 = vld [vmem:[%s1314] ss:$8 sm:$0x3]
      %v1709 = vld [vmem:[%s1316] ss:$8 sm:$0x3]
      %v1710 = vld [vmem:[%s1318] ss:$8 sm:$0x3]
      %v1711 = vld [vmem:[%s1320] ss:$8 sm:$0x3]
      %1716 = vst [vmem:[#allocation1] ss:$9 sm:$0xff] %v1708
      %s1717 = scalar_lea.vmem [#allocation1], 1
      %1718 = vst [vmem:[%s1717] ss:$9 sm:$0xff] %v1709
      %s1719 = scalar_lea.vmem [#allocation1], 2
      %1720 = vst [vmem:[%s1719] ss:$9 sm:$0xff] %v1710
      %s1721 = scalar_lea.vmem [#allocation1], 3
      %1722 = vst [vmem:[%s1721] ss:$9 sm:$0xff] %v1711
      %v1723 = vld [vmem:[#allocation1] sm:$0xff]
      %v1724 = vld [vmem:[#allocation1 + $0x9] sm:$0xff]
      %1725 = vrot.lane.b32.xlu0 %v1723, 112
      %v1726 = vpop.permute.xlu0 %1725
      %1727 = vrot.lane.b32.xlu0 %v1724, 112
      %v1728 = vpop.permute.xlu0 %1727
      %v1729 = vsel %vm305, %v1726, %v1728
      %1732 = vst [vmem:[#allocation2 + $0x40] sm:$0xf] %v1729
      %1733 = vst.msk [vmem:[#allocation2 + $0x48] sm:$0xf] %vm282, %v1728
      %v1734 = vld [vmem:[%s1314] ss:$8 sm:$0x3]
      %v1735 = vld [vmem:[%s1316] ss:$8 sm:$0x3]
      %v1736 = vld [vmem:[%s1318] ss:$8 sm:$0x3]
      %v1737 = vld [vmem:[%s1320] ss:$8 sm:$0x3]
      %1742 = vst [vmem:[#allocation1] ss:$9 sm:$0xff] %v1734
      %s1743 = scalar_lea.vmem [#allocation1], 1
      %1744 = vst [vmem:[%s1743] ss:$9 sm:$0xff] %v1735
      %s1745 = scalar_lea.vmem [#allocation1], 2
      %1746 = vst [vmem:[%s1745] ss:$9 sm:$0xff] %v1736
      %s1747 = scalar_lea.vmem [#allocation1], 3
      %1748 = vst [vmem:[%s1747] ss:$9 sm:$0xff] %v1737
      %v1749 = vld [vmem:[#allocation1] sm:$0xff]
      %v1750 = vld [vmem:[#allocation1 + $0x9] sm:$0xff]
      %1751 = vrot.lane.b32.xlu0 %v1749, 96
      %v1752 = vpop.permute.xlu0 %1751
      %1753 = vrot.lane.b32.xlu0 %v1750, 96
      %v1754 = vpop.permute.xlu0 %1753
      %v1755 = vsel %vm238, %v1752, %v1754
      %1758 = vst [vmem:[#allocation2 + $0x50] sm:$0xf] %v1755
      %1759 = vst.msk [vmem:[#allocation2 + $0x58] sm:$0xf] %vm282, %v1754
      %s1760 = scalar_lea.vmem %s225, 5
      %v1761 = vld [vmem:[%s1760] ss:$8 sm:$0x3]
      %s1762 = scalar_lea.vmem %s225, 21
      %v1763 = vld [vmem:[%s1762] ss:$8 sm:$0x3]
      %s1764 = scalar_lea.vmem %s225, 37
      %v1765 = vld [vmem:[%s1764] ss:$8 sm:$0x3]
      %s1766 = scalar_lea.vmem %s225, 53
      %v1767 = vld [vmem:[%s1766] ss:$8 sm:$0x3]
      %1772 = vst [vmem:[#allocation1] ss:$9 sm:$0xff] %v1761
      %s1773 = scalar_lea.vmem [#allocation1], 1
      %1774 = vst [vmem:[%s1773] ss:$9 sm:$0xff] %v1763
      %s1775 = scalar_lea.vmem [#allocation1], 2
      %1776 = vst [vmem:[%s1775] ss:$9 sm:$0xff] %v1765
      %s1777 = scalar_lea.vmem [#allocation1], 3
      %1778 = vst [vmem:[%s1777] ss:$9 sm:$0xff] %v1767
      %v1779 = vld [vmem:[#allocation1] sm:$0xff]
      %v1780 = vld [vmem:[#allocation1 + $0x9] sm:$0xff]
      %1783 = vst [vmem:[#allocation2 + $0x60] sm:$0xf] %v1779
      %1784 = vst.msk [vmem:[#allocation2 + $0x68] sm:$0xf] %vm282, %v1780
      %v1785 = vld [vmem:[%s1760] ss:$8 sm:$0x3]
      %v1786 = vld [vmem:[%s1762] ss:$8 sm:$0x3]
      %v1787 = vld [vmem:[%s1764] ss:$8 sm:$0x3]
      %v1788 = vld [vmem:[%s1766] ss:$8 sm:$0x3]
      %1793 = vst [vmem:[#allocation1] ss:$9 sm:$0xff] %v1785
      %s1794 = scalar_lea.vmem [#allocation1], 1
      %1795 = vst [vmem:[%s1794] ss:$9 sm:$0xff] %v1786
      %s1796 = scalar_lea.vmem [#allocation1], 2
      %1797 = vst [vmem:[%s1796] ss:$9 sm:$0xff] %v1787
      %s1798 = scalar_lea.vmem [#allocation1], 3
      %1799 = vst [vmem:[%s1798] ss:$9 sm:$0xff] %v1788
      %v1800 = vld [vmem:[#allocation1] sm:$0xff]
      %v1801 = vld [vmem:[#allocation1 + $0x9] sm:$0xff]
      %1802 = vrot.lane.b32.xlu0 %v1800, 112
      %v1803 = vpop.permute.xlu0 %1802
      %1804 = vrot.lane.b32.xlu0 %v1801, 112
      %v1805 = vpop.permute.xlu0 %1804
      %v1806 = vsel %vm305, %v1803, %v1805
      %1809 = vst [vmem:[#allocation2 + $0x70] sm:$0xf] %v1806
      %1810 = vst.msk [vmem:[#allocation2 + $0x78] sm:$0xf] %vm282, %v1805
      %v1811 = vld [vmem:[%s1760] ss:$8 sm:$0x3]
      %v1812 = vld [vmem:[%s1762] ss:$8 sm:$0x3]
      %v1813 = vld [vmem:[%s1764] ss:$8 sm:$0x3]
      %v1814 = vld [vmem:[%s1766] ss:$8 sm:$0x3]
      %1819 = vst [vmem:[#allocation1] ss:$9 sm:$0xff] %v1811
      %s1820 = scalar_lea.vmem [#allocation1], 1
      %1821 = vst [vmem:[%s1820] ss:$9 sm:$0xff] %v1812
      %s1822 = scalar_lea.vmem [#allocation1], 2
      %1823 = vst [vmem:[%s1822] ss:$9 sm:$0xff] %v1813
      %s1824 = scalar_lea.vmem [#allocation1], 3
      %1825 = vst [vmem:[%s1824] ss:$9 sm:$0xff] %v1814
      %v1826 = vld [vmem:[#allocation1] sm:$0xff]
      %v1827 = vld [vmem:[#allocation1 + $0x9] sm:$0xff]
      %1828 = vrot.lane.b32.xlu0 %v1826, 96
      %v1829 = vpop.permute.xlu0 %1828
      %1830 = vrot.lane.b32.xlu0 %v1827, 96
      %v1831 = vpop.permute.xlu0 %1830
      %v1832 = vsel %vm238, %v1829, %v1831
      %1835 = vst [vmem:[#allocation2 + $0x80] sm:$0xf] %v1832
      %1836 = vst.msk [vmem:[#allocation2 + $0x88] sm:$0xf] %vm282, %v1831
      %v1837 = vld [vmem:[#allocation2] sm:$0xff]
      %v1838 = vld [vmem:[#allocation2 + $0x8] sm:$0xff]
      %v1839 = vld [vmem:[#allocation2 + $0x10] sm:$0xff]
      %v1840 = vld [vmem:[#allocation2 + $0x18] sm:$0xff]
      %v1841 = vld [vmem:[#allocation2 + $0x20] sm:$0xff]
      %v1842 = vld [vmem:[#allocation2 + $0x28] sm:$0xff]
      %v1843 = vld [vmem:[#allocation2 + $0x30] sm:$0xff]
      %v1844 = vld [vmem:[#allocation2 + $0x38] sm:$0xff]
      %v1845 = vld [vmem:[#allocation2 + $0x40] sm:$0xff]
      %v1846 = vld [vmem:[#allocation2 + $0x48] sm:$0xff]
      %v1847 = vld [vmem:[#allocation2 + $0x50] sm:$0xff]
      %v1848 = vld [vmem:[#allocation2 + $0x58] sm:$0xff]
      %v1849 = vld [vmem:[#allocation2 + $0x60] sm:$0xff]
      %v1850 = vld [vmem:[#allocation2 + $0x68] sm:$0xff]
      %v1851 = vld [vmem:[#allocation2 + $0x70] sm:$0xff]
      %v1852 = vld [vmem:[#allocation2 + $0x78] sm:$0xff]
      %v1853 = vld [vmem:[#allocation2 + $0x80] sm:$0xff]
      %v1854 = vld [vmem:[#allocation2 + $0x88] sm:$0xff]
      %1855 = vmatpush.msra.mxu0 0.0
      %1856 = vmatpush.msra.mxu0 0.0
      %1857 = vmatpush.msra.mxu0 0.0
      %1858 = vmatpush.msra.mxu0 0.0
      %1859 = vmatpush.msra.mxu0 0.0
      %1860 = vmatpush.msra.mxu0 0.0
      %1861 = vmatpush.msra.mxu0 0.0
      %1862 = vmatpush.msra.mxu0 %v1853
      %1863 = vmatpush.msra.mxu0 %v1851
      %1864 = vmatpush.msra.mxu0 %v1849
      %1865 = vmatpush.msra.mxu0 %v1847
      %1866 = vmatpush.msra.mxu0 %v1845
      %1867 = vmatpush.msra.mxu0 %v1843
      %1868 = vmatpush.msra.mxu0 %v1841
      %1869 = vmatpush.msra.mxu0 %v1839
      %1870 = vmatpush.msra.mxu0 %v1837
      %1871 = vmatmul.f32.gmra.mxu0 %v511
      %v1872 = vpop.f32.mrf.mxu0
      %v1873 = vadd.f32 0.0, %v1872
      %1874 = vdwg.mxu0
      %1875 = vmatpush.msra.mxu0 0.0
      %1876 = vmatpush.msra.mxu0 0.0
      %1877 = vmatpush.msra.mxu0 0.0
      %1878 = vmatpush.msra.mxu0 0.0
      %1879 = vmatpush.msra.mxu0 0.0
      %1880 = vmatpush.msra.mxu0 0.0
      %1881 = vmatpush.msra.mxu0 0.0
      %1882 = vmatpush.msra.mxu0 %v1854
      %1883 = vmatpush.msra.mxu0 %v1852
      %1884 = vmatpush.msra.mxu0 %v1850
      %1885 = vmatpush.msra.mxu0 %v1848
      %1886 = vmatpush.msra.mxu0 %v1846
      %1887 = vmatpush.msra.mxu0 %v1844
      %1888 = vmatpush.msra.mxu0 %v1842
      %1889 = vmatpush.msra.mxu0 %v1840
      %1890 = vmatpush.msra.mxu0 %v1838
      %1891 = vmatmul.f32.gmra.mxu0 %v511
      %v1892 = vpop.f32.mrf.mxu0
      %v1893 = vadd.f32 0.0, %v1892
      %1894 = vdwg.mxu0
      %1895 = vst [vmem:[#allocation3] sm:$0xff] %v1873
      %1896 = vst.msk [vmem:[#allocation3 + $0x8] sm:$0xff] %vm238, %v1893
      %v1897 = vld [vmem:[%s2] sm:$0xff]
      %v1898 = vld [vmem:[#allocation3] sm:$0xff]
      %v1899 = vld [vmem:[#allocation3 + $0x8] sm:$0xff]
      %v1900 = vld [vmem:[%s558] sm:$0xff]
      %1903 = vrot.lane.b32.xlu0 %v1898, 127
      %v1904 = vpop.permute.xlu0 %1903
      %1905 = vrot.lane.b32.xlu0 %v1899, 127
      %v1906 = vpop.permute.xlu0 %1905
      %v1907 = vsel %vm566, %v1904, %v1906
      %v1911 = vsel %vm570, %v1900, 0
      %1913 = vmatpush.msra.mxu0 0.0
      %1914 = vmatpush.msra.mxu0 0.0
      %1915 = vmatpush.msra.mxu0 0.0
      %1916 = vmatpush.msra.mxu0 0.0
      %1917 = vmatpush.msra.mxu0 0.0
      %1918 = vmatpush.msra.mxu0 0.0
      %1919 = vmatpush.msra.mxu0 0.0
      %1920 = vmatpush.msra.mxu0 0.0
      %1921 = vmatpush.msra.mxu0 0.0
      %1922 = vmatpush.msra.mxu0 0.0
      %1923 = vmatpush.msra.mxu0 0.0
      %1924 = vmatpush.msra.mxu0 0.0
      %1925 = vmatpush.msra.mxu0 0.0
      %1926 = vmatpush.msra.mxu0 0.0
      %1927 = vmatpush.msra.mxu0 0.0
      %1928 = vmatpush.msra.mxu0 %v1907
      %1929 = vmatmul.f32.gmra.mxu0 %v1911
      %v1930 = vpop.f32.mrf.mxu0
      %v1931 = vadd.f32 0.0, %v1930
      %1932 = vdwg.mxu0
      %1933 = vmatpush.msra.mxu0 0.0
      %1934 = vmatpush.msra.mxu0 0.0
      %1935 = vmatpush.msra.mxu0 0.0
      %1936 = vmatpush.msra.mxu0 0.0
      %1937 = vmatpush.msra.mxu0 0.0
      %1938 = vmatpush.msra.mxu0 0.0
      %1939 = vmatpush.msra.mxu0 0.0
      %1940 = vmatpush.msra.mxu0 0.0
      %1941 = vmatpush.msra.mxu0 0.0
      %1942 = vmatpush.msra.mxu0 0.0
      %1943 = vmatpush.msra.mxu0 0.0
      %1944 = vmatpush.msra.mxu0 0.0
      %1945 = vmatpush.msra.mxu0 0.0
      %1946 = vmatpush.msra.mxu0 0.0
      %1947 = vmatpush.msra.mxu0 0.0
      %1948 = vmatpush.msra.mxu0 %v1906
      %1949 = vmatmul.f32.gmra.mxu0 %v1911
      %v1950 = vpop.f32.mrf.mxu0
      %v1951 = vadd.f32 0.0, %v1950
      %1952 = vdwg.mxu0
      %v1954 = vsel %vm570, %v1897, 0
      %1956 = vmatpush.msra.mxu0 0.0
      %1957 = vmatpush.msra.mxu0 0.0
      %1958 = vmatpush.msra.mxu0 0.0
      %1959 = vmatpush.msra.mxu0 0.0
      %1960 = vmatpush.msra.mxu0 0.0
      %1961 = vmatpush.msra.mxu0 0.0
      %1962 = vmatpush.msra.mxu0 0.0
      %1963 = vmatpush.msra.mxu0 0.0
      %1964 = vmatpush.msra.mxu0 0.0
      %1965 = vmatpush.msra.mxu0 0.0
      %1966 = vmatpush.msra.mxu0 0.0
      %1967 = vmatpush.msra.mxu0 0.0
      %1968 = vmatpush.msra.mxu0 0.0
      %1969 = vmatpush.msra.mxu0 0.0
      %1970 = vmatpush.msra.mxu0 0.0
      %1971 = vmatpush.msra.mxu0 %v1898
      %1972 = vmatmul.f32.gmra.mxu0 %v1954
      %v1973 = vpop.f32.mrf.mxu0
      %v1974 = vadd.f32 %v1931, %v1973
      %1975 = vdwg.mxu0
      %1976 = vmatpush.msra.mxu0 0.0
      %1977 = vmatpush.msra.mxu0 0.0
      %1978 = vmatpush.msra.mxu0 0.0
      %1979 = vmatpush.msra.mxu0 0.0
      %1980 = vmatpush.msra.mxu0 0.0
      %1981 = vmatpush.msra.mxu0 0.0
      %1982 = vmatpush.msra.mxu0 0.0
      %1983 = vmatpush.msra.mxu0 0.0
      %1984 = vmatpush.msra.mxu0 0.0
      %1985 = vmatpush.msra.mxu0 0.0
      %1986 = vmatpush.msra.mxu0 0.0
      %1987 = vmatpush.msra.mxu0 0.0
      %1988 = vmatpush.msra.mxu0 0.0
      %1989 = vmatpush.msra.mxu0 0.0
      %1990 = vmatpush.msra.mxu0 0.0
      %1991 = vmatpush.msra.mxu0 %v1899
      %1992 = vmatmul.f32.gmra.mxu0 %v1954
      %v1993 = vpop.f32.mrf.mxu0
      %v1994 = vadd.f32 %v1951, %v1993
      %1995 = vdwg.mxu0
      %v1996 = vld [vmem:[%s657] sm:$0xff]
      %1997 = vrot.lane.b32.xlu0 %v1898, 126
      %v1998 = vpop.permute.xlu0 %1997
      %1999 = vrot.lane.b32.xlu0 %v1899, 126
      %v2000 = vpop.permute.xlu0 %1999
      %v2001 = vsel %vm663, %v1998, %v2000
      %v2005 = vsel %vm570, %v1996, 0
      %2007 = vmatpush.msra.mxu0 0.0
      %2008 = vmatpush.msra.mxu0 0.0
      %2009 = vmatpush.msra.mxu0 0.0
      %2010 = vmatpush.msra.mxu0 0.0
      %2011 = vmatpush.msra.mxu0 0.0
      %2012 = vmatpush.msra.mxu0 0.0
      %2013 = vmatpush.msra.mxu0 0.0
      %2014 = vmatpush.msra.mxu0 0.0
      %2015 = vmatpush.msra.mxu0 0.0
      %2016 = vmatpush.msra.mxu0 0.0
      %2017 = vmatpush.msra.mxu0 0.0
      %2018 = vmatpush.msra.mxu0 0.0
      %2019 = vmatpush.msra.mxu0 0.0
      %2020 = vmatpush.msra.mxu0 0.0
      %2021 = vmatpush.msra.mxu0 0.0
      %2022 = vmatpush.msra.mxu0 %v2001
      %2023 = vmatmul.f32.gmra.mxu0 %v2005
      %v2024 = vpop.f32.mrf.mxu0
      %v2025 = vadd.f32 0.0, %v2024
      %2026 = vdwg.mxu0
      %2027 = vmatpush.msra.mxu0 0.0
      %2028 = vmatpush.msra.mxu0 0.0
      %2029 = vmatpush.msra.mxu0 0.0
      %2030 = vmatpush.msra.mxu0 0.0
      %2031 = vmatpush.msra.mxu0 0.0
      %2032 = vmatpush.msra.mxu0 0.0
      %2033 = vmatpush.msra.mxu0 0.0
      %2034 = vmatpush.msra.mxu0 0.0
      %2035 = vmatpush.msra.mxu0 0.0
      %2036 = vmatpush.msra.mxu0 0.0
      %2037 = vmatpush.msra.mxu0 0.0
      %2038 = vmatpush.msra.mxu0 0.0
      %2039 = vmatpush.msra.mxu0 0.0
      %2040 = vmatpush.msra.mxu0 0.0
      %2041 = vmatpush.msra.mxu0 0.0
      %2042 = vmatpush.msra.mxu0 %v2000
      %2043 = vmatmul.f32.gmra.mxu0 %v2005
      %v2044 = vpop.f32.mrf.mxu0
      %v2045 = vadd.f32 0.0, %v2044
      %2046 = vdwg.mxu0
      %v2047 = vadd.f32 %v1974, %v2025
      %v2048 = vadd.f32 %v1994, %v2045
      %v2049 = vld [vmem:[%s3] sm:$0xff]
      %2051 = vset.pattern.permute.xlu0 0
      %2052 = vperm.xlu0 %2051, %v2049
      %v2053 = vpop.permute.xlu0 %2052
      %v2055 = vadd.f32 %v2047, %v2053
      %v2056 = vadd.f32 %v2048, %v2053
      %s2057 = scalar_lea.vmem %s235, 48
      %2058 = vst [vmem:[%s2057] sm:$0xff] %v2055
      %2059 = vst.msk [vmem:[%s2057 + $0x8] sm:$0xff] %vm238, %v2056
      %v2060 = vld [vmem:[%s1314] ss:$8 sm:$0x3]
      %v2061 = vld [vmem:[%s1316] ss:$8 sm:$0x3]
      %v2062 = vld [vmem:[%s1318] ss:$8 sm:$0x3]
      %v2063 = vld [vmem:[%s1320] ss:$8 sm:$0x3]
      %2068 = vst [vmem:[#allocation1] ss:$9 sm:$0xff] %v2060
      %s2069 = scalar_lea.vmem [#allocation1], 1
      %2070 = vst [vmem:[%s2069] ss:$9 sm:$0xff] %v2061
      %s2071 = scalar_lea.vmem [#allocation1], 2
      %2072 = vst [vmem:[%s2071] ss:$9 sm:$0xff] %v2062
      %s2073 = scalar_lea.vmem [#allocation1], 3
      %2074 = vst [vmem:[%s2073] ss:$9 sm:$0xff] %v2063
      %v2075 = vld [vmem:[#allocation1] sm:$0xff]
      %v2076 = vld [vmem:[#allocation1 + $0x9] sm:$0xff]
      %2079 = vst [vmem:[#allocation2] sm:$0xf] %v2075
      %2080 = vst.msk [vmem:[#allocation2 + $0x8] sm:$0xf] %vm282, %v2076
      %v2081 = vld [vmem:[%s1314] ss:$8 sm:$0x3]
      %v2082 = vld [vmem:[%s1316] ss:$8 sm:$0x3]
      %v2083 = vld [vmem:[%s1318] ss:$8 sm:$0x3]
      %v2084 = vld [vmem:[%s1320] ss:$8 sm:$0x3]
      %2089 = vst [vmem:[#allocation1] ss:$9 sm:$0xff] %v2081
      %s2090 = scalar_lea.vmem [#allocation1], 1
      %2091 = vst [vmem:[%s2090] ss:$9 sm:$0xff] %v2082
      %s2092 = scalar_lea.vmem [#allocation1], 2
      %2093 = vst [vmem:[%s2092] ss:$9 sm:$0xff] %v2083
      %s2094 = scalar_lea.vmem [#allocation1], 3
      %2095 = vst [vmem:[%s2094] ss:$9 sm:$0xff] %v2084
      %v2096 = vld [vmem:[#allocation1] sm:$0xff]
      %v2097 = vld [vmem:[#allocation1 + $0x9] sm:$0xff]
      %2098 = vrot.lane.b32.xlu0 %v2096, 112
      %v2099 = vpop.permute.xlu0 %2098
      %2100 = vrot.lane.b32.xlu0 %v2097, 112
      %v2101 = vpop.permute.xlu0 %2100
      %v2102 = vsel %vm305, %v2099, %v2101
      %2105 = vst [vmem:[#allocation2 + $0x10] sm:$0xf] %v2102
      %2106 = vst.msk [vmem:[#allocation2 + $0x18] sm:$0xf] %vm282, %v2101
      %v2107 = vld [vmem:[%s1314] ss:$8 sm:$0x3]
      %v2108 = vld [vmem:[%s1316] ss:$8 sm:$0x3]
      %v2109 = vld [vmem:[%s1318] ss:$8 sm:$0x3]
      %v2110 = vld [vmem:[%s1320] ss:$8 sm:$0x3]
      %2115 = vst [vmem:[#allocation1] ss:$9 sm:$0xff] %v2107
      %s2116 = scalar_lea.vmem [#allocation1], 1
      %2117 = vst [vmem:[%s2116] ss:$9 sm:$0xff] %v2108
      %s2118 = scalar_lea.vmem [#allocation1], 2
      %2119 = vst [vmem:[%s2118] ss:$9 sm:$0xff] %v2109
      %s2120 = scalar_lea.vmem [#allocation1], 3
      %2121 = vst [vmem:[%s2120] ss:$9 sm:$0xff] %v2110
      %v2122 = vld [vmem:[#allocation1] sm:$0xff]
      %v2123 = vld [vmem:[#allocation1 + $0x9] sm:$0xff]
      %2124 = vrot.lane.b32.xlu0 %v2122, 96
      %v2125 = vpop.permute.xlu0 %2124
      %2126 = vrot.lane.b32.xlu0 %v2123, 96
      %v2127 = vpop.permute.xlu0 %2126
      %v2128 = vsel %vm238, %v2125, %v2127
      %2131 = vst [vmem:[#allocation2 + $0x20] sm:$0xf] %v2128
      %2132 = vst.msk [vmem:[#allocation2 + $0x28] sm:$0xf] %vm282, %v2127
      %v2133 = vld [vmem:[%s1760] ss:$8 sm:$0x3]
      %v2134 = vld [vmem:[%s1762] ss:$8 sm:$0x3]
      %v2135 = vld [vmem:[%s1764] ss:$8 sm:$0x3]
      %v2136 = vld [vmem:[%s1766] ss:$8 sm:$0x3]
      %2141 = vst [vmem:[#allocation1] ss:$9 sm:$0xff] %v2133
      %s2142 = scalar_lea.vmem [#allocation1], 1
      %2143 = vst [vmem:[%s2142] ss:$9 sm:$0xff] %v2134
      %s2144 = scalar_lea.vmem [#allocation1], 2
      %2145 = vst [vmem:[%s2144] ss:$9 sm:$0xff] %v2135
      %s2146 = scalar_lea.vmem [#allocation1], 3
      %2147 = vst [vmem:[%s2146] ss:$9 sm:$0xff] %v2136
      %v2148 = vld [vmem:[#allocation1] sm:$0xff]
      %v2149 = vld [vmem:[#allocation1 + $0x9] sm:$0xff]
      %2152 = vst [vmem:[#allocation2 + $0x30] sm:$0xf] %v2148
      %2153 = vst.msk [vmem:[#allocation2 + $0x38] sm:$0xf] %vm282, %v2149
      %v2154 = vld [vmem:[%s1760] ss:$8 sm:$0x3]
      %v2155 = vld [vmem:[%s1762] ss:$8 sm:$0x3]
      %v2156 = vld [vmem:[%s1764] ss:$8 sm:$0x3]
      %v2157 = vld [vmem:[%s1766] ss:$8 sm:$0x3]
      %2162 = vst [vmem:[#allocation1] ss:$9 sm:$0xff] %v2154
      %s2163 = scalar_lea.vmem [#allocation1], 1
      %2164 = vst [vmem:[%s2163] ss:$9 sm:$0xff] %v2155
      %s2165 = scalar_lea.vmem [#allocation1], 2
      %2166 = vst [vmem:[%s2165] ss:$9 sm:$0xff] %v2156
      %s2167 = scalar_lea.vmem [#allocation1], 3
      %2168 = vst [vmem:[%s2167] ss:$9 sm:$0xff] %v2157
      %v2169 = vld [vmem:[#allocation1] sm:$0xff]
      %v2170 = vld [vmem:[#allocation1 + $0x9] sm:$0xff]
      %2171 = vrot.lane.b32.xlu0 %v2169, 112
      %v2172 = vpop.permute.xlu0 %2171
      %2173 = vrot.lane.b32.xlu0 %v2170, 112
      %v2174 = vpop.permute.xlu0 %2173
      %v2175 = vsel %vm305, %v2172, %v2174
      %2178 = vst [vmem:[#allocation2 + $0x40] sm:$0xf] %v2175
      %2179 = vst.msk [vmem:[#allocation2 + $0x48] sm:$0xf] %vm282, %v2174
      %v2180 = vld [vmem:[%s1760] ss:$8 sm:$0x3]
      %v2181 = vld [vmem:[%s1762] ss:$8 sm:$0x3]
      %v2182 = vld [vmem:[%s1764] ss:$8 sm:$0x3]
      %v2183 = vld [vmem:[%s1766] ss:$8 sm:$0x3]
      %2188 = vst [vmem:[#allocation1] ss:$9 sm:$0xff] %v2180
      %s2189 = scalar_lea.vmem [#allocation1], 1
      %2190 = vst [vmem:[%s2189] ss:$9 sm:$0xff] %v2181
      %s2191 = scalar_lea.vmem [#allocation1], 2
      %2192 = vst [vmem:[%s2191] ss:$9 sm:$0xff] %v2182
      %s2193 = scalar_lea.vmem [#allocation1], 3
      %2194 = vst [vmem:[%s2193] ss:$9 sm:$0xff] %v2183
      %v2195 = vld [vmem:[#allocation1] sm:$0xff]
      %v2196 = vld [vmem:[#allocation1 + $0x9] sm:$0xff]
      %2197 = vrot.lane.b32.xlu0 %v2195, 96
      %v2198 = vpop.permute.xlu0 %2197
      %2199 = vrot.lane.b32.xlu0 %v2196, 96
      %v2200 = vpop.permute.xlu0 %2199
      %v2201 = vsel %vm238, %v2198, %v2200
      %2204 = vst [vmem:[#allocation2 + $0x50] sm:$0xf] %v2201
      %2205 = vst.msk [vmem:[#allocation2 + $0x58] sm:$0xf] %vm282, %v2200
      %s2206 = scalar_lea.vmem %s225, 6
      %v2207 = vld [vmem:[%s2206] ss:$8 sm:$0x3]
      %s2208 = scalar_lea.vmem %s225, 22
      %v2209 = vld [vmem:[%s2208] ss:$8 sm:$0x3]
      %s2210 = scalar_lea.vmem %s225, 38
      %v2211 = vld [vmem:[%s2210] ss:$8 sm:$0x3]
      %s2212 = scalar_lea.vmem %s225, 54
      %v2213 = vld [vmem:[%s2212] ss:$8 sm:$0x3]
      %2218 = vst [vmem:[#allocation1] ss:$9 sm:$0xff] %v2207
      %s2219 = scalar_lea.vmem [#allocation1], 1
      %2220 = vst [vmem:[%s2219] ss:$9 sm:$0xff] %v2209
      %s2221 = scalar_lea.vmem [#allocation1], 2
      %2222 = vst [vmem:[%s2221] ss:$9 sm:$0xff] %v2211
      %s2223 = scalar_lea.vmem [#allocation1], 3
      %2224 = vst [vmem:[%s2223] ss:$9 sm:$0xff] %v2213
      %v2225 = vld [vmem:[#allocation1] sm:$0xff]
      %v2226 = vld [vmem:[#allocation1 + $0x9] sm:$0xff]
      %2229 = vst [vmem:[#allocation2 + $0x60] sm:$0xf] %v2225
      %2230 = vst.msk [vmem:[#allocation2 + $0x68] sm:$0xf] %vm282, %v2226
      %v2231 = vld [vmem:[%s2206] ss:$8 sm:$0x3]
      %v2232 = vld [vmem:[%s2208] ss:$8 sm:$0x3]
      %v2233 = vld [vmem:[%s2210] ss:$8 sm:$0x3]
      %v2234 = vld [vmem:[%s2212] ss:$8 sm:$0x3]
      %2239 = vst [vmem:[#allocation1] ss:$9 sm:$0xff] %v2231
      %s2240 = scalar_lea.vmem [#allocation1], 1
      %2241 = vst [vmem:[%s2240] ss:$9 sm:$0xff] %v2232
      %s2242 = scalar_lea.vmem [#allocation1], 2
      %2243 = vst [vmem:[%s2242] ss:$9 sm:$0xff] %v2233
      %s2244 = scalar_lea.vmem [#allocation1], 3
      %2245 = vst [vmem:[%s2244] ss:$9 sm:$0xff] %v2234
      %v2246 = vld [vmem:[#allocation1] sm:$0xff]
      %v2247 = vld [vmem:[#allocation1 + $0x9] sm:$0xff]
      %2248 = vrot.lane.b32.xlu0 %v2246, 112
      %v2249 = vpop.permute.xlu0 %2248
      %2250 = vrot.lane.b32.xlu0 %v2247, 112
      %v2251 = vpop.permute.xlu0 %2250
      %v2252 = vsel %vm305, %v2249, %v2251
      %2255 = vst [vmem:[#allocation2 + $0x70] sm:$0xf] %v2252
      %2256 = vst.msk [vmem:[#allocation2 + $0x78] sm:$0xf] %vm282, %v2251
      %v2257 = vld [vmem:[%s2206] ss:$8 sm:$0x3]
      %v2258 = vld [vmem:[%s2208] ss:$8 sm:$0x3]
      %v2259 = vld [vmem:[%s2210] ss:$8 sm:$0x3]
      %v2260 = vld [vmem:[%s2212] ss:$8 sm:$0x3]
      %2265 = vst [vmem:[#allocation1] ss:$9 sm:$0xff] %v2257
      %s2266 = scalar_lea.vmem [#allocation1], 1
      %2267 = vst [vmem:[%s2266] ss:$9 sm:$0xff] %v2258
      %s2268 = scalar_lea.vmem [#allocation1], 2
      %2269 = vst [vmem:[%s2268] ss:$9 sm:$0xff] %v2259
      %s2270 = scalar_lea.vmem [#allocation1], 3
      %2271 = vst [vmem:[%s2270] ss:$9 sm:$0xff] %v2260
      %v2272 = vld [vmem:[#allocation1] sm:$0xff]
      %v2273 = vld [vmem:[#allocation1 + $0x9] sm:$0xff]
      %2274 = vrot.lane.b32.xlu0 %v2272, 96
      %v2275 = vpop.permute.xlu0 %2274
      %2276 = vrot.lane.b32.xlu0 %v2273, 96
      %v2277 = vpop.permute.xlu0 %2276
      %v2278 = vsel %vm238, %v2275, %v2277
      %2281 = vst [vmem:[#allocation2 + $0x80] sm:$0xf] %v2278
      %2282 = vst.msk [vmem:[#allocation2 + $0x88] sm:$0xf] %vm282, %v2277
      %v2283 = vld [vmem:[#allocation2] sm:$0xff]
      %v2284 = vld [vmem:[#allocation2 + $0x8] sm:$0xff]
      %v2285 = vld [vmem:[#allocation2 + $0x10] sm:$0xff]
      %v2286 = vld [vmem:[#allocation2 + $0x18] sm:$0xff]
      %v2287 = vld [vmem:[#allocation2 + $0x20] sm:$0xff]
      %v2288 = vld [vmem:[#allocation2 + $0x28] sm:$0xff]
      %v2289 = vld [vmem:[#allocation2 + $0x30] sm:$0xff]
      %v2290 = vld [vmem:[#allocation2 + $0x38] sm:$0xff]
      %v2291 = vld [vmem:[#allocation2 + $0x40] sm:$0xff]
      %v2292 = vld [vmem:[#allocation2 + $0x48] sm:$0xff]
      %v2293 = vld [vmem:[#allocation2 + $0x50] sm:$0xff]
      %v2294 = vld [vmem:[#allocation2 + $0x58] sm:$0xff]
      %v2295 = vld [vmem:[#allocation2 + $0x60] sm:$0xff]
      %v2296 = vld [vmem:[#allocation2 + $0x68] sm:$0xff]
      %v2297 = vld [vmem:[#allocation2 + $0x70] sm:$0xff]
      %v2298 = vld [vmem:[#allocation2 + $0x78] sm:$0xff]
      %v2299 = vld [vmem:[#allocation2 + $0x80] sm:$0xff]
      %v2300 = vld [vmem:[#allocation2 + $0x88] sm:$0xff]
      %2301 = vmatpush.msra.mxu0 0.0
      %2302 = vmatpush.msra.mxu0 0.0
      %2303 = vmatpush.msra.mxu0 0.0
      %2304 = vmatpush.msra.mxu0 0.0
      %2305 = vmatpush.msra.mxu0 0.0
      %2306 = vmatpush.msra.mxu0 0.0
      %2307 = vmatpush.msra.mxu0 0.0
      %2308 = vmatpush.msra.mxu0 %v2299
      %2309 = vmatpush.msra.mxu0 %v2297
      %2310 = vmatpush.msra.mxu0 %v2295
      %2311 = vmatpush.msra.mxu0 %v2293
      %2312 = vmatpush.msra.mxu0 %v2291
      %2313 = vmatpush.msra.mxu0 %v2289
      %2314 = vmatpush.msra.mxu0 %v2287
      %2315 = vmatpush.msra.mxu0 %v2285
      %2316 = vmatpush.msra.mxu0 %v2283
      %2317 = vmatmul.f32.gmra.mxu0 %v511
      %v2318 = vpop.f32.mrf.mxu0
      %v2319 = vadd.f32 0.0, %v2318
      %2320 = vdwg.mxu0
      %2321 = vmatpush.msra.mxu0 0.0
      %2322 = vmatpush.msra.mxu0 0.0
      %2323 = vmatpush.msra.mxu0 0.0
      %2324 = vmatpush.msra.mxu0 0.0
      %2325 = vmatpush.msra.mxu0 0.0
      %2326 = vmatpush.msra.mxu0 0.0
      %2327 = vmatpush.msra.mxu0 0.0
      %2328 = vmatpush.msra.mxu0 %v2300
      %2329 = vmatpush.msra.mxu0 %v2298
      %2330 = vmatpush.msra.mxu0 %v2296
      %2331 = vmatpush.msra.mxu0 %v2294
      %2332 = vmatpush.msra.mxu0 %v2292
      %2333 = vmatpush.msra.mxu0 %v2290
      %2334 = vmatpush.msra.mxu0 %v2288
      %2335 = vmatpush.msra.mxu0 %v2286
      %2336 = vmatpush.msra.mxu0 %v2284
      %2337 = vmatmul.f32.gmra.mxu0 %v511
      %v2338 = vpop.f32.mrf.mxu0
      %v2339 = vadd.f32 0.0, %v2338
      %2340 = vdwg.mxu0
      %2341 = vst [vmem:[#allocation3] sm:$0xff] %v2319
      %2342 = vst.msk [vmem:[#allocation3 + $0x8] sm:$0xff] %vm238, %v2339
      %v2343 = vld [vmem:[%s2] sm:$0xff]
      %v2344 = vld [vmem:[#allocation3] sm:$0xff]
      %v2345 = vld [vmem:[#allocation3 + $0x8] sm:$0xff]
      %v2346 = vld [vmem:[%s558] sm:$0xff]
      %2349 = vrot.lane.b32.xlu0 %v2344, 127
      %v2350 = vpop.permute.xlu0 %2349
      %2351 = vrot.lane.b32.xlu0 %v2345, 127
      %v2352 = vpop.permute.xlu0 %2351
      %v2353 = vsel %vm566, %v2350, %v2352
      %v2357 = vsel %vm570, %v2346, 0
      %2359 = vmatpush.msra.mxu0 0.0
      %2360 = vmatpush.msra.mxu0 0.0
      %2361 = vmatpush.msra.mxu0 0.0
      %2362 = vmatpush.msra.mxu0 0.0
      %2363 = vmatpush.msra.mxu0 0.0
      %2364 = vmatpush.msra.mxu0 0.0
      %2365 = vmatpush.msra.mxu0 0.0
      %2366 = vmatpush.msra.mxu0 0.0
      %2367 = vmatpush.msra.mxu0 0.0
      %2368 = vmatpush.msra.mxu0 0.0
      %2369 = vmatpush.msra.mxu0 0.0
      %2370 = vmatpush.msra.mxu0 0.0
      %2371 = vmatpush.msra.mxu0 0.0
      %2372 = vmatpush.msra.mxu0 0.0
      %2373 = vmatpush.msra.mxu0 0.0
      %2374 = vmatpush.msra.mxu0 %v2353
      %2375 = vmatmul.f32.gmra.mxu0 %v2357
      %v2376 = vpop.f32.mrf.mxu0
      %v2377 = vadd.f32 0.0, %v2376
      %2378 = vdwg.mxu0
      %2379 = vmatpush.msra.mxu0 0.0
      %2380 = vmatpush.msra.mxu0 0.0
      %2381 = vmatpush.msra.mxu0 0.0
      %2382 = vmatpush.msra.mxu0 0.0
      %2383 = vmatpush.msra.mxu0 0.0
      %2384 = vmatpush.msra.mxu0 0.0
      %2385 = vmatpush.msra.mxu0 0.0
      %2386 = vmatpush.msra.mxu0 0.0
      %2387 = vmatpush.msra.mxu0 0.0
      %2388 = vmatpush.msra.mxu0 0.0
      %2389 = vmatpush.msra.mxu0 0.0
      %2390 = vmatpush.msra.mxu0 0.0
      %2391 = vmatpush.msra.mxu0 0.0
      %2392 = vmatpush.msra.mxu0 0.0
      %2393 = vmatpush.msra.mxu0 0.0
      %2394 = vmatpush.msra.mxu0 %v2352
      %2395 = vmatmul.f32.gmra.mxu0 %v2357
      %v2396 = vpop.f32.mrf.mxu0
      %v2397 = vadd.f32 0.0, %v2396
      %2398 = vdwg.mxu0
      %v2400 = vsel %vm570, %v2343, 0
      %2402 = vmatpush.msra.mxu0 0.0
      %2403 = vmatpush.msra.mxu0 0.0
      %2404 = vmatpush.msra.mxu0 0.0
      %2405 = vmatpush.msra.mxu0 0.0
      %2406 = vmatpush.msra.mxu0 0.0
      %2407 = vmatpush.msra.mxu0 0.0
      %2408 = vmatpush.msra.mxu0 0.0
      %2409 = vmatpush.msra.mxu0 0.0
      %2410 = vmatpush.msra.mxu0 0.0
      %2411 = vmatpush.msra.mxu0 0.0
      %2412 = vmatpush.msra.mxu0 0.0
      %2413 = vmatpush.msra.mxu0 0.0
      %2414 = vmatpush.msra.mxu0 0.0
      %2415 = vmatpush.msra.mxu0 0.0
      %2416 = vmatpush.msra.mxu0 0.0
      %2417 = vmatpush.msra.mxu0 %v2344
      %2418 = vmatmul.f32.gmra.mxu0 %v2400
      %v2419 = vpop.f32.mrf.mxu0
      %v2420 = vadd.f32 %v2377, %v2419
      %2421 = vdwg.mxu0
      %2422 = vmatpush.msra.mxu0 0.0
      %2423 = vmatpush.msra.mxu0 0.0
      %2424 = vmatpush.msra.mxu0 0.0
      %2425 = vmatpush.msra.mxu0 0.0
      %2426 = vmatpush.msra.mxu0 0.0
      %2427 = vmatpush.msra.mxu0 0.0
      %2428 = vmatpush.msra.mxu0 0.0
      %2429 = vmatpush.msra.mxu0 0.0
      %2430 = vmatpush.msra.mxu0 0.0
      %2431 = vmatpush.msra.mxu0 0.0
      %2432 = vmatpush.msra.mxu0 0.0
      %2433 = vmatpush.msra.mxu0 0.0
      %2434 = vmatpush.msra.mxu0 0.0
      %2435 = vmatpush.msra.mxu0 0.0
      %2436 = vmatpush.msra.mxu0 0.0
      %2437 = vmatpush.msra.mxu0 %v2345
      %2438 = vmatmul.f32.gmra.mxu0 %v2400
      %v2439 = vpop.f32.mrf.mxu0
      %v2440 = vadd.f32 %v2397, %v2439
      %2441 = vdwg.mxu0
      %v2442 = vld [vmem:[%s657] sm:$0xff]
      %2443 = vrot.lane.b32.xlu0 %v2344, 126
      %v2444 = vpop.permute.xlu0 %2443
      %2445 = vrot.lane.b32.xlu0 %v2345, 126
      %v2446 = vpop.permute.xlu0 %2445
      %v2447 = vsel %vm663, %v2444, %v2446
      %v2451 = vsel %vm570, %v2442, 0
      %2453 = vmatpush.msra.mxu0 0.0
      %2454 = vmatpush.msra.mxu0 0.0
      %2455 = vmatpush.msra.mxu0 0.0
      %2456 = vmatpush.msra.mxu0 0.0
      %2457 = vmatpush.msra.mxu0 0.0
      %2458 = vmatpush.msra.mxu0 0.0
      %2459 = vmatpush.msra.mxu0 0.0
      %2460 = vmatpush.msra.mxu0 0.0
      %2461 = vmatpush.msra.mxu0 0.0
      %2462 = vmatpush.msra.mxu0 0.0
      %2463 = vmatpush.msra.mxu0 0.0
      %2464 = vmatpush.msra.mxu0 0.0
      %2465 = vmatpush.msra.mxu0 0.0
      %2466 = vmatpush.msra.mxu0 0.0
      %2467 = vmatpush.msra.mxu0 0.0
      %2468 = vmatpush.msra.mxu0 %v2447
      %2469 = vmatmul.f32.gmra.mxu0 %v2451
      %v2470 = vpop.f32.mrf.mxu0
      %v2471 = vadd.f32 0.0, %v2470
      %2472 = vdwg.mxu0
      %2473 = vmatpush.msra.mxu0 0.0
      %2474 = vmatpush.msra.mxu0 0.0
      %2475 = vmatpush.msra.mxu0 0.0
      %2476 = vmatpush.msra.mxu0 0.0
      %2477 = vmatpush.msra.mxu0 0.0
      %2478 = vmatpush.msra.mxu0 0.0
      %2479 = vmatpush.msra.mxu0 0.0
      %2480 = vmatpush.msra.mxu0 0.0
      %2481 = vmatpush.msra.mxu0 0.0
      %2482 = vmatpush.msra.mxu0 0.0
      %2483 = vmatpush.msra.mxu0 0.0
      %2484 = vmatpush.msra.mxu0 0.0
      %2485 = vmatpush.msra.mxu0 0.0
      %2486 = vmatpush.msra.mxu0 0.0
      %2487 = vmatpush.msra.mxu0 0.0
      %2488 = vmatpush.msra.mxu0 %v2446
      %2489 = vmatmul.f32.gmra.mxu0 %v2451
      %v2490 = vpop.f32.mrf.mxu0
      %v2491 = vadd.f32 0.0, %v2490
      %2492 = vdwg.mxu0
      %v2493 = vadd.f32 %v2420, %v2471
      %v2494 = vadd.f32 %v2440, %v2491
      %v2495 = vld [vmem:[%s3] sm:$0xff]
      %2497 = vset.pattern.permute.xlu0 0
      %2498 = vperm.xlu0 %2497, %v2495
      %v2499 = vpop.permute.xlu0 %2498
      %v2501 = vadd.f32 %v2493, %v2499
      %v2502 = vadd.f32 %v2494, %v2499
      %s2503 = scalar_lea.vmem %s235, 64
      %2504 = vst [vmem:[%s2503] sm:$0xff] %v2501
      %2505 = vst.msk [vmem:[%s2503 + $0x8] sm:$0xff] %vm238, %v2502
      %v2506 = vld [vmem:[%s1760] ss:$8 sm:$0x3]
      %v2507 = vld [vmem:[%s1762] ss:$8 sm:$0x3]
      %v2508 = vld [vmem:[%s1764] ss:$8 sm:$0x3]
      %v2509 = vld [vmem:[%s1766] ss:$8 sm:$0x3]
      %2514 = vst [vmem:[#allocation1] ss:$9 sm:$0xff] %v2506
      %s2515 = scalar_lea.vmem [#allocation1], 1
      %2516 = vst [vmem:[%s2515] ss:$9 sm:$0xff] %v2507
      %s2517 = scalar_lea.vmem [#allocation1], 2
      %2518 = vst [vmem:[%s2517] ss:$9 sm:$0xff] %v2508
      %s2519 = scalar_lea.vmem [#allocation1], 3
      %2520 = vst [vmem:[%s2519] ss:$9 sm:$0xff] %v2509
      %v2521 = vld [vmem:[#allocation1] sm:$0xff]
      %v2522 = vld [vmem:[#allocation1 + $0x9] sm:$0xff]
      %2525 = vst [vmem:[#allocation2] sm:$0xf] %v2521
      %2526 = vst.msk [vmem:[#allocation2 + $0x8] sm:$0xf] %vm282, %v2522
      %v2527 = vld [vmem:[%s1760] ss:$8 sm:$0x3]
      %v2528 = vld [vmem:[%s1762] ss:$8 sm:$0x3]
      %v2529 = vld [vmem:[%s1764] ss:$8 sm:$0x3]
      %v2530 = vld [vmem:[%s1766] ss:$8 sm:$0x3]
      %2535 = vst [vmem:[#allocation1] ss:$9 sm:$0xff] %v2527
      %s2536 = scalar_lea.vmem [#allocation1], 1
      %2537 = vst [vmem:[%s2536] ss:$9 sm:$0xff] %v2528
      %s2538 = scalar_lea.vmem [#allocation1], 2
      %2539 = vst [vmem:[%s2538] ss:$9 sm:$0xff] %v2529
      %s2540 = scalar_lea.vmem [#allocation1], 3
      %2541 = vst [vmem:[%s2540] ss:$9 sm:$0xff] %v2530
      %v2542 = vld [vmem:[#allocation1] sm:$0xff]
      %v2543 = vld [vmem:[#allocation1 + $0x9] sm:$0xff]
      %2544 = vrot.lane.b32.xlu0 %v2542, 112
      %v2545 = vpop.permute.xlu0 %2544
      %2546 = vrot.lane.b32.xlu0 %v2543, 112
      %v2547 = vpop.permute.xlu0 %2546
      %v2548 = vsel %vm305, %v2545, %v2547
      %2551 = vst [vmem:[#allocation2 + $0x10] sm:$0xf] %v2548
      %2552 = vst.msk [vmem:[#allocation2 + $0x18] sm:$0xf] %vm282, %v2547
      %v2553 = vld [vmem:[%s1760] ss:$8 sm:$0x3]
      %v2554 = vld [vmem:[%s1762] ss:$8 sm:$0x3]
      %v2555 = vld [vmem:[%s1764] ss:$8 sm:$0x3]
      %v2556 = vld [vmem:[%s1766] ss:$8 sm:$0x3]
      %2561 = vst [vmem:[#allocation1] ss:$9 sm:$0xff] %v2553
      %s2562 = scalar_lea.vmem [#allocation1], 1
      %2563 = vst [vmem:[%s2562] ss:$9 sm:$0xff] %v2554
      %s2564 = scalar_lea.vmem [#allocation1], 2
      %2565 = vst [vmem:[%s2564] ss:$9 sm:$0xff] %v2555
      %s2566 = scalar_lea.vmem [#allocation1], 3
      %2567 = vst [vmem:[%s2566] ss:$9 sm:$0xff] %v2556
      %v2568 = vld [vmem:[#allocation1] sm:$0xff]
      %v2569 = vld [vmem:[#allocation1 + $0x9] sm:$0xff]
      %2570 = vrot.lane.b32.xlu0 %v2568, 96
      %v2571 = vpop.permute.xlu0 %2570
      %2572 = vrot.lane.b32.xlu0 %v2569, 96
      %v2573 = vpop.permute.xlu0 %2572
      %v2574 = vsel %vm238, %v2571, %v2573
      %2577 = vst [vmem:[#allocation2 + $0x20] sm:$0xf] %v2574
      %2578 = vst.msk [vmem:[#allocation2 + $0x28] sm:$0xf] %vm282, %v2573
      %v2579 = vld [vmem:[%s2206] ss:$8 sm:$0x3]
      %v2580 = vld [vmem:[%s2208] ss:$8 sm:$0x3]
      %v2581 = vld [vmem:[%s2210] ss:$8 sm:$0x3]
      %v2582 = vld [vmem:[%s2212] ss:$8 sm:$0x3]
      %2587 = vst [vmem:[#allocation1] ss:$9 sm:$0xff] %v2579
      %s2588 = scalar_lea.vmem [#allocation1], 1
      %2589 = vst [vmem:[%s2588] ss:$9 sm:$0xff] %v2580
      %s2590 = scalar_lea.vmem [#allocation1], 2
      %2591 = vst [vmem:[%s2590] ss:$9 sm:$0xff] %v2581
      %s2592 = scalar_lea.vmem [#allocation1], 3
      %2593 = vst [vmem:[%s2592] ss:$9 sm:$0xff] %v2582
      %v2594 = vld [vmem:[#allocation1] sm:$0xff]
      %v2595 = vld [vmem:[#allocation1 + $0x9] sm:$0xff]
      %2598 = vst [vmem:[#allocation2 + $0x30] sm:$0xf] %v2594
      %2599 = vst.msk [vmem:[#allocation2 + $0x38] sm:$0xf] %vm282, %v2595
      %v2600 = vld [vmem:[%s2206] ss:$8 sm:$0x3]
      %v2601 = vld [vmem:[%s2208] ss:$8 sm:$0x3]
      %v2602 = vld [vmem:[%s2210] ss:$8 sm:$0x3]
      %v2603 = vld [vmem:[%s2212] ss:$8 sm:$0x3]
      %2608 = vst [vmem:[#allocation1] ss:$9 sm:$0xff] %v2600
      %s2609 = scalar_lea.vmem [#allocation1], 1
      %2610 = vst [vmem:[%s2609] ss:$9 sm:$0xff] %v2601
      %s2611 = scalar_lea.vmem [#allocation1], 2
      %2612 = vst [vmem:[%s2611] ss:$9 sm:$0xff] %v2602
      %s2613 = scalar_lea.vmem [#allocation1], 3
      %2614 = vst [vmem:[%s2613] ss:$9 sm:$0xff] %v2603
      %v2615 = vld [vmem:[#allocation1] sm:$0xff]
      %v2616 = vld [vmem:[#allocation1 + $0x9] sm:$0xff]
      %2617 = vrot.lane.b32.xlu0 %v2615, 112
      %v2618 = vpop.permute.xlu0 %2617
      %2619 = vrot.lane.b32.xlu0 %v2616, 112
      %v2620 = vpop.permute.xlu0 %2619
      %v2621 = vsel %vm305, %v2618, %v2620
      %2624 = vst [vmem:[#allocation2 + $0x40] sm:$0xf] %v2621
      %2625 = vst.msk [vmem:[#allocation2 + $0x48] sm:$0xf] %vm282, %v2620
      %v2626 = vld [vmem:[%s2206] ss:$8 sm:$0x3]
      %v2627 = vld [vmem:[%s2208] ss:$8 sm:$0x3]
      %v2628 = vld [vmem:[%s2210] ss:$8 sm:$0x3]
      %v2629 = vld [vmem:[%s2212] ss:$8 sm:$0x3]
      %2634 = vst [vmem:[#allocation1] ss:$9 sm:$0xff] %v2626
      %s2635 = scalar_lea.vmem [#allocation1], 1
      %2636 = vst [vmem:[%s2635] ss:$9 sm:$0xff] %v2627
      %s2637 = scalar_lea.vmem [#allocation1], 2
      %2638 = vst [vmem:[%s2637] ss:$9 sm:$0xff] %v2628
      %s2639 = scalar_lea.vmem [#allocation1], 3
      %2640 = vst [vmem:[%s2639] ss:$9 sm:$0xff] %v2629
      %v2641 = vld [vmem:[#allocation1] sm:$0xff]
      %v2642 = vld [vmem:[#allocation1 + $0x9] sm:$0xff]
      %2643 = vrot.lane.b32.xlu0 %v2641, 96
      %v2644 = vpop.permute.xlu0 %2643
      %2645 = vrot.lane.b32.xlu0 %v2642, 96
      %v2646 = vpop.permute.xlu0 %2645
      %v2647 = vsel %vm238, %v2644, %v2646
      %2650 = vst [vmem:[#allocation2 + $0x50] sm:$0xf] %v2647
      %2651 = vst.msk [vmem:[#allocation2 + $0x58] sm:$0xf] %vm282, %v2646
      %s2652 = scalar_lea.vmem %s225, 7
      %v2653 = vld [vmem:[%s2652] ss:$8 sm:$0x3]
      %s2654 = scalar_lea.vmem %s225, 23
      %v2655 = vld [vmem:[%s2654] ss:$8 sm:$0x3]
      %s2656 = scalar_lea.vmem %s225, 39
      %v2657 = vld [vmem:[%s2656] ss:$8 sm:$0x3]
      %s2658 = scalar_lea.vmem %s225, 55
      %v2659 = vld [vmem:[%s2658] ss:$8 sm:$0x3]
      %2664 = vst [vmem:[#allocation1] ss:$9 sm:$0xff] %v2653
      %s2665 = scalar_lea.vmem [#allocation1], 1
      %2666 = vst [vmem:[%s2665] ss:$9 sm:$0xff] %v2655
      %s2667 = scalar_lea.vmem [#allocation1], 2
      %2668 = vst [vmem:[%s2667] ss:$9 sm:$0xff] %v2657
      %s2669 = scalar_lea.vmem [#allocation1], 3
      %2670 = vst [vmem:[%s2669] ss:$9 sm:$0xff] %v2659
      %v2671 = vld [vmem:[#allocation1] sm:$0xff]
      %v2672 = vld [vmem:[#allocation1 + $0x9] sm:$0xff]
      %2675 = vst [vmem:[#allocation2 + $0x60] sm:$0xf] %v2671
      %2676 = vst.msk [vmem:[#allocation2 + $0x68] sm:$0xf] %vm282, %v2672
      %v2677 = vld [vmem:[%s2652] ss:$8 sm:$0x3]
      %v2678 = vld [vmem:[%s2654] ss:$8 sm:$0x3]
      %v2679 = vld [vmem:[%s2656] ss:$8 sm:$0x3]
      %v2680 = vld [vmem:[%s2658] ss:$8 sm:$0x3]
      %2685 = vst [vmem:[#allocation1] ss:$9 sm:$0xff] %v2677
      %s2686 = scalar_lea.vmem [#allocation1], 1
      %2687 = vst [vmem:[%s2686] ss:$9 sm:$0xff] %v2678
      %s2688 = scalar_lea.vmem [#allocation1], 2
      %2689 = vst [vmem:[%s2688] ss:$9 sm:$0xff] %v2679
      %s2690 = scalar_lea.vmem [#allocation1], 3
      %2691 = vst [vmem:[%s2690] ss:$9 sm:$0xff] %v2680
      %v2692 = vld [vmem:[#allocation1] sm:$0xff]
      %v2693 = vld [vmem:[#allocation1 + $0x9] sm:$0xff]
      %2694 = vrot.lane.b32.xlu0 %v2692, 112
      %v2695 = vpop.permute.xlu0 %2694
      %2696 = vrot.lane.b32.xlu0 %v2693, 112
      %v2697 = vpop.permute.xlu0 %2696
      %v2698 = vsel %vm305, %v2695, %v2697
      %2701 = vst [vmem:[#allocation2 + $0x70] sm:$0xf] %v2698
      %2702 = vst.msk [vmem:[#allocation2 + $0x78] sm:$0xf] %vm282, %v2697
      %v2703 = vld [vmem:[%s2652] ss:$8 sm:$0x3]
      %v2704 = vld [vmem:[%s2654] ss:$8 sm:$0x3]
      %v2705 = vld [vmem:[%s2656] ss:$8 sm:$0x3]
      %v2706 = vld [vmem:[%s2658] ss:$8 sm:$0x3]
      %2711 = vst [vmem:[#allocation1] ss:$9 sm:$0xff] %v2703
      %s2712 = scalar_lea.vmem [#allocation1], 1
      %2713 = vst [vmem:[%s2712] ss:$9 sm:$0xff] %v2704
      %s2714 = scalar_lea.vmem [#allocation1], 2
      %2715 = vst [vmem:[%s2714] ss:$9 sm:$0xff] %v2705
      %s2716 = scalar_lea.vmem [#allocation1], 3
      %2717 = vst [vmem:[%s2716] ss:$9 sm:$0xff] %v2706
      %v2718 = vld [vmem:[#allocation1] sm:$0xff]
      %v2719 = vld [vmem:[#allocation1 + $0x9] sm:$0xff]
      %2720 = vrot.lane.b32.xlu0 %v2718, 96
      %v2721 = vpop.permute.xlu0 %2720
      %2722 = vrot.lane.b32.xlu0 %v2719, 96
      %v2723 = vpop.permute.xlu0 %2722
      %v2724 = vsel %vm238, %v2721, %v2723
      %2727 = vst [vmem:[#allocation2 + $0x80] sm:$0xf] %v2724
      %2728 = vst.msk [vmem:[#allocation2 + $0x88] sm:$0xf] %vm282, %v2723
      %v2729 = vld [vmem:[#allocation2] sm:$0xff]
      %v2730 = vld [vmem:[#allocation2 + $0x8] sm:$0xff]
      %v2731 = vld [vmem:[#allocation2 + $0x10] sm:$0xff]
      %v2732 = vld [vmem:[#allocation2 + $0x18] sm:$0xff]
      %v2733 = vld [vmem:[#allocation2 + $0x20] sm:$0xff]
      %v2734 = vld [vmem:[#allocation2 + $0x28] sm:$0xff]
      %v2735 = vld [vmem:[#allocation2 + $0x30] sm:$0xff]
      %v2736 = vld [vmem:[#allocation2 + $0x38] sm:$0xff]
      %v2737 = vld [vmem:[#allocation2 + $0x40] sm:$0xff]
      %v2738 = vld [vmem:[#allocation2 + $0x48] sm:$0xff]
      %v2739 = vld [vmem:[#allocation2 + $0x50] sm:$0xff]
      %v2740 = vld [vmem:[#allocation2 + $0x58] sm:$0xff]
      %v2741 = vld [vmem:[#allocation2 + $0x60] sm:$0xff]
      %v2742 = vld [vmem:[#allocation2 + $0x68] sm:$0xff]
      %v2743 = vld [vmem:[#allocation2 + $0x70] sm:$0xff]
      %v2744 = vld [vmem:[#allocation2 + $0x78] sm:$0xff]
      %v2745 = vld [vmem:[#allocation2 + $0x80] sm:$0xff]
      %v2746 = vld [vmem:[#allocation2 + $0x88] sm:$0xff]
      %2747 = vmatpush.msra.mxu0 0.0
      %2748 = vmatpush.msra.mxu0 0.0
      %2749 = vmatpush.msra.mxu0 0.0
      %2750 = vmatpush.msra.mxu0 0.0
      %2751 = vmatpush.msra.mxu0 0.0
      %2752 = vmatpush.msra.mxu0 0.0
      %2753 = vmatpush.msra.mxu0 0.0
      %2754 = vmatpush.msra.mxu0 %v2745
      %2755 = vmatpush.msra.mxu0 %v2743
      %2756 = vmatpush.msra.mxu0 %v2741
      %2757 = vmatpush.msra.mxu0 %v2739
      %2758 = vmatpush.msra.mxu0 %v2737
      %2759 = vmatpush.msra.mxu0 %v2735
      %2760 = vmatpush.msra.mxu0 %v2733
      %2761 = vmatpush.msra.mxu0 %v2731
      %2762 = vmatpush.msra.mxu0 %v2729
      %2763 = vmatmul.f32.gmra.mxu0 %v511
      %v2764 = vpop.f32.mrf.mxu0
      %v2765 = vadd.f32 0.0, %v2764
      %2766 = vdwg.mxu0
      %2767 = vmatpush.msra.mxu0 0.0
      %2768 = vmatpush.msra.mxu0 0.0
      %2769 = vmatpush.msra.mxu0 0.0
      %2770 = vmatpush.msra.mxu0 0.0
      %2771 = vmatpush.msra.mxu0 0.0
      %2772 = vmatpush.msra.mxu0 0.0
      %2773 = vmatpush.msra.mxu0 0.0
      %2774 = vmatpush.msra.mxu0 %v2746
      %2775 = vmatpush.msra.mxu0 %v2744
      %2776 = vmatpush.msra.mxu0 %v2742
      %2777 = vmatpush.msra.mxu0 %v2740
      %2778 = vmatpush.msra.mxu0 %v2738
      %2779 = vmatpush.msra.mxu0 %v2736
      %2780 = vmatpush.msra.mxu0 %v2734
      %2781 = vmatpush.msra.mxu0 %v2732
      %2782 = vmatpush.msra.mxu0 %v2730
      %2783 = vmatmul.f32.gmra.mxu0 %v511
      %v2784 = vpop.f32.mrf.mxu0
      %v2785 = vadd.f32 0.0, %v2784
      %2786 = vdwg.mxu0
      %2787 = vst [vmem:[#allocation3] sm:$0xff] %v2765
      %2788 = vst.msk [vmem:[#allocation3 + $0x8] sm:$0xff] %vm238, %v2785
      %v2789 = vld [vmem:[%s2] sm:$0xff]
      %v2790 = vld [vmem:[#allocation3] sm:$0xff]
      %v2791 = vld [vmem:[#allocation3 + $0x8] sm:$0xff]
      %v2792 = vld [vmem:[%s558] sm:$0xff]
      %2795 = vrot.lane.b32.xlu0 %v2790, 127
      %v2796 = vpop.permute.xlu0 %2795
      %2797 = vrot.lane.b32.xlu0 %v2791, 127
      %v2798 = vpop.permute.xlu0 %2797
      %v2799 = vsel %vm566, %v2796, %v2798
      %v2803 = vsel %vm570, %v2792, 0
      %2805 = vmatpush.msra.mxu0 0.0
      %2806 = vmatpush.msra.mxu0 0.0
      %2807 = vmatpush.msra.mxu0 0.0
      %2808 = vmatpush.msra.mxu0 0.0
      %2809 = vmatpush.msra.mxu0 0.0
      %2810 = vmatpush.msra.mxu0 0.0
      %2811 = vmatpush.msra.mxu0 0.0
      %2812 = vmatpush.msra.mxu0 0.0
      %2813 = vmatpush.msra.mxu0 0.0
      %2814 = vmatpush.msra.mxu0 0.0
      %2815 = vmatpush.msra.mxu0 0.0
      %2816 = vmatpush.msra.mxu0 0.0
      %2817 = vmatpush.msra.mxu0 0.0
      %2818 = vmatpush.msra.mxu0 0.0
      %2819 = vmatpush.msra.mxu0 0.0
      %2820 = vmatpush.msra.mxu0 %v2799
      %2821 = vmatmul.f32.gmra.mxu0 %v2803
      %v2822 = vpop.f32.mrf.mxu0
      %v2823 = vadd.f32 0.0, %v2822
      %2824 = vdwg.mxu0
      %2825 = vmatpush.msra.mxu0 0.0
      %2826 = vmatpush.msra.mxu0 0.0
      %2827 = vmatpush.msra.mxu0 0.0
      %2828 = vmatpush.msra.mxu0 0.0
      %2829 = vmatpush.msra.mxu0 0.0
      %2830 = vmatpush.msra.mxu0 0.0
      %2831 = vmatpush.msra.mxu0 0.0
      %2832 = vmatpush.msra.mxu0 0.0
      %2833 = vmatpush.msra.mxu0 0.0
      %2834 = vmatpush.msra.mxu0 0.0
      %2835 = vmatpush.msra.mxu0 0.0
      %2836 = vmatpush.msra.mxu0 0.0
      %2837 = vmatpush.msra.mxu0 0.0
      %2838 = vmatpush.msra.mxu0 0.0
      %2839 = vmatpush.msra.mxu0 0.0
      %2840 = vmatpush.msra.mxu0 %v2798
      %2841 = vmatmul.f32.gmra.mxu0 %v2803
      %v2842 = vpop.f32.mrf.mxu0
      %v2843 = vadd.f32 0.0, %v2842
      %2844 = vdwg.mxu0
      %v2846 = vsel %vm570, %v2789, 0
      %2848 = vmatpush.msra.mxu0 0.0
      %2849 = vmatpush.msra.mxu0 0.0
      %2850 = vmatpush.msra.mxu0 0.0
      %2851 = vmatpush.msra.mxu0 0.0
      %2852 = vmatpush.msra.mxu0 0.0
      %2853 = vmatpush.msra.mxu0 0.0
      %2854 = vmatpush.msra.mxu0 0.0
      %2855 = vmatpush.msra.mxu0 0.0
      %2856 = vmatpush.msra.mxu0 0.0
      %2857 = vmatpush.msra.mxu0 0.0
      %2858 = vmatpush.msra.mxu0 0.0
      %2859 = vmatpush.msra.mxu0 0.0
      %2860 = vmatpush.msra.mxu0 0.0
      %2861 = vmatpush.msra.mxu0 0.0
      %2862 = vmatpush.msra.mxu0 0.0
      %2863 = vmatpush.msra.mxu0 %v2790
      %2864 = vmatmul.f32.gmra.mxu0 %v2846
      %v2865 = vpop.f32.mrf.mxu0
      %v2866 = vadd.f32 %v2823, %v2865
      %2867 = vdwg.mxu0
      %2868 = vmatpush.msra.mxu0 0.0
      %2869 = vmatpush.msra.mxu0 0.0
      %2870 = vmatpush.msra.mxu0 0.0
      %2871 = vmatpush.msra.mxu0 0.0
      %2872 = vmatpush.msra.mxu0 0.0
      %2873 = vmatpush.msra.mxu0 0.0
      %2874 = vmatpush.msra.mxu0 0.0
      %2875 = vmatpush.msra.mxu0 0.0
      %2876 = vmatpush.msra.mxu0 0.0
      %2877 = vmatpush.msra.mxu0 0.0
      %2878 = vmatpush.msra.mxu0 0.0
      %2879 = vmatpush.msra.mxu0 0.0
      %2880 = vmatpush.msra.mxu0 0.0
      %2881 = vmatpush.msra.mxu0 0.0
      %2882 = vmatpush.msra.mxu0 0.0
      %2883 = vmatpush.msra.mxu0 %v2791
      %2884 = vmatmul.f32.gmra.mxu0 %v2846
      %v2885 = vpop.f32.mrf.mxu0
      %v2886 = vadd.f32 %v2843, %v2885
      %2887 = vdwg.mxu0
      %v2888 = vld [vmem:[%s657] sm:$0xff]
      %2889 = vrot.lane.b32.xlu0 %v2790, 126
      %v2890 = vpop.permute.xlu0 %2889
      %2891 = vrot.lane.b32.xlu0 %v2791, 126
      %v2892 = vpop.permute.xlu0 %2891
      %v2893 = vsel %vm663, %v2890, %v2892
      %v2897 = vsel %vm570, %v2888, 0
      %2899 = vmatpush.msra.mxu0 0.0
      %2900 = vmatpush.msra.mxu0 0.0
      %2901 = vmatpush.msra.mxu0 0.0
      %2902 = vmatpush.msra.mxu0 0.0
      %2903 = vmatpush.msra.mxu0 0.0
      %2904 = vmatpush.msra.mxu0 0.0
      %2905 = vmatpush.msra.mxu0 0.0
      %2906 = vmatpush.msra.mxu0 0.0
      %2907 = vmatpush.msra.mxu0 0.0
      %2908 = vmatpush.msra.mxu0 0.0
      %2909 = vmatpush.msra.mxu0 0.0
      %2910 = vmatpush.msra.mxu0 0.0
      %2911 = vmatpush.msra.mxu0 0.0
      %2912 = vmatpush.msra.mxu0 0.0
      %2913 = vmatpush.msra.mxu0 0.0
      %2914 = vmatpush.msra.mxu0 %v2893
      %2915 = vmatmul.f32.gmra.mxu0 %v2897
      %v2916 = vpop.f32.mrf.mxu0
      %v2917 = vadd.f32 0.0, %v2916
      %2918 = vdwg.mxu0
      %2919 = vmatpush.msra.mxu0 0.0
      %2920 = vmatpush.msra.mxu0 0.0
      %2921 = vmatpush.msra.mxu0 0.0
      %2922 = vmatpush.msra.mxu0 0.0
      %2923 = vmatpush.msra.mxu0 0.0
      %2924 = vmatpush.msra.mxu0 0.0
      %2925 = vmatpush.msra.mxu0 0.0
      %2926 = vmatpush.msra.mxu0 0.0
      %2927 = vmatpush.msra.mxu0 0.0
      %2928 = vmatpush.msra.mxu0 0.0
      %2929 = vmatpush.msra.mxu0 0.0
      %2930 = vmatpush.msra.mxu0 0.0
      %2931 = vmatpush.msra.mxu0 0.0
      %2932 = vmatpush.msra.mxu0 0.0
      %2933 = vmatpush.msra.mxu0 0.0
      %2934 = vmatpush.msra.mxu0 %v2892
      %2935 = vmatmul.f32.gmra.mxu0 %v2897
      %v2936 = vpop.f32.mrf.mxu0
      %v2937 = vadd.f32 0.0, %v2936
      %2938 = vdwg.mxu0
      %v2939 = vadd.f32 %v2866, %v2917
      %v2940 = vadd.f32 %v2886, %v2937
      %v2941 = vld [vmem:[%s3] sm:$0xff]
      %2943 = vset.pattern.permute.xlu0 0
      %2944 = vperm.xlu0 %2943, %v2941
      %v2945 = vpop.permute.xlu0 %2944
      %v2947 = vadd.f32 %v2939, %v2945
      %v2948 = vadd.f32 %v2940, %v2945
      %s2949 = scalar_lea.vmem %s235, 80
      %2950 = vst [vmem:[%s2949] sm:$0xff] %v2947
      %2951 = vst.msk [vmem:[%s2949 + $0x8] sm:$0xff] %vm238, %v2948
      %s2952 = smul.u32 6, %s20
      %p2953 = scmp.lt.s32.totalorder %s19, 1
      %s2954 = scalar_select %p2953, %s19, 1
      %p2955 = scmp.lt.s32.totalorder %s2952, 5
      %s2956 = scalar_select %p2955, %s2952, 5
      %s2957 = smul.addr %s2956, 2
      %s2958 = smul.addr %s2954, 12
      %s2959 = sadd.s32 %s2957, %s2958
      %s2960 = smul.addr %s2959, 8
      %s2961 = scalar_lea.vmem %s4, %s2960
      // Predicated region
      $region37: #{conv2plus1d.1} parent=35 // pred_check
        %p2962 = pneg %p138
      $region38: #{conv2plus1d.1} parent=35 // pred_check_branch
        %2964 = sbr.rel (%p2962) target = $region40
      $region39: #{conv2plus1d.1} parent=35 // pred_region
        %s2965 = smul.u32 6, %s20
      $region40: #{conv2plus1d.1} parent=35 // pred_fallthru
        _
    $region36: #{conv2plus1d.1} parent=5 // pred_fallthru
      _
    %p2966 = scmp.le.s32.totalorder 2, %s10
    // Predicated region
    $region41: #{conv2plus1d.1} parent=5 // pred_check
      %p2967 = pneg %p2966
    $region42: #{conv2plus1d.1} parent=5 // pred_check_branch
      %2969 = sbr.rel (%p2967) target = $region44
    $region43: #{conv2plus1d.1} parent=5 // pred_region
      %s2970 = ssub.s32 %s10, 2
      // Predicated region
      $region45: #{conv2plus1d.1} parent=43 // pred_check
        %p2971 = pneg %p144
      $region46: #{conv2plus1d.1} parent=43 // pred_check_branch
        %2973 = sbr.rel (%p2971) target = $region48
      $region47: #{conv2plus1d.1} parent=43 // pred_region
        %s2974 = smul.u32 6, %s22
        %p2975 = scmp.lt.s32.totalorder %s21, 1
        %s2976 = scalar_select %p2975, %s21, 1
        %p2977 = scmp.lt.s32.totalorder %s2974, 5
        %s2978 = scalar_select %p2977, %s2974, 5
        %s2979 = smul.addr %s2978, 2
        %s2980 = smul.addr %s2976, 12
        %s2981 = sadd.s32 %s2979, %s2980
        %s2982 = smul.addr %s2981, 8
        %s2983 = scalar_lea.vmem %s4, %s2982
      $region48: #{conv2plus1d.1} parent=43 // pred_fallthru
        _
    $region44: #{conv2plus1d.1} parent=5 // pred_fallthru
      _
  $region6: #{conv2plus1d.1} parent=0 // loop_footer
    %s14 = sadd.s32 1, %s10
  $region7: #{conv2plus1d.1} parent=0 // loop_footer_branch
    %9 = sbr.rel target = $region3
  $region8: #{conv2plus1d.1} parent=0 // loop_exit
    _

</llo_original>
